<compile_context>
chip_gen: v7x
topology: tpu7x:2x2x1
jax: 0.10.0
libtpu: 0.0.40
codegen_flags: <defaults>
</compile_context>

<pallas_src>
import functools

import jax
import jax.numpy as jnp
from jax.experimental import pallas as pl
from jax.experimental.pallas import tpu as pltpu


# --------------------------------------------------------------------------- #
# Helpers
# --------------------------------------------------------------------------- #
def _round_up(n, m):
    return ((n + m - 1) // m) * m


def _cdiv(a, b):
    return (a + b - 1) // b


def _celu(v):
    """CELU(alpha=1) = max(v, 0) + min(exp(min(v, 0)) - 1, 0).

    ~5 VPU ops + 1 EUP exp per element (the EUP slot is otherwise idle here).
    exp(v)-1 near 0 only loses *relative* precision (abs error ~1 ulp of 1.0),
    which is far inside the f32 tolerance vs the expm1-based reference, so no
    Taylor guard is needed.
    """
    em1 = jnp.exp(jnp.minimum(v, 0.0)) - 1.0
    return jnp.maximum(v, 0.0) + jnp.minimum(em1, 0.0)


def _first_layer(xT_ref, w0_ref, b0_ref):
    x = xT_ref[...]                                       # (Ft, Bt)
    w0 = w0_ref[...]                                      # (Ft, H)
    b0 = b0_ref[...]                                      # (Ft, H)
    return _celu(w0[:, :, None] * x[:, None, :] + b0[:, :, None])  # (Ft, H, Bt)


def _hidden_layer(h, w_l, b_l, compute_dtype):
    # Batched (H_out, H_in) @ (H_in, Bt) matmul per feature on the MXU;
    # f32 accumulation, f32 bias + CELU.
    hn = jax.lax.dot_general(
        w_l.astype(compute_dtype), h.astype(compute_dtype),
        dimension_numbers=(((2,), (1,)), ((0,), (0,))),
        preferred_element_type=jnp.float32)               # (Ft, H_out, Bt)
    return _celu(hn + b_l[:, :, None])


def _output_layer(h, wl_ref, bl_ref, out_ref):
    wl = wl_ref[...]                                      # (Ft, H)
    bl = bl_ref[...]                                      # (Ft, 1)
    y = jax.lax.dot_general(
        wl[:, None, :], h,
        dimension_numbers=(((2,), (1,)), ((0,), (0,))),
        preferred_element_type=jnp.float32)               # (Ft, 1, Bt)
    out_ref[...] = (y[:, 0, :] + bl).astype(out_ref.dtype)


# --------------------------------------------------------------------------- #
# Kernels
# --------------------------------------------------------------------------- #
def mimic_kernel_fused(xT_ref, w0_ref, b0_ref, wh_ref, bh_ref, wl_ref, bl_ref,
                       out_ref, *, n_layers, compute_dtype):
    """One (F_TILE, B_TILE) output tile; all L hidden layers looped in-kernel.

    wh/bh hold the FULL layer stack for this feature tile (block index depends
    only on the F-tile coordinate), so each weight stack is DMA'd once per F
    tile and reused across every batch tile.
    """
    h = _first_layer(xT_ref, w0_ref, b0_ref)

    def body(l, h):
        return _hidden_layer(h, wh_ref[l], bh_ref[l], compute_dtype)

    h = jax.lax.fori_loop(0, n_layers, body, h, unroll=n_layers <= 4)
    _output_layer(h, wl_ref, bl_ref, out_ref)


def mimic_kernel_fused_l0(xT_ref, w0_ref, b0_ref, wl_ref, bl_ref, out_ref):
    """hidden_layer == 0: no hidden-weight inputs are DMA'd at all."""
    _output_layer(_first_layer(xT_ref, w0_ref, b0_ref), wl_ref, bl_ref, out_ref)


def mimic_kernel_streamed(xT_ref, w0_ref, b0_ref, wh_ref, bh_ref, wl_ref,
                          bl_ref, out_ref, h_ref, *, compute_dtype):
    """Fallback for very large L*H*H: one hidden layer per grid step (axis 2);
    the activation persists in a VMEM scratch across the layer axis."""
    li = pl.program_id(2)

    @pl.when(li == 0)
    def _init():
        h_ref[...] = _first_layer(xT_ref, w0_ref, b0_ref)

    h = _hidden_layer(h_ref[...], wh_ref[...], bh_ref[...], compute_dtype)
    h_ref[...] = h

    @pl.when(li == pl.num_programs(2) - 1)
    def _final():
        # Feed the just-computed value directly (no extra h_ref reload).
        _output_layer(h, wl_ref, bl_ref, out_ref)


# --------------------------------------------------------------------------- #
# VMEM budgeting + tile selection
# --------------------------------------------------------------------------- #
def _vmem_limits():
    """(tile-picking budget, vmem_limit ceiling, has two TensorCores?)."""
    phys = 128 * 1024 * 1024
    try:
        phys = int(pltpu.get_tpu_info().vmem_capacity_bytes)
    except Exception:
        pass
    if phys <= 64 * 1024 * 1024:
        # v7x: 64 MiB physical per TensorCore (2 TCs); leave Mosaic headroom.
        return 44 * 1024 * 1024, 56 * 1024 * 1024, True
    # v5e / v6e: 128 MiB physical, single TensorCore.
    return 96 * 1024 * 1024, 112 * 1024 * 1024, False


def _vmem_need(ft, bt, H, resident_layers, wh_itemsize, out_itemsize):
    """Per-step VMEM bytes: 2x-buffered in/out blocks + ~3 activation temps."""
    per_f = 3 * H * 4 + 4 + resident_layers * (H * H * wh_itemsize + H * 4)
    blocks = ft * bt * 4 + ft * per_f + ft * bt * out_itemsize
    act = 3 * ft * H * bt * 4          # h carry + matmul result + cast headroom
    return 2 * blocks + act


def _choose_tiles(B, F, H, resident_layers, wh_itemsize, out_itemsize, budget,
                  two_cores):
    """Returns (f_tile, b_tile) or None if even (8, 128) blows the budget."""
    B_lane = _round_up(max(B, 1), 128)
    F8 = _round_up(max(F, 1), 8)
    per_f = 3 * H * 4 + 4 + resident_layers * (H * H * wh_itemsize + H * 4)

    def max_ft(bt):
        per_ft = 2 * (bt * 4 + per_f + bt * out_itemsize) + 3 * H * bt * 4
        return (budget // per_ft) // 8 * 8

    bt = min(B_lane, 512)
    while max_ft(bt) < 8 and bt > 128:
        bt = max(128, (bt // 2) // 128 * 128)
    if max_ft(bt) < 8:
        return None
    ft = min(F8, max_ft(bt))

    # Grow the batch tile while the budget allows (bigger matmul N, fewer
    # grid steps) without shrinking the feature tile; only kicks in for big B.
    while bt < B_lane and min(F8, max_ft(min(B_lane, bt * 2))) >= ft:
        bt = min(B_lane, bt * 2)

    # Rebalance tiles so padding waste stays below one granule per tile.
    ft = _round_up(_cdiv(F8, _cdiv(F8, ft)), 8)
    bt = _round_up(_cdiv(B_lane, _cdiv(B_lane, bt)), 128)

    # v7x has two TensorCores: make sure there are >= 2 parallel tiles.
    if two_cores and _cdiv(F8, ft) * _cdiv(B_lane, bt) < 2:
        if B_lane >= 256:
            bt = _round_up(_cdiv(B_lane, 2), 128)
        elif F8 >= 16:
            ft = _round_up(_cdiv(F8, 2), 8)
    return ft, bt


# --------------------------------------------------------------------------- #
# Forward wrapper
# --------------------------------------------------------------------------- #
def mimic_forward(x, params, *, hidden_layer, compute_dtype=None,
                  f_tile=None, b_tile=None, force_streamed=False):
    """Runs all per-feature MLPs as one tiled Pallas kernel. Returns (B, F).

    compute_dtype controls the MXU-input dtype of the hidden-layer weights /
    activations (accumulation, bias and CELU stay f32).  Default bf16 (native
    MXU rate, halves weight HBM/VMEM bytes); pass jnp.float32 for
    bit-faithful PyTorch numerics.
    """
    w0, b0, wh, bh, wl, bl = params
    B, F = x.shape
    H = w0.shape[-1]
    L = int(hidden_layer)

    compute_dtype = jnp.dtype(jnp.bfloat16 if compute_dtype is None
                              else compute_dtype)
    wh_itemsize = compute_dtype.itemsize
    out_itemsize = jnp.dtype(x.dtype).itemsize

    budget, vmem_ceiling, two_cores = _vmem_limits()

    # ---- path + tile selection ---------------------------------------------
    use_streamed = bool(force_streamed and L > 0)
    auto = None
    if not use_streamed:
        auto = _choose_tiles(B, F, H, L, wh_itemsize, out_itemsize,
                             budget, two_cores)
        if auto is None and L > 0:
            use_streamed = True          # full layer stack can't fit -> stream
    if auto is None:
        auto = (_choose_tiles(B, F, H, min(L, 1), wh_itemsize, out_itemsize,
                              budget, two_cores) or (8, 128))
    ft_auto, bt_auto = auto
    f_tile = ft_auto if f_tile is None else _round_up(int(f_tile), 8)
    b_tile = bt_auto if b_tile is None else _round_up(int(b_tile), 128)

    F_pad = _round_up(F, f_tile)
    B_pad = _round_up(B, b_tile)
    F_tiles, B_tiles = F_pad // f_tile, B_pad // b_tile

    # ---- lane-dense, transpose-free in-kernel layout ------------------------
    # Features on sublanes, batch on the 128-wide lane axis; the two cheap
    # (B, F) transposes run in XLA outside the kernel.
    # TODO(synk): on v5e it may pay to accept (B, F) blocks and transpose
    # in-kernel on the (idle) XLU to save two HBM passes over B*F*4 bytes.
    x_t = jnp.pad(x, ((0, B_pad - B), (0, F_pad - F))).T       # (F_pad, B_pad)

    def pad_f(a, axis):
        pads = [(0, 0)] * a.ndim
        pads[axis] = (0, F_pad - F)
        return jnp.pad(a, pads)

    w0_p, b0_p = pad_f(w0, 0), pad_f(b0, 0)
    wl_p, bl_p = pad_f(wl, 0), pad_f(bl, 0)
    if L > 0:
        wh_p = pad_f(wh, 1).astype(compute_dtype)
        bh_p = pad_f(bh, 1)

    # ---- VMEM limit + advisory cost -----------------------------------------
    resident = 0 if L == 0 else (1 if use_streamed else L)
    need = _vmem_need(f_tile, b_tile, H, resident, wh_itemsize, out_itemsize)
    vmem_limit = int(min(max(need + (4 << 20), 32 << 20), vmem_ceiling))

    wh_refetch = B_tiles if use_streamed else 1
    cost = pl.CostEstimate(
        flops=2 * F_pad * B_pad * H * (L * H + 2),
        transcendentals=F_pad * B_pad * H * (L + 1),
        bytes_accessed=int(4 * (F_pad * B_pad + (3 * H + 1) * F_pad
                                + L * F_pad * H)
                           + wh_itemsize * L * F_pad * H * H * wh_refetch
                           + out_itemsize * F_pad * B_pad))

    out_shape = jax.ShapeDtypeStruct((F_pad, B_pad), x.dtype)
    xT_spec2 = pl.BlockSpec((f_tile, b_tile), lambda fi, bi: (fi, bi))
    vecF_spec2 = pl.BlockSpec((f_tile, H), lambda fi, bi: (fi, 0))
    bl_spec2 = pl.BlockSpec((f_tile, 1), lambda fi, bi: (fi, 0))

    if L == 0:
        out_fb = pl.pallas_call(
            mimic_kernel_fused_l0,
            out_shape=out_shape,
            grid=(F_tiles, B_tiles),
            in_specs=[xT_spec2, vecF_spec2, vecF_spec2, vecF_spec2, bl_spec2],
            out_specs=xT_spec2,
            compiler_params=pltpu.CompilerParams(
                dimension_semantics=("parallel", "parallel"),
                vmem_limit_bytes=vmem_limit),
            cost_estimate=cost,
        )(x_t, w0_p, b0_p, wl_p, bl_p)
    elif not use_streamed:
        kernel = functools.partial(mimic_kernel_fused, n_layers=L,
                                   compute_dtype=compute_dtype)
        out_fb = pl.pallas_call(
            kernel,
            out_shape=out_shape,
            grid=(F_tiles, B_tiles),
            in_specs=[
                xT_spec2,                                                # x^T
                vecF_spec2,                                              # w0
                vecF_spec2,                                              # b0
                pl.BlockSpec((L, f_tile, H, H),
                             lambda fi, bi: (0, fi, 0, 0)),              # wh stack
                pl.BlockSpec((L, f_tile, H),
                             lambda fi, bi: (0, fi, 0)),                 # bh stack
                vecF_spec2,                                              # wl
                bl_spec2,                                                # bl
            ],
            out_specs=xT_spec2,
            compiler_params=pltpu.CompilerParams(
                dimension_semantics=("parallel", "parallel"),
                vmem_limit_bytes=vmem_limit),
            cost_estimate=cost,
        )(x_t, w0_p, b0_p, wh_p, bh_p, wl_p, bl_p)
    else:
        kernel = functools.partial(mimic_kernel_streamed,
                                   compute_dtype=compute_dtype)
        out_fb = pl.pallas_call(
            kernel,
            out_shape=out_shape,
            grid=(F_tiles, B_tiles, L),
            in_specs=[
                pl.BlockSpec((f_tile, b_tile), lambda fi, bi, li: (fi, bi)),
                pl.BlockSpec((f_tile, H), lambda fi, bi, li: (fi, 0)),
                pl.BlockSpec((f_tile, H), lambda fi, bi, li: (fi, 0)),
                pl.BlockSpec((None, f_tile, H, H),
                             lambda fi, bi, li: (li, fi, 0, 0)),
                pl.BlockSpec((None, f_tile, H),
                             lambda fi, bi, li: (li, fi, 0)),
                pl.BlockSpec((f_tile, H), lambda fi, bi, li: (fi, 0)),
                pl.BlockSpec((f_tile, 1), lambda fi, bi, li: (fi, 0)),
            ],
            out_specs=pl.BlockSpec((f_tile, b_tile),
                                   lambda fi, bi, li: (fi, bi)),
            scratch_shapes=[pltpu.VMEM((f_tile, H, b_tile), jnp.float32)],
            compiler_params=pltpu.CompilerParams(
                dimension_semantics=("parallel", "parallel", "arbitrary"),
                vmem_limit_bytes=vmem_limit),
            cost_estimate=cost,
        )(x_t, w0_p, b0_p, wh_p, bh_p, wl_p, bl_p)

    return out_fb[:F, :B].T


# --------------------------------------------------------------------------- #
# Params + pure-JAX reference
# --------------------------------------------------------------------------- #
def init_params(key, in_feature, hidden_feature, hidden_layer):
    """Deterministic init; PyTorch-Linear-style uniform(-1/sqrt(fan_in), ...)."""
    F, H, L = in_feature, hidden_feature, hidden_layer
    ks = jax.random.split(key, 6)
    u = lambda k, shape, fan_in: jax.random.uniform(
        k, shape, jnp.float32, -1.0 / jnp.sqrt(fan_in), 1.0 / jnp.sqrt(fan_in))
    w0 = u(ks[0], (F, H), 1.0)        # Linear(1, H).weight squeezed
    b0 = u(ks[1], (F, H), 1.0)
    wh = u(ks[2], (L, F, H, H), H)    # Linear(H, H).weight, (out, in)
    bh = u(ks[3], (L, F, H), H)
    wl = u(ks[4], (F, H), H)          # Linear(H, 1).weight squeezed
    bl = u(ks[5], (F, 1), H)
    return w0, b0, wh, bh, wl, bl


def mimic_reference(x, params, *, hidden_layer):
    """Pure-JAX reference matching the PyTorch forward exactly."""
    w0, b0, wh, bh, wl, bl = params
    B, F = x.shape
    outs = []
    for f in range(F):
        h = x[:, f:f + 1] * w0[f][None, :] + b0[f][None, :]
        h = jax.nn.celu(h)
        for l in range(hidden_layer):
            h = h @ wh[l, f].T + bh[l, f][None, :]
            h = jax.nn.celu(h)
        y = h @ wl[f][:, None] + bl[f][None, :]
        outs.append(y)
    return jnp.concatenate(outs, axis=1)


# --------------------------------------------------------------------------- #
# Self-test
# --------------------------------------------------------------------------- #
if __name__ == "__main__":
    root = jax.random.PRNGKey(0)
    k1, k2, k3, k4, k5, k6 = jax.random.split(root, 6)

    def check(out, ref, tol):
        err = float(jnp.max(jnp.abs(out - ref)))
        assert jnp.allclose(out, ref, atol=tol, rtol=tol), err

    # Case 1: toy shapes (B=8, F=4, H=32, L=2), exact f32 fused path.
    B, F, H, L = 8, 4, 32, 2
    x = jax.random.normal(k1, (B, F), jnp.float32)
    params = init_params(k2, F, H, L)
    ref = mimic_reference(x, params, hidden_layer=L)
    out = jax.block_until_ready(
        mimic_forward(x, params, hidden_layer=L, compute_dtype=jnp.float32))
    assert out.shape == (B, F)
    check(out, ref, 1e-5)

    # Case 2: multi-F-tile grid + feature padding (F=10 -> 16, f_tile=8), f32.
    B2, F2, H2, L2 = 8, 10, 32, 1
    x2 = jax.random.normal(k3, (B2, F2), jnp.float32)
    params2 = init_params(k4, F2, H2, L2)
    out2 = jax.block_until_ready(
        mimic_forward(x2, params2, hidden_layer=L2,
                      compute_dtype=jnp.float32, f_tile=8))
    check(out2, mimic_reference(x2, params2, hidden_layer=L2), 1e-5)

    # Case 3: default bf16 MXU-weight path (f32 accumulation), loose check.
    out_bf16 = jax.block_until_ready(mimic_forward(x, params, hidden_layer=L))
    assert float(jnp.max(jnp.abs(out_bf16 - ref))) < 5e-2

    # Case 4: layer-streamed fallback path, exact f32.
    out_st = jax.block_until_ready(
        mimic_forward(x, params, hidden_layer=L, compute_dtype=jnp.float32,
                      force_streamed=True))
    check(out_st, ref, 1e-5)

    # Case 5: hidden_layer == 0 (dedicated kernel with no wh/bh inputs).
    params0 = init_params(k5, F, H, 0)
    out0 = jax.block_until_ready(
        mimic_forward(x, params0, hidden_layer=0, compute_dtype=jnp.float32))
    check(out0, mimic_reference(x, params0, hidden_layer=0), 1e-5)

    # Case 6: deeper stack (L=6) exercising the non-unrolled fori_loop with
    # dynamic weight-stack indexing; slightly looser f32 tolerance.
    L6 = 6
    params6 = init_params(k6, F, H, L6)
    out6 = jax.block_until_ready(
        mimic_forward(x, params6, hidden_layer=L6, compute_dtype=jnp.float32))
    check(out6, mimic_reference(x, params6, hidden_layer=L6), 1e-4)

    print("KERNEL_OK")
</pallas_src>

<mosaic_0001>
module attributes {stable_mosaic.version = 11 : i64} {
  func.func @mimic_kernel_fused(%arg0: i32, %arg1: i32, %arg2: memref<8x128xf32, #tpu.memory_space<vmem>>, %arg3: memref<8x32xf32, #tpu.memory_space<vmem>>, %arg4: memref<8x32xf32, #tpu.memory_space<vmem>>, %arg5: memref<2x8x32x32xf32, #tpu.memory_space<vmem>>, %arg6: memref<2x8x32xf32, #tpu.memory_space<vmem>>, %arg7: memref<8x32xf32, #tpu.memory_space<vmem>>, %arg8: memref<8x1xf32, #tpu.memory_space<vmem>>, %arg9: memref<8x128xf32, #tpu.memory_space<vmem>>) attributes {dimension_semantics = [#tpu.dimension_semantics<parallel>, #tpu.dimension_semantics<parallel>], iteration_bounds = array<i64: 1, 1>, scalar_prefetch = 0 : i64, scratch_operands = 0 : i64, tpu.core_type = #tpu.core_type<tc>, window_params = [{transform_indices = @transform_0, window_bounds = array<i64: 8, 128>}, {transform_indices = @transform_1, window_bounds = array<i64: 8, 32>}, {transform_indices = @transform_2, window_bounds = array<i64: 8, 32>}, {transform_indices = @transform_3, window_bounds = array<i64: 2, 8, 32, 32>}, {transform_indices = @transform_4, window_bounds = array<i64: 2, 8, 32>}, {transform_indices = @transform_5, window_bounds = array<i64: 8, 32>}, {transform_indices = @transform_6, window_bounds = array<i64: 8, 1>}, {transform_indices = @transform_7, window_bounds = array<i64: 8, 128>}]} {
    %c0 = arith.constant 0 : index
    %c0_0 = arith.constant 0 : index
    %0 = vector.load %arg2[%c0, %c0_0] : memref<8x128xf32, #tpu.memory_space<vmem>>, vector<8x128xf32>
    %c0_1 = arith.constant 0 : index
    %c0_2 = arith.constant 0 : index
    %1 = vector.load %arg3[%c0_1, %c0_2] : memref<8x32xf32, #tpu.memory_space<vmem>>, vector<8x32xf32>
    %c0_3 = arith.constant 0 : index
    %c0_4 = arith.constant 0 : index
    %2 = vector.load %arg4[%c0_3, %c0_4] : memref<8x32xf32, #tpu.memory_space<vmem>>, vector<8x32xf32>
    %3 = vector.shape_cast %1 : vector<8x32xf32> to vector<8x32x1xf32>
    %4 = vector.shape_cast %0 : vector<8x128xf32> to vector<8x1x128xf32>
    %5 = vector.broadcast %3 : vector<8x32x1xf32> to vector<8x32x128xf32>
    %6 = vector.broadcast %4 : vector<8x1x128xf32> to vector<8x32x128xf32>
    %7 = arith.mulf %5, %6 : vector<8x32x128xf32>
    %8 = vector.shape_cast %2 : vector<8x32xf32> to vector<8x32x1xf32>
    %9 = vector.broadcast %8 : vector<8x32x1xf32> to vector<8x32x128xf32>
    %10 = arith.addf %7, %9 : vector<8x32x128xf32>
    %cst = arith.constant 0.000000e+00 : f32
    %11 = vector.broadcast %cst : f32 to vector<8x32x128xf32>
    %12 = arith.minimumf %10, %11 : vector<8x32x128xf32>
    %13 = math.exp %12 : vector<8x32x128xf32>
    %cst_5 = arith.constant 1.000000e+00 : f32
    %14 = vector.broadcast %cst_5 : f32 to vector<8x32x128xf32>
    %15 = arith.subf %13, %14 : vector<8x32x128xf32>
    %cst_6 = arith.constant 0.000000e+00 : f32
    %16 = vector.broadcast %cst_6 : f32 to vector<8x32x128xf32>
    %17 = arith.maximumf %10, %16 : vector<8x32x128xf32>
    %cst_7 = arith.constant 0.000000e+00 : f32
    %18 = vector.broadcast %cst_7 : f32 to vector<8x32x128xf32>
    %19 = arith.minimumf %15, %18 : vector<8x32x128xf32>
    %20 = arith.addf %17, %19 : vector<8x32x128xf32>
    %c0_i32 = arith.constant 0 : i32
    %21 = arith.index_cast %c0_i32 : i32 to index
    %c0_8 = arith.constant 0 : index
    %c0_9 = arith.constant 0 : index
    %c0_10 = arith.constant 0 : index
    %22 = vector.load %arg5[%21, %c0_8, %c0_9, %c0_10] : memref<2x8x32x32xf32, #tpu.memory_space<vmem>>, vector<1x8x32x32xf32>
    %23 = vector.shape_cast %22 : vector<1x8x32x32xf32> to vector<8x32x32xf32>
    %24 = arith.index_cast %c0_i32 : i32 to index
    %c0_11 = arith.constant 0 : index
    %c0_12 = arith.constant 0 : index
    %25 = vector.load %arg6[%24, %c0_11, %c0_12] : memref<2x8x32xf32, #tpu.memory_space<vmem>>, vector<1x8x32xf32>
    %26 = vector.shape_cast %25 : vector<1x8x32xf32> to vector<8x32xf32>
    %cst_13 = arith.constant dense<0.000000e+00> : vector<8x32x128xf32>
    %27 = tpu.matmul %23, %20, %cst_13 {dimension_numbers = #tpu.dot_dimension_numbers<[2], [1], [1], [2], [0, 0, 0, 1, 1, 2], [0], [0]>} : vector<8x32x32xf32>, vector<8x32x128xf32>, vector<8x32x128xf32> -> vector<8x32x128xf32>
    %28 = vector.shape_cast %26 : vector<8x32xf32> to vector<8x32x1xf32>
    %29 = vector.broadcast %28 : vector<8x32x1xf32> to vector<8x32x128xf32>
    %30 = arith.addf %27, %29 : vector<8x32x128xf32>
    %cst_14 = arith.constant 0.000000e+00 : f32
    %31 = vector.broadcast %cst_14 : f32 to vector<8x32x128xf32>
    %32 = arith.minimumf %30, %31 : vector<8x32x128xf32>
    %33 = math.exp %32 : vector<8x32x128xf32>
    %cst_15 = arith.constant 1.000000e+00 : f32
    %34 = vector.broadcast %cst_15 : f32 to vector<8x32x128xf32>
    %35 = arith.subf %33, %34 : vector<8x32x128xf32>
    %cst_16 = arith.constant 0.000000e+00 : f32
    %36 = vector.broadcast %cst_16 : f32 to vector<8x32x128xf32>
    %37 = arith.maximumf %30, %36 : vector<8x32x128xf32>
    %cst_17 = arith.constant 0.000000e+00 : f32
    %38 = vector.broadcast %cst_17 : f32 to vector<8x32x128xf32>
    %39 = arith.minimumf %35, %38 : vector<8x32x128xf32>
    %40 = arith.addf %37, %39 : vector<8x32x128xf32>
    %c1_i32 = arith.constant 1 : i32
    %41 = arith.index_cast %c1_i32 : i32 to index
    %c0_18 = arith.constant 0 : index
    %c0_19 = arith.constant 0 : index
    %c0_20 = arith.constant 0 : index
    %42 = vector.load %arg5[%41, %c0_18, %c0_19, %c0_20] : memref<2x8x32x32xf32, #tpu.memory_space<vmem>>, vector<1x8x32x32xf32>
    %43 = vector.shape_cast %42 : vector<1x8x32x32xf32> to vector<8x32x32xf32>
    %44 = arith.index_cast %c1_i32 : i32 to index
    %c0_21 = arith.constant 0 : index
    %c0_22 = arith.constant 0 : index
    %45 = vector.load %arg6[%44, %c0_21, %c0_22] : memref<2x8x32xf32, #tpu.memory_space<vmem>>, vector<1x8x32xf32>
    %46 = vector.shape_cast %45 : vector<1x8x32xf32> to vector<8x32xf32>
    %cst_23 = arith.constant dense<0.000000e+00> : vector<8x32x128xf32>
    %47 = tpu.matmul %43, %40, %cst_23 {dimension_numbers = #tpu.dot_dimension_numbers<[2], [1], [1], [2], [0, 0, 0, 1, 1, 2], [0], [0]>} : vector<8x32x32xf32>, vector<8x32x128xf32>, vector<8x32x128xf32> -> vector<8x32x128xf32>
    %48 = vector.shape_cast %46 : vector<8x32xf32> to vector<8x32x1xf32>
    %49 = vector.broadcast %48 : vector<8x32x1xf32> to vector<8x32x128xf32>
    %50 = arith.addf %47, %49 : vector<8x32x128xf32>
    %cst_24 = arith.constant 0.000000e+00 : f32
    %51 = vector.broadcast %cst_24 : f32 to vector<8x32x128xf32>
    %52 = arith.minimumf %50, %51 : vector<8x32x128xf32>
    %53 = math.exp %52 : vector<8x32x128xf32>
    %cst_25 = arith.constant 1.000000e+00 : f32
    %54 = vector.broadcast %cst_25 : f32 to vector<8x32x128xf32>
    %55 = arith.subf %53, %54 : vector<8x32x128xf32>
    %cst_26 = arith.constant 0.000000e+00 : f32
    %56 = vector.broadcast %cst_26 : f32 to vector<8x32x128xf32>
    %57 = arith.maximumf %50, %56 : vector<8x32x128xf32>
    %cst_27 = arith.constant 0.000000e+00 : f32
    %58 = vector.broadcast %cst_27 : f32 to vector<8x32x128xf32>
    %59 = arith.minimumf %55, %58 : vector<8x32x128xf32>
    %60 = arith.addf %57, %59 : vector<8x32x128xf32>
    %c2_i32 = arith.constant 2 : i32
    %c0_28 = arith.constant 0 : index
    %c0_29 = arith.constant 0 : index
    %61 = vector.load %arg7[%c0_28, %c0_29] : memref<8x32xf32, #tpu.memory_space<vmem>>, vector<8x32xf32>
    %c0_30 = arith.constant 0 : index
    %c0_31 = arith.constant 0 : index
    %62 = vector.load %arg8[%c0_30, %c0_31] : memref<8x1xf32, #tpu.memory_space<vmem>>, vector<8x1xf32>
    %63 = vector.shape_cast %61 : vector<8x32xf32> to vector<8x1x32xf32>
    %cst_32 = arith.constant dense<0.000000e+00> : vector<8x1x128xf32>
    %64 = tpu.matmul %63, %60, %cst_32 {dimension_numbers = #tpu.dot_dimension_numbers<[2], [1], [1], [2], [0, 0, 0, 1, 1, 2], [0], [0]>} : vector<8x1x32xf32>, vector<8x32x128xf32>, vector<8x1x128xf32> -> vector<8x1x128xf32>
    %65 = vector.shape_cast %64 : vector<8x1x128xf32> to vector<8x128xf32>
    %66 = vector.broadcast %62 : vector<8x1xf32> to vector<8x128xf32>
    %67 = arith.addf %65, %66 : vector<8x128xf32>
    %c0_33 = arith.constant 0 : index
    %c0_34 = arith.constant 0 : index
    %68 = vector.load %arg9[%c0_33, %c0_34] : memref<8x128xf32, #tpu.memory_space<vmem>>, vector<8x128xf32>
    tpu.vector_store %arg9[%c0_33, %c0_34], %67 {strides = array<i32>} : memref<8x128xf32, #tpu.memory_space<vmem>>, vector<8x128xf32>,
    return
  }
  func.func @transform_0(%arg0: i32, %arg1: i32) -> (i32, i32) {
    %c0_i32 = arith.constant 0 : i32
    return %arg0, %arg1 : i32, i32
  }
  func.func @transform_1(%arg0: i32, %arg1: i32) -> (i32, i32) {
    %c0_i32 = arith.constant 0 : i32
    %c0_i32_0 = arith.constant 0 : i32
    return %arg0, %c0_i32 : i32, i32
  }
  func.func @transform_2(%arg0: i32, %arg1: i32) -> (i32, i32) {
    %c0_i32 = arith.constant 0 : i32
    %c0_i32_0 = arith.constant 0 : i32
    return %arg0, %c0_i32 : i32, i32
  }
  func.func @transform_3(%arg0: i32, %arg1: i32) -> (i32, i32, i32, i32) {
    %c0_i32 = arith.constant 0 : i32
    %c0_i32_0 = arith.constant 0 : i32
    %c0_i32_1 = arith.constant 0 : i32
    %c0_i32_2 = arith.constant 0 : i32
    return %c0_i32, %arg0, %c0_i32_0, %c0_i32_1 : i32, i32, i32, i32
  }
  func.func @transform_4(%arg0: i32, %arg1: i32) -> (i32, i32, i32) {
    %c0_i32 = arith.constant 0 : i32
    %c0_i32_0 = arith.constant 0 : i32
    %c0_i32_1 = arith.constant 0 : i32
    return %c0_i32, %arg0, %c0_i32_0 : i32, i32, i32
  }
  func.func @transform_5(%arg0: i32, %arg1: i32) -> (i32, i32) {
    %c0_i32 = arith.constant 0 : i32
    %c0_i32_0 = arith.constant 0 : i32
    return %arg0, %c0_i32 : i32, i32
  }
  func.func @transform_6(%arg0: i32, %arg1: i32) -> (i32, i32) {
    %c0_i32 = arith.constant 0 : i32
    %c0_i32_0 = arith.constant 0 : i32
    return %arg0, %c0_i32 : i32, i32
  }
  func.func @transform_7(%arg0: i32, %arg1: i32) -> (i32, i32) {
    %c0_i32 = arith.constant 0 : i32
    return %arg0, %arg1 : i32, i32
  }
}

</mosaic_0001>

<llo_original>
// kernel: tpu_custom_call.1
$region0: #{tpu_custom_call.1}
  #allocation0 [shape = 'u32[]', space=smem, size = 0x4, offset = 0x4, fixed_abs, tag = 'smem constant byte address 0x4 - core index']
  #allocation1 [shape = 'u32[144,128]{1,0:T(1,128)}', space=vmem, size = 0x12000, scoped, tag = 'internal scratch']
  %s0 = inlined_call_operand.vmem [shape: f32[8,128], index: 0, kind: input, shape index: {}]
  %s1 = inlined_call_operand.hbm [shape: f32[8,32], index: 1, kind: input, shape index: {}]
  %s2 = inlined_call_operand.hbm [shape: f32[8,32], index: 2, kind: input, shape index: {}]
  %s3 = inlined_call_operand.hbm [shape: f32[2,8,32,32], index: 3, kind: input, shape index: {}]
  %s4 = inlined_call_operand.vmem [shape: f32[2,8,32], index: 4, kind: input, shape index: {}]
  %s5 = inlined_call_operand.hbm [shape: f32[8,32], index: 5, kind: input, shape index: {}]
  %s6 = inlined_call_operand.vmem [shape: f32[8,1], index: 6, kind: input, shape index: {}]
  %s7 = inlined_call_operand.hbm [shape: f32[8,128], index: 7, kind: output, shape index: {}]
  %s8 = sld [smem:[#allocation0]]
  $region54: #{tpu_custom_call.1} parent=0
    _
  %s10 = ssub.s32 1, %s8
  %s11 = scalar_select 0, %s10, %s8
  $region1: #{tpu_custom_call.1} parent=0
    #allocation2 [shape = 'u8[4096]{0}', space=vmem, size = 0x1000, scoped, tag = 'input window, operand 1, single buffered']
    #allocation3 [shape = 's32[1]{0}', space=sflag, size = 0x4, scoped, tag = 'scoped memory for tpu_custom_call.1']
    #allocation4 [shape = 's32[1]{0}', space=sflag, size = 0x4, scoped, tag = 'scoped memory for tpu_custom_call.1']
    #allocation5 [shape = 'u8[4096]{0}', space=vmem, size = 0x1000, scoped, tag = 'input window, operand 2, single buffered']
    #allocation6 [shape = 's32[1]{0}', space=sflag, size = 0x4, scoped, tag = 'scoped memory for tpu_custom_call.1']
    #allocation7 [shape = 'u8[262144]{0}', space=vmem, size = 0x40000, scoped, tag = 'input window, operand 3, single buffered']
    #allocation8 [shape = 'u8[4096]{0}', space=vmem, size = 0x1000, scoped, tag = 'input window, operand 5, single buffered']
    #allocation9 [shape = 's32[1]{0}', space=sflag, size = 0x4, scoped, tag = 'scoped memory for tpu_custom_call.1']
    #allocation10 [shape = 'u8[4096]{0}', space=vmem, size = 0x1000, scoped, tag = 'output window, operand 0, single buffered']
    %12 = vsyncpa [#allocation3], 0
    %13 = vsyncpa [#allocation6], 0
    %14 = vsyncpa [#allocation9], 0
    %15 = vsyncpa [#allocation4], 0
    // Predicated region
    $region2: #{tpu_custom_call.1} parent=1 // pred_check
      _
    $region3: #{tpu_custom_call.1} parent=1 // pred_check_branch
      %17 = sbr.rel (0) target = $region5
    $region4: #{tpu_custom_call.1} parent=1 // pred_region
      _
    $region5: #{tpu_custom_call.1} parent=1 // pred_fallthru
      _
    // Predicated region
    $region6: #{tpu_custom_call.1} parent=1 // pred_check
      _
    $region7: #{tpu_custom_call.1} parent=1 // pred_check_branch
      %19 = sbr.rel (0) target = $region9
    $region8: #{tpu_custom_call.1} parent=1 // pred_region
      %s21 = ssub.s32 128, 128
      %22 = vsyncadd [#allocation3], %s21
      %s24 = sshll.u32 [#allocation2], 4
      %s25 = int_to_ptr.vmem [resolvable:$true] %s24
      %27 = dma.hbm_to_vmem [thread:$0]  %s1, 128, %s25, [#allocation3]
    $region9: #{tpu_custom_call.1} parent=1 // pred_fallthru
      _
    // Predicated region
    $region10: #{tpu_custom_call.1} parent=1 // pred_check
      _
    $region11: #{tpu_custom_call.1} parent=1 // pred_check_branch
      %29 = sbr.rel (0) target = $region13
    $region12: #{tpu_custom_call.1} parent=1 // pred_region
      %s31 = ssub.s32 128, 128
      %32 = vsyncadd [#allocation6], %s31
      %s34 = sshll.u32 [#allocation5], 4
      %s35 = int_to_ptr.vmem [resolvable:$true] %s34
      %37 = dma.hbm_to_vmem [thread:$0]  %s2, 128, %s35, [#allocation6]
    $region13: #{tpu_custom_call.1} parent=1 // pred_fallthru
      _
    // Predicated region
    $region14: #{tpu_custom_call.1} parent=1 // pred_check
      _
    $region15: #{tpu_custom_call.1} parent=1 // pred_check_branch
      %39 = sbr.rel (0) target = $region17
    $region16: #{tpu_custom_call.1} parent=1 // pred_region
      %s41 = ssub.s32 8192, 8192
      %42 = vsyncadd [#allocation6], %s41
      %s43 = sshll.u32 [#allocation7], 4
      %s44 = int_to_ptr.vmem [resolvable:$true] %s43
      %49 = dma.hbm_to_vmem [thread:$0]  %s3, 8192, %s44, [#allocation6], 128, 128, 8
    $region17: #{tpu_custom_call.1} parent=1 // pred_fallthru
      _
    // Predicated region
    $region18: #{tpu_custom_call.1} parent=1 // pred_check
      _
    $region19: #{tpu_custom_call.1} parent=1 // pred_check_branch
      %51 = sbr.rel (0) target = $region21
    $region20: #{tpu_custom_call.1} parent=1 // pred_region
      _
    $region21: #{tpu_custom_call.1} parent=1 // pred_fallthru
      _
    // Predicated region
    $region22: #{tpu_custom_call.1} parent=1 // pred_check
      _
    $region23: #{tpu_custom_call.1} parent=1 // pred_check_branch
      %53 = sbr.rel (0) target = $region25
    $region24: #{tpu_custom_call.1} parent=1 // pred_region
      %s55 = ssub.s32 128, 128
      %56 = vsyncadd [#allocation9], %s55
      %s58 = sshll.u32 [#allocation8], 4
      %s59 = int_to_ptr.vmem [resolvable:$true] %s58
      %61 = dma.hbm_to_vmem [thread:$0]  %s5, 128, %s59, [#allocation9]
    $region25: #{tpu_custom_call.1} parent=1 // pred_fallthru
      _
    // Predicated region
    $region26: #{tpu_custom_call.1} parent=1 // pred_check
      _
    $region27: #{tpu_custom_call.1} parent=1 // pred_check_branch
      %63 = sbr.rel (0) target = $region29
    $region28: #{tpu_custom_call.1} parent=1 // pred_region
      _
    $region29: #{tpu_custom_call.1} parent=1 // pred_fallthru
      _
    // Predicated region
    $region30: #{tpu_custom_call.1} parent=1 // pred_check
      _
    $region31: #{tpu_custom_call.1} parent=1 // pred_check_branch
      %65 = sbr.rel (0) target = $region33
    $region32: #{tpu_custom_call.1} parent=1 // pred_region
      %66 = dma.done [#allocation3], 128
    $region33: #{tpu_custom_call.1} parent=1 // pred_fallthru
      _
    // Predicated region
    $region34: #{tpu_custom_call.1} parent=1 // pred_check
      _
    $region35: #{tpu_custom_call.1} parent=1 // pred_check_branch
      %68 = sbr.rel (0) target = $region37
    $region36: #{tpu_custom_call.1} parent=1 // pred_region
      %69 = dma.done [#allocation6], 128
    $region37: #{tpu_custom_call.1} parent=1 // pred_fallthru
      _
    // Predicated region
    $region38: #{tpu_custom_call.1} parent=1 // pred_check
      _
    $region39: #{tpu_custom_call.1} parent=1 // pred_check_branch
      %71 = sbr.rel (0) target = $region41
    $region40: #{tpu_custom_call.1} parent=1 // pred_region
      %72 = dma.done [#allocation6], 8192
    $region41: #{tpu_custom_call.1} parent=1 // pred_fallthru
      _
    // Predicated region
    $region42: #{tpu_custom_call.1} parent=1 // pred_check
      _
    $region43: #{tpu_custom_call.1} parent=1 // pred_check_branch
      %74 = sbr.rel (0) target = $region45
    $region44: #{tpu_custom_call.1} parent=1 // pred_region
      %75 = dma.done [#allocation9], 128
    $region45: #{tpu_custom_call.1} parent=1 // pred_fallthru
      _
    %v76 = vld [vmem:[%s0] sm:$0xff]
    %v77 = vld [vmem:[#allocation2] sm:$0xff]
    %v78 = vld [vmem:[#allocation5] sm:$0xff]
    %v79 = vlaneseq
    %v80 = vshrl.u32 %v79, 7
    %v81 = vsub.s32 0, %v80
    %v82 = vrot.slane %v77, %v81
    %84 = vbcast.lane.b32.xlu0 %v82, 256
    %v85 = vpop.permute.xlu0 %84
    %s87 = sor.u32 256, 8
    %88 = vbcast.lane.b32.xlu0 %v82, %s87
    %v89 = vpop.permute.xlu0 %88
    %s91 = sor.u32 256, 16
    %92 = vbcast.lane.b32.xlu0 %v82, %s91
    %v93 = vpop.permute.xlu0 %92
    %s95 = sor.u32 256, 24
    %96 = vbcast.lane.b32.xlu0 %v82, %s95
    %v97 = vpop.permute.xlu0 %96
    %v98 = vlaneseq
    %v99 = vshrl.u32 %v98, 7
    %v100 = vsub.s32 1, %v99
    %v101 = vrot.slane %v77, %v100
    %103 = vbcast.lane.b32.xlu0 %v101, 256
    %v104 = vpop.permute.xlu0 %103
    %s106 = sor.u32 256, 8
    %107 = vbcast.lane.b32.xlu0 %v101, %s106
    %v108 = vpop.permute.xlu0 %107
    %s110 = sor.u32 256, 16
    %111 = vbcast.lane.b32.xlu0 %v101, %s110
    %v112 = vpop.permute.xlu0 %111
    %s114 = sor.u32 256, 24
    %115 = vbcast.lane.b32.xlu0 %v101, %s114
    %v116 = vpop.permute.xlu0 %115
    %v117 = vlaneseq
    %v118 = vshrl.u32 %v117, 7
    %v119 = vsub.s32 2, %v118
    %v120 = vrot.slane %v77, %v119
    %122 = vbcast.lane.b32.xlu0 %v120, 256
    %v123 = vpop.permute.xlu0 %122
    %s125 = sor.u32 256, 8
    %126 = vbcast.lane.b32.xlu0 %v120, %s125
    %v127 = vpop.permute.xlu0 %126
    %s129 = sor.u32 256, 16
    %130 = vbcast.lane.b32.xlu0 %v120, %s129
    %v131 = vpop.permute.xlu0 %130
    %s133 = sor.u32 256, 24
    %134 = vbcast.lane.b32.xlu0 %v120, %s133
    %v135 = vpop.permute.xlu0 %134
    %v136 = vlaneseq
    %v137 = vshrl.u32 %v136, 7
    %v138 = vsub.s32 3, %v137
    %v139 = vrot.slane %v77, %v138
    %141 = vbcast.lane.b32.xlu0 %v139, 256
    %v142 = vpop.permute.xlu0 %141
    %s144 = sor.u32 256, 8
    %145 = vbcast.lane.b32.xlu0 %v139, %s144
    %v146 = vpop.permute.xlu0 %145
    %s148 = sor.u32 256, 16
    %149 = vbcast.lane.b32.xlu0 %v139, %s148
    %v150 = vpop.permute.xlu0 %149
    %s152 = sor.u32 256, 24
    %153 = vbcast.lane.b32.xlu0 %v139, %s152
    %v154 = vpop.permute.xlu0 %153
    %v155 = vlaneseq
    %v156 = vshrl.u32 %v155, 7
    %v157 = vsub.s32 4, %v156
    %v158 = vrot.slane %v77, %v157
    %160 = vbcast.lane.b32.xlu0 %v158, 256
    %v161 = vpop.permute.xlu0 %160
    %s163 = sor.u32 256, 8
    %164 = vbcast.lane.b32.xlu0 %v158, %s163
    %v165 = vpop.permute.xlu0 %164
    %s167 = sor.u32 256, 16
    %168 = vbcast.lane.b32.xlu0 %v158, %s167
    %v169 = vpop.permute.xlu0 %168
    %s171 = sor.u32 256, 24
    %172 = vbcast.lane.b32.xlu0 %v158, %s171
    %v173 = vpop.permute.xlu0 %172
    %v174 = vlaneseq
    %v175 = vshrl.u32 %v174, 7
    %v176 = vsub.s32 5, %v175
    %v177 = vrot.slane %v77, %v176
    %179 = vbcast.lane.b32.xlu0 %v177, 256
    %v180 = vpop.permute.xlu0 %179
    %s182 = sor.u32 256, 8
    %183 = vbcast.lane.b32.xlu0 %v177, %s182
    %v184 = vpop.permute.xlu0 %183
    %s186 = sor.u32 256, 16
    %187 = vbcast.lane.b32.xlu0 %v177, %s186
    %v188 = vpop.permute.xlu0 %187
    %s190 = sor.u32 256, 24
    %191 = vbcast.lane.b32.xlu0 %v177, %s190
    %v192 = vpop.permute.xlu0 %191
    %v193 = vlaneseq
    %v194 = vshrl.u32 %v193, 7
    %v195 = vsub.s32 6, %v194
    %v196 = vrot.slane %v77, %v195
    %198 = vbcast.lane.b32.xlu0 %v196, 256
    %v199 = vpop.permute.xlu0 %198
    %s201 = sor.u32 256, 8
    %202 = vbcast.lane.b32.xlu0 %v196, %s201
    %v203 = vpop.permute.xlu0 %202
    %s205 = sor.u32 256, 16
    %206 = vbcast.lane.b32.xlu0 %v196, %s205
    %v207 = vpop.permute.xlu0 %206
    %s209 = sor.u32 256, 24
    %210 = vbcast.lane.b32.xlu0 %v196, %s209
    %v211 = vpop.permute.xlu0 %210
    %v212 = vlaneseq
    %v213 = vshrl.u32 %v212, 7
    %v214 = vsub.s32 7, %v213
    %v215 = vrot.slane %v77, %v214
    %217 = vbcast.lane.b32.xlu0 %v215, 256
    %v218 = vpop.permute.xlu0 %217
    %s220 = sor.u32 256, 8
    %221 = vbcast.lane.b32.xlu0 %v215, %s220
    %v222 = vpop.permute.xlu0 %221
    %s224 = sor.u32 256, 16
    %225 = vbcast.lane.b32.xlu0 %v215, %s224
    %v226 = vpop.permute.xlu0 %225
    %s228 = sor.u32 256, 24
    %229 = vbcast.lane.b32.xlu0 %v215, %s228
    %v230 = vpop.permute.xlu0 %229
    %v232 = vcombine.high %v76, %v76
    %v234 = vunpack.c.l.s4 1966171168
    %v235 = vunpack.c.0.s8 %v234
    %v236 = vlaneseq
    %v237 = vshrl.u32 %v236, 7
    %v238 = vsub.s32 %v235, %v237
    %v239 = vrot.slane %v76, %v238
    %v241 = vunpack.c.l.s4 1966171168
    %v242 = vunpack.c.0.s8 %v241
    %v243 = vlaneseq
    %v244 = vshrl.u32 %v243, 7
    %v245 = vsub.s32 %v242, %v244
    %v246 = vrot.slane %v232, %v245
    %v247 = vcombine.high %v239, %v239
    %v248 = vcombine.high %v246, %v246
    %v250 = vunpack.c.l.s4 1966171168
    %v251 = vunpack.c.0.s8 %v250
    %v252 = vlaneseq
    %v253 = vshrl.u32 %v252, 7
    %v254 = vsub.s32 %v251, %v253
    %v255 = vrot.slane %v239, %v254
    %v257 = vunpack.c.l.s4 1966171168
    %v258 = vunpack.c.0.s8 %v257
    %v259 = vlaneseq
    %v260 = vshrl.u32 %v259, 7
    %v261 = vsub.s32 %v258, %v260
    %v262 = vrot.slane %v246, %v261
    %v264 = vunpack.c.l.s4 1966171168
    %v265 = vunpack.c.0.s8 %v264
    %v266 = vlaneseq
    %v267 = vshrl.u32 %v266, 7
    %v268 = vsub.s32 %v265, %v267
    %v269 = vrot.slane %v247, %v268
    %v271 = vunpack.c.l.s4 1966171168
    %v272 = vunpack.c.0.s8 %v271
    %v273 = vlaneseq
    %v274 = vshrl.u32 %v273, 7
    %v275 = vsub.s32 %v272, %v274
    %v276 = vrot.slane %v248, %v275
    %v277 = vcombine.high %v255, %v255
    %v278 = vcombine.high %v262, %v262
    %v279 = vcombine.high %v269, %v269
    %v280 = vcombine.high %v276, %v276
    %v281 = vlaneseq
    %v282 = vshrl.u32 %v281, 7
    %v283 = vsub.s32 0, %v282
    %v284 = vrot.slane %v255, %v283
    %v285 = vlaneseq
    %v286 = vshrl.u32 %v285, 7
    %v287 = vsub.s32 0, %v286
    %v288 = vrot.slane %v269, %v287
    %v289 = vlaneseq
    %v290 = vshrl.u32 %v289, 7
    %v291 = vsub.s32 0, %v290
    %v292 = vrot.slane %v277, %v291
    %v293 = vlaneseq
    %v294 = vshrl.u32 %v293, 7
    %v295 = vsub.s32 0, %v294
    %v296 = vrot.slane %v279, %v295
    %v297 = vlaneseq
    %v298 = vshrl.u32 %v297, 7
    %v299 = vsub.s32 0, %v298
    %v300 = vrot.slane %v262, %v299
    %v301 = vlaneseq
    %v302 = vshrl.u32 %v301, 7
    %v303 = vsub.s32 0, %v302
    %v304 = vrot.slane %v276, %v303
    %v305 = vlaneseq
    %v306 = vshrl.u32 %v305, 7
    %v307 = vsub.s32 0, %v306
    %v308 = vrot.slane %v278, %v307
    %v309 = vlaneseq
    %v310 = vshrl.u32 %v309, 7
    %v311 = vsub.s32 0, %v310
    %v312 = vrot.slane %v280, %v311
    %v321 = vmul.f32 %v85, %v284
    %v322 = vmul.f32 %v89, %v284
    %v323 = vmul.f32 %v93, %v284
    %v324 = vmul.f32 %v97, %v284
    %v325 = vmul.f32 %v104, %v288
    %v326 = vmul.f32 %v108, %v288
    %v327 = vmul.f32 %v112, %v288
    %v328 = vmul.f32 %v116, %v288
    %v329 = vmul.f32 %v123, %v292
    %v330 = vmul.f32 %v127, %v292
    %v331 = vmul.f32 %v131, %v292
    %v332 = vmul.f32 %v135, %v292
    %v333 = vmul.f32 %v142, %v296
    %v334 = vmul.f32 %v146, %v296
    %v335 = vmul.f32 %v150, %v296
    %v336 = vmul.f32 %v154, %v296
    %v337 = vmul.f32 %v161, %v300
    %v338 = vmul.f32 %v165, %v300
    %v339 = vmul.f32 %v169, %v300
    %v340 = vmul.f32 %v173, %v300
    %v341 = vmul.f32 %v180, %v304
    %v342 = vmul.f32 %v184, %v304
    %v343 = vmul.f32 %v188, %v304
    %v344 = vmul.f32 %v192, %v304
    %v345 = vmul.f32 %v199, %v308
    %v346 = vmul.f32 %v203, %v308
    %v347 = vmul.f32 %v207, %v308
    %v348 = vmul.f32 %v211, %v308
    %v349 = vmul.f32 %v218, %v312
    %v350 = vmul.f32 %v222, %v312
    %v351 = vmul.f32 %v226, %v312
    %v352 = vmul.f32 %v230, %v312
    %v353 = vlaneseq
    %v354 = vshrl.u32 %v353, 7
    %v355 = vsub.s32 0, %v354
    %v356 = vrot.slane %v78, %v355
    %358 = vbcast.lane.b32.xlu0 %v356, 256
    %v359 = vpop.permute.xlu0 %358
    %s361 = sor.u32 256, 8
    %362 = vbcast.lane.b32.xlu0 %v356, %s361
    %v363 = vpop.permute.xlu0 %362
    %s365 = sor.u32 256, 16
    %366 = vbcast.lane.b32.xlu0 %v356, %s365
    %v367 = vpop.permute.xlu0 %366
    %s369 = sor.u32 256, 24
    %370 = vbcast.lane.b32.xlu0 %v356, %s369
    %v371 = vpop.permute.xlu0 %370
    %v372 = vlaneseq
    %v373 = vshrl.u32 %v372, 7
    %v374 = vsub.s32 1, %v373
    %v375 = vrot.slane %v78, %v374
    %377 = vbcast.lane.b32.xlu0 %v375, 256
    %v378 = vpop.permute.xlu0 %377
    %s380 = sor.u32 256, 8
    %381 = vbcast.lane.b32.xlu0 %v375, %s380
    %v382 = vpop.permute.xlu0 %381
    %s384 = sor.u32 256, 16
    %385 = vbcast.lane.b32.xlu0 %v375, %s384
    %v386 = vpop.permute.xlu0 %385
    %s388 = sor.u32 256, 24
    %389 = vbcast.lane.b32.xlu0 %v375, %s388
    %v390 = vpop.permute.xlu0 %389
    %v391 = vlaneseq
    %v392 = vshrl.u32 %v391, 7
    %v393 = vsub.s32 2, %v392
    %v394 = vrot.slane %v78, %v393
    %396 = vbcast.lane.b32.xlu0 %v394, 256
    %v397 = vpop.permute.xlu0 %396
    %s399 = sor.u32 256, 8
    %400 = vbcast.lane.b32.xlu0 %v394, %s399
    %v401 = vpop.permute.xlu0 %400
    %s403 = sor.u32 256, 16
    %404 = vbcast.lane.b32.xlu0 %v394, %s403
    %v405 = vpop.permute.xlu0 %404
    %s407 = sor.u32 256, 24
    %408 = vbcast.lane.b32.xlu0 %v394, %s407
    %v409 = vpop.permute.xlu0 %408
    %v410 = vlaneseq
    %v411 = vshrl.u32 %v410, 7
    %v412 = vsub.s32 3, %v411
    %v413 = vrot.slane %v78, %v412
    %415 = vbcast.lane.b32.xlu0 %v413, 256
    %v416 = vpop.permute.xlu0 %415
    %s418 = sor.u32 256, 8
    %419 = vbcast.lane.b32.xlu0 %v413, %s418
    %v420 = vpop.permute.xlu0 %419
    %s422 = sor.u32 256, 16
    %423 = vbcast.lane.b32.xlu0 %v413, %s422
    %v424 = vpop.permute.xlu0 %423
    %s426 = sor.u32 256, 24
    %427 = vbcast.lane.b32.xlu0 %v413, %s426
    %v428 = vpop.permute.xlu0 %427
    %v429 = vlaneseq
    %v430 = vshrl.u32 %v429, 7
    %v431 = vsub.s32 4, %v430
    %v432 = vrot.slane %v78, %v431
    %434 = vbcast.lane.b32.xlu0 %v432, 256
    %v435 = vpop.permute.xlu0 %434
    %s437 = sor.u32 256, 8
    %438 = vbcast.lane.b32.xlu0 %v432, %s437
    %v439 = vpop.permute.xlu0 %438
    %s441 = sor.u32 256, 16
    %442 = vbcast.lane.b32.xlu0 %v432, %s441
    %v443 = vpop.permute.xlu0 %442
    %s445 = sor.u32 256, 24
    %446 = vbcast.lane.b32.xlu0 %v432, %s445
    %v447 = vpop.permute.xlu0 %446
    %v448 = vlaneseq
    %v449 = vshrl.u32 %v448, 7
    %v450 = vsub.s32 5, %v449
    %v451 = vrot.slane %v78, %v450
    %453 = vbcast.lane.b32.xlu0 %v451, 256
    %v454 = vpop.permute.xlu0 %453
    %s456 = sor.u32 256, 8
    %457 = vbcast.lane.b32.xlu0 %v451, %s456
    %v458 = vpop.permute.xlu0 %457
    %s460 = sor.u32 256, 16
    %461 = vbcast.lane.b32.xlu0 %v451, %s460
    %v462 = vpop.permute.xlu0 %461
    %s464 = sor.u32 256, 24
    %465 = vbcast.lane.b32.xlu0 %v451, %s464
    %v466 = vpop.permute.xlu0 %465
    %v467 = vlaneseq
    %v468 = vshrl.u32 %v467, 7
    %v469 = vsub.s32 6, %v468
    %v470 = vrot.slane %v78, %v469
    %472 = vbcast.lane.b32.xlu0 %v470, 256
    %v473 = vpop.permute.xlu0 %472
    %s475 = sor.u32 256, 8
    %476 = vbcast.lane.b32.xlu0 %v470, %s475
    %v477 = vpop.permute.xlu0 %476
    %s479 = sor.u32 256, 16
    %480 = vbcast.lane.b32.xlu0 %v470, %s479
    %v481 = vpop.permute.xlu0 %480
    %s483 = sor.u32 256, 24
    %484 = vbcast.lane.b32.xlu0 %v470, %s483
    %v485 = vpop.permute.xlu0 %484
    %v486 = vlaneseq
    %v487 = vshrl.u32 %v486, 7
    %v488 = vsub.s32 7, %v487
    %v489 = vrot.slane %v78, %v488
    %491 = vbcast.lane.b32.xlu0 %v489, 256
    %v492 = vpop.permute.xlu0 %491
    %s494 = sor.u32 256, 8
    %495 = vbcast.lane.b32.xlu0 %v489, %s494
    %v496 = vpop.permute.xlu0 %495
    %s498 = sor.u32 256, 16
    %499 = vbcast.lane.b32.xlu0 %v489, %s498
    %v500 = vpop.permute.xlu0 %499
    %s502 = sor.u32 256, 24
    %503 = vbcast.lane.b32.xlu0 %v489, %s502
    %v504 = vpop.permute.xlu0 %503
    %v505 = vadd.f32 %v321, %v359
    %v506 = vadd.f32 %v322, %v363
    %v507 = vadd.f32 %v323, %v367
    %v508 = vadd.f32 %v324, %v371
    %v509 = vadd.f32 %v325, %v378
    %v510 = vadd.f32 %v326, %v382
    %v511 = vadd.f32 %v327, %v386
    %v512 = vadd.f32 %v328, %v390
    %v513 = vadd.f32 %v329, %v397
    %v514 = vadd.f32 %v330, %v401
    %v515 = vadd.f32 %v331, %v405
    %v516 = vadd.f32 %v332, %v409
    %v517 = vadd.f32 %v333, %v416
    %v518 = vadd.f32 %v334, %v420
    %v519 = vadd.f32 %v335, %v424
    %v520 = vadd.f32 %v336, %v428
    %v521 = vadd.f32 %v337, %v435
    %v522 = vadd.f32 %v338, %v439
    %v523 = vadd.f32 %v339, %v443
    %v524 = vadd.f32 %v340, %v447
    %v525 = vadd.f32 %v341, %v454
    %v526 = vadd.f32 %v342, %v458
    %v527 = vadd.f32 %v343, %v462
    %v528 = vadd.f32 %v344, %v466
    %v529 = vadd.f32 %v345, %v473
    %v530 = vadd.f32 %v346, %v477
    %v531 = vadd.f32 %v347, %v481
    %v532 = vadd.f32 %v348, %v485
    %v533 = vadd.f32 %v349, %v492
    %v534 = vadd.f32 %v350, %v496
    %v535 = vadd.f32 %v351, %v500
    %v536 = vadd.f32 %v352, %v504
    %v537 = vmin.f32 %v505, 0.0
    %v538 = vmin.f32 %v506, 0.0
    %v539 = vmin.f32 %v507, 0.0
    %v540 = vmin.f32 %v508, 0.0
    %v541 = vmin.f32 %v509, 0.0
    %v542 = vmin.f32 %v510, 0.0
    %v543 = vmin.f32 %v511, 0.0
    %v544 = vmin.f32 %v512, 0.0
    %v545 = vmin.f32 %v513, 0.0
    %v546 = vmin.f32 %v514, 0.0
    %v547 = vmin.f32 %v515, 0.0
    %v548 = vmin.f32 %v516, 0.0
    %v549 = vmin.f32 %v517, 0.0
    %v550 = vmin.f32 %v518, 0.0
    %v551 = vmin.f32 %v519, 0.0
    %v552 = vmin.f32 %v520, 0.0
    %v553 = vmin.f32 %v521, 0.0
    %v554 = vmin.f32 %v522, 0.0
    %v555 = vmin.f32 %v523, 0.0
    %v556 = vmin.f32 %v524, 0.0
    %v557 = vmin.f32 %v525, 0.0
    %v558 = vmin.f32 %v526, 0.0
    %v559 = vmin.f32 %v527, 0.0
    %v560 = vmin.f32 %v528, 0.0
    %v561 = vmin.f32 %v529, 0.0
    %v562 = vmin.f32 %v530, 0.0
    %v563 = vmin.f32 %v531, 0.0
    %v564 = vmin.f32 %v532, 0.0
    %v565 = vmin.f32 %v533, 0.0
    %v566 = vmin.f32 %v534, 0.0
    %v567 = vmin.f32 %v535, 0.0
    %v568 = vmin.f32 %v536, 0.0
    %v569 = vmul.f32 %v537, 1.442695
    %v570 = vpow.pop %v569
    %v571 = vmul.f32 %v538, 1.442695
    %v572 = vpow.pop %v571
    %v573 = vmul.f32 %v539, 1.442695
    %v574 = vpow.pop %v573
    %v575 = vmul.f32 %v540, 1.442695
    %v576 = vpow.pop %v575
    %v577 = vmul.f32 %v541, 1.442695
    %v578 = vpow.pop %v577
    %v579 = vmul.f32 %v542, 1.442695
    %v580 = vpow.pop %v579
    %v581 = vmul.f32 %v543, 1.442695
    %v582 = vpow.pop %v581
    %v583 = vmul.f32 %v544, 1.442695
    %v584 = vpow.pop %v583
    %v585 = vmul.f32 %v545, 1.442695
    %v586 = vpow.pop %v585
    %v587 = vmul.f32 %v546, 1.442695
    %v588 = vpow.pop %v587
    %v589 = vmul.f32 %v547, 1.442695
    %v590 = vpow.pop %v589
    %v591 = vmul.f32 %v548, 1.442695
    %v592 = vpow.pop %v591
    %v593 = vmul.f32 %v549, 1.442695
    %v594 = vpow.pop %v593
    %v595 = vmul.f32 %v550, 1.442695
    %v596 = vpow.pop %v595
    %v597 = vmul.f32 %v551, 1.442695
    %v598 = vpow.pop %v597
    %v599 = vmul.f32 %v552, 1.442695
    %v600 = vpow.pop %v599
    %v601 = vmul.f32 %v553, 1.442695
    %v602 = vpow.pop %v601
    %v603 = vmul.f32 %v554, 1.442695
    %v604 = vpow.pop %v603
    %v605 = vmul.f32 %v555, 1.442695
    %v606 = vpow.pop %v605
    %v607 = vmul.f32 %v556, 1.442695
    %v608 = vpow.pop %v607
    %v609 = vmul.f32 %v557, 1.442695
    %v610 = vpow.pop %v609
    %v611 = vmul.f32 %v558, 1.442695
    %v612 = vpow.pop %v611
    %v613 = vmul.f32 %v559, 1.442695
    %v614 = vpow.pop %v613
    %v615 = vmul.f32 %v560, 1.442695
    %v616 = vpow.pop %v615
    %v617 = vmul.f32 %v561, 1.442695
    %v618 = vpow.pop %v617
    %v619 = vmul.f32 %v562, 1.442695
    %v620 = vpow.pop %v619
    %v621 = vmul.f32 %v563, 1.442695
    %v622 = vpow.pop %v621
    %v623 = vmul.f32 %v564, 1.442695
    %v624 = vpow.pop %v623
    %v625 = vmul.f32 %v565, 1.442695
    %v626 = vpow.pop %v625
    %v627 = vmul.f32 %v566, 1.442695
    %v628 = vpow.pop %v627
    %v629 = vmul.f32 %v567, 1.442695
    %v630 = vpow.pop %v629
    %v631 = vmul.f32 %v568, 1.442695
    %v632 = vpow.pop %v631
    %v633 = vsub.f32 %v570, 1.0
    %v634 = vsub.f32 %v572, 1.0
    %v635 = vsub.f32 %v574, 1.0
    %v636 = vsub.f32 %v576, 1.0
    %v637 = vsub.f32 %v578, 1.0
    %v638 = vsub.f32 %v580, 1.0
    %v639 = vsub.f32 %v582, 1.0
    %v640 = vsub.f32 %v584, 1.0
    %v641 = vsub.f32 %v586, 1.0
    %v642 = vsub.f32 %v588, 1.0
    %v643 = vsub.f32 %v590, 1.0
    %v644 = vsub.f32 %v592, 1.0
    %v645 = vsub.f32 %v594, 1.0
    %v646 = vsub.f32 %v596, 1.0
    %v647 = vsub.f32 %v598, 1.0
    %v648 = vsub.f32 %v600, 1.0
    %v649 = vsub.f32 %v602, 1.0
    %v650 = vsub.f32 %v604, 1.0
    %v651 = vsub.f32 %v606, 1.0
    %v652 = vsub.f32 %v608, 1.0
    %v653 = vsub.f32 %v610, 1.0
    %v654 = vsub.f32 %v612, 1.0
    %v655 = vsub.f32 %v614, 1.0
    %v656 = vsub.f32 %v616, 1.0
    %v657 = vsub.f32 %v618, 1.0
    %v658 = vsub.f32 %v620, 1.0
    %v659 = vsub.f32 %v622, 1.0
    %v660 = vsub.f32 %v624, 1.0
    %v661 = vsub.f32 %v626, 1.0
    %v662 = vsub.f32 %v628, 1.0
    %v663 = vsub.f32 %v630, 1.0
    %v664 = vsub.f32 %v632, 1.0
    %v665 = vmax.f32 %v505, 0.0
    %v666 = vmax.f32 %v506, 0.0
    %v667 = vmax.f32 %v507, 0.0
    %v668 = vmax.f32 %v508, 0.0
    %v669 = vmax.f32 %v509, 0.0
    %v670 = vmax.f32 %v510, 0.0
    %v671 = vmax.f32 %v511, 0.0
    %v672 = vmax.f32 %v512, 0.0
    %v673 = vmax.f32 %v513, 0.0
    %v674 = vmax.f32 %v514, 0.0
    %v675 = vmax.f32 %v515, 0.0
    %v676 = vmax.f32 %v516, 0.0
    %v677 = vmax.f32 %v517, 0.0
    %v678 = vmax.f32 %v518, 0.0
    %v679 = vmax.f32 %v519, 0.0
    %v680 = vmax.f32 %v520, 0.0
    %v681 = vmax.f32 %v521, 0.0
    %v682 = vmax.f32 %v522, 0.0
    %v683 = vmax.f32 %v523, 0.0
    %v684 = vmax.f32 %v524, 0.0
    %v685 = vmax.f32 %v525, 0.0
    %v686 = vmax.f32 %v526, 0.0
    %v687 = vmax.f32 %v527, 0.0
    %v688 = vmax.f32 %v528, 0.0
    %v689 = vmax.f32 %v529, 0.0
    %v690 = vmax.f32 %v530, 0.0
    %v691 = vmax.f32 %v531, 0.0
    %v692 = vmax.f32 %v532, 0.0
    %v693 = vmax.f32 %v533, 0.0
    %v694 = vmax.f32 %v534, 0.0
    %v695 = vmax.f32 %v535, 0.0
    %v696 = vmax.f32 %v536, 0.0
    %v697 = vmin.f32 %v633, 0.0
    %v698 = vmin.f32 %v634, 0.0
    %v699 = vmin.f32 %v635, 0.0
    %v700 = vmin.f32 %v636, 0.0
    %v701 = vmin.f32 %v637, 0.0
    %v702 = vmin.f32 %v638, 0.0
    %v703 = vmin.f32 %v639, 0.0
    %v704 = vmin.f32 %v640, 0.0
    %v705 = vmin.f32 %v641, 0.0
    %v706 = vmin.f32 %v642, 0.0
    %v707 = vmin.f32 %v643, 0.0
    %v708 = vmin.f32 %v644, 0.0
    %v709 = vmin.f32 %v645, 0.0
    %v710 = vmin.f32 %v646, 0.0
    %v711 = vmin.f32 %v647, 0.0
    %v712 = vmin.f32 %v648, 0.0
    %v713 = vmin.f32 %v649, 0.0
    %v714 = vmin.f32 %v650, 0.0
    %v715 = vmin.f32 %v651, 0.0
    %v716 = vmin.f32 %v652, 0.0
    %v717 = vmin.f32 %v653, 0.0
    %v718 = vmin.f32 %v654, 0.0
    %v719 = vmin.f32 %v655, 0.0
    %v720 = vmin.f32 %v656, 0.0
    %v721 = vmin.f32 %v657, 0.0
    %v722 = vmin.f32 %v658, 0.0
    %v723 = vmin.f32 %v659, 0.0
    %v724 = vmin.f32 %v660, 0.0
    %v725 = vmin.f32 %v661, 0.0
    %v726 = vmin.f32 %v662, 0.0
    %v727 = vmin.f32 %v663, 0.0
    %v728 = vmin.f32 %v664, 0.0
    %v729 = vadd.f32 %v665, %v697
    %v730 = vadd.f32 %v666, %v698
    %v731 = vadd.f32 %v667, %v699
    %v732 = vadd.f32 %v668, %v700
    %v733 = vadd.f32 %v669, %v701
    %v734 = vadd.f32 %v670, %v702
    %v735 = vadd.f32 %v671, %v703
    %v736 = vadd.f32 %v672, %v704
    %v737 = vadd.f32 %v673, %v705
    %v738 = vadd.f32 %v674, %v706
    %v739 = vadd.f32 %v675, %v707
    %v740 = vadd.f32 %v676, %v708
    %v741 = vadd.f32 %v677, %v709
    %v742 = vadd.f32 %v678, %v710
    %v743 = vadd.f32 %v679, %v711
    %v744 = vadd.f32 %v680, %v712
    %v745 = vadd.f32 %v681, %v713
    %v746 = vadd.f32 %v682, %v714
    %v747 = vadd.f32 %v683, %v715
    %v748 = vadd.f32 %v684, %v716
    %v749 = vadd.f32 %v685, %v717
    %v750 = vadd.f32 %v686, %v718
    %v751 = vadd.f32 %v687, %v719
    %v752 = vadd.f32 %v688, %v720
    %v753 = vadd.f32 %v689, %v721
    %v754 = vadd.f32 %v690, %v722
    %v755 = vadd.f32 %v691, %v723
    %v756 = vadd.f32 %v692, %v724
    %v757 = vadd.f32 %v693, %v725
    %v758 = vadd.f32 %v694, %v726
    %v759 = vadd.f32 %v695, %v727
    %v760 = vadd.f32 %v696, %v728
    %v761 = vld [vmem:[#allocation7] sm:$0xff]
    %v762 = vld [vmem:[#allocation7 + $0x8] sm:$0xff]
    %v763 = vld [vmem:[#allocation7 + $0x10] sm:$0xff]
    %v764 = vld [vmem:[#allocation7 + $0x18] sm:$0xff]
    %v765 = vld [vmem:[#allocation7 + $0x20] sm:$0xff]
    %v766 = vld [vmem:[#allocation7 + $0x28] sm:$0xff]
    %v767 = vld [vmem:[#allocation7 + $0x30] sm:$0xff]
    %v768 = vld [vmem:[#allocation7 + $0x38] sm:$0xff]
    %v769 = vld [vmem:[#allocation7 + $0x40] sm:$0xff]
    %v770 = vld [vmem:[#allocation7 + $0x48] sm:$0xff]
    %v771 = vld [vmem:[#allocation7 + $0x50] sm:$0xff]
    %v772 = vld [vmem:[#allocation7 + $0x58] sm:$0xff]
    %v773 = vld [vmem:[#allocation7 + $0x60] sm:$0xff]
    %v774 = vld [vmem:[#allocation7 + $0x68] sm:$0xff]
    %v775 = vld [vmem:[#allocation7 + $0x70] sm:$0xff]
    %v776 = vld [vmem:[#allocation7 + $0x78] sm:$0xff]
    %v777 = vld [vmem:[#allocation7 + $0x80] sm:$0xff]
    %v778 = vld [vmem:[#allocation7 + $0x88] sm:$0xff]
    %v779 = vld [vmem:[#allocation7 + $0x90] sm:$0xff]
    %v780 = vld [vmem:[#allocation7 + $0x98] sm:$0xff]
    %v781 = vld [vmem:[#allocation7 + $0xa0] sm:$0xff]
    %v782 = vld [vmem:[#allocation7 + $0xa8] sm:$0xff]
    %v783 = vld [vmem:[#allocation7 + $0xb0] sm:$0xff]
    %v784 = vld [vmem:[#allocation7 + $0xb8] sm:$0xff]
    %v785 = vld [vmem:[#allocation7 + $0xc0] sm:$0xff]
    %v786 = vld [vmem:[#allocation7 + $0xc8] sm:$0xff]
    %v787 = vld [vmem:[#allocation7 + $0xd0] sm:$0xff]
    %v788 = vld [vmem:[#allocation7 + $0xd8] sm:$0xff]
    %v789 = vld [vmem:[#allocation7 + $0xe0] sm:$0xff]
    %v790 = vld [vmem:[#allocation7 + $0xe8] sm:$0xff]
    %v791 = vld [vmem:[#allocation7 + $0xf0] sm:$0xff]
    %v792 = vld [vmem:[#allocation7 + $0xf8] sm:$0xff]
    %v793 = vld [vmem:[%s4] sm:$0xff]
    %v794 = vlaneseq
    %v795 = vshrl.u32 %v794, 7
    %v796 = vsub.s32 0, %v795
    %v797 = vrot.slane %v793, %v796
    %799 = vbcast.lane.b32.xlu0 %v797, 256
    %v800 = vpop.permute.xlu0 %799
    %s802 = sor.u32 256, 8
    %803 = vbcast.lane.b32.xlu0 %v797, %s802
    %v804 = vpop.permute.xlu0 %803
    %s806 = sor.u32 256, 16
    %807 = vbcast.lane.b32.xlu0 %v797, %s806
    %v808 = vpop.permute.xlu0 %807
    %s810 = sor.u32 256, 24
    %811 = vbcast.lane.b32.xlu0 %v797, %s810
    %v812 = vpop.permute.xlu0 %811
    %v813 = vlaneseq
    %v814 = vshrl.u32 %v813, 7
    %v815 = vsub.s32 1, %v814
    %v816 = vrot.slane %v793, %v815
    %818 = vbcast.lane.b32.xlu0 %v816, 256
    %v819 = vpop.permute.xlu0 %818
    %s821 = sor.u32 256, 8
    %822 = vbcast.lane.b32.xlu0 %v816, %s821
    %v823 = vpop.permute.xlu0 %822
    %s825 = sor.u32 256, 16
    %826 = vbcast.lane.b32.xlu0 %v816, %s825
    %v827 = vpop.permute.xlu0 %826
    %s829 = sor.u32 256, 24
    %830 = vbcast.lane.b32.xlu0 %v816, %s829
    %v831 = vpop.permute.xlu0 %830
    %v832 = vlaneseq
    %v833 = vshrl.u32 %v832, 7
    %v834 = vsub.s32 2, %v833
    %v835 = vrot.slane %v793, %v834
    %837 = vbcast.lane.b32.xlu0 %v835, 256
    %v838 = vpop.permute.xlu0 %837
    %s840 = sor.u32 256, 8
    %841 = vbcast.lane.b32.xlu0 %v835, %s840
    %v842 = vpop.permute.xlu0 %841
    %s844 = sor.u32 256, 16
    %845 = vbcast.lane.b32.xlu0 %v835, %s844
    %v846 = vpop.permute.xlu0 %845
    %s848 = sor.u32 256, 24
    %849 = vbcast.lane.b32.xlu0 %v835, %s848
    %v850 = vpop.permute.xlu0 %849
    %v851 = vlaneseq
    %v852 = vshrl.u32 %v851, 7
    %v853 = vsub.s32 3, %v852
    %v854 = vrot.slane %v793, %v853
    %856 = vbcast.lane.b32.xlu0 %v854, 256
    %v857 = vpop.permute.xlu0 %856
    %s859 = sor.u32 256, 8
    %860 = vbcast.lane.b32.xlu0 %v854, %s859
    %v861 = vpop.permute.xlu0 %860
    %s863 = sor.u32 256, 16
    %864 = vbcast.lane.b32.xlu0 %v854, %s863
    %v865 = vpop.permute.xlu0 %864
    %s867 = sor.u32 256, 24
    %868 = vbcast.lane.b32.xlu0 %v854, %s867
    %v869 = vpop.permute.xlu0 %868
    %v870 = vlaneseq
    %v871 = vshrl.u32 %v870, 7
    %v872 = vsub.s32 4, %v871
    %v873 = vrot.slane %v793, %v872
    %875 = vbcast.lane.b32.xlu0 %v873, 256
    %v876 = vpop.permute.xlu0 %875
    %s878 = sor.u32 256, 8
    %879 = vbcast.lane.b32.xlu0 %v873, %s878
    %v880 = vpop.permute.xlu0 %879
    %s882 = sor.u32 256, 16
    %883 = vbcast.lane.b32.xlu0 %v873, %s882
    %v884 = vpop.permute.xlu0 %883
    %s886 = sor.u32 256, 24
    %887 = vbcast.lane.b32.xlu0 %v873, %s886
    %v888 = vpop.permute.xlu0 %887
    %v889 = vlaneseq
    %v890 = vshrl.u32 %v889, 7
    %v891 = vsub.s32 5, %v890
    %v892 = vrot.slane %v793, %v891
    %894 = vbcast.lane.b32.xlu0 %v892, 256
    %v895 = vpop.permute.xlu0 %894
    %s897 = sor.u32 256, 8
    %898 = vbcast.lane.b32.xlu0 %v892, %s897
    %v899 = vpop.permute.xlu0 %898
    %s901 = sor.u32 256, 16
    %902 = vbcast.lane.b32.xlu0 %v892, %s901
    %v903 = vpop.permute.xlu0 %902
    %s905 = sor.u32 256, 24
    %906 = vbcast.lane.b32.xlu0 %v892, %s905
    %v907 = vpop.permute.xlu0 %906
    %v908 = vlaneseq
    %v909 = vshrl.u32 %v908, 7
    %v910 = vsub.s32 6, %v909
    %v911 = vrot.slane %v793, %v910
    %913 = vbcast.lane.b32.xlu0 %v911, 256
    %v914 = vpop.permute.xlu0 %913
    %s916 = sor.u32 256, 8
    %917 = vbcast.lane.b32.xlu0 %v911, %s916
    %v918 = vpop.permute.xlu0 %917
    %s920 = sor.u32 256, 16
    %921 = vbcast.lane.b32.xlu0 %v911, %s920
    %v922 = vpop.permute.xlu0 %921
    %s924 = sor.u32 256, 24
    %925 = vbcast.lane.b32.xlu0 %v911, %s924
    %v926 = vpop.permute.xlu0 %925
    %v927 = vlaneseq
    %v928 = vshrl.u32 %v927, 7
    %v929 = vsub.s32 7, %v928
    %v930 = vrot.slane %v793, %v929
    %932 = vbcast.lane.b32.xlu0 %v930, 256
    %v933 = vpop.permute.xlu0 %932
    %s935 = sor.u32 256, 8
    %936 = vbcast.lane.b32.xlu0 %v930, %s935
    %v937 = vpop.permute.xlu0 %936
    %s939 = sor.u32 256, 16
    %940 = vbcast.lane.b32.xlu0 %v930, %s939
    %v941 = vpop.permute.xlu0 %940
    %s943 = sor.u32 256, 24
    %944 = vbcast.lane.b32.xlu0 %v930, %s943
    %v945 = vpop.permute.xlu0 %944
    %vm946 = vcmask 261120
    %v948 = vsel %vm946, %v761, 0
    %v951 = vsel %vm946, %v762, 0
    %v954 = vsel %vm946, %v763, 0
    %v957 = vsel %vm946, %v764, 0
    %959 = vmatprep.subr.mxu0 0.0
    %960 = vmatpush1.msra.mxu0 %v729
    %961 = vmatprep.subr.mxu0 0.0
    %962 = vmatpush1.msra.mxu0 %v730
    %963 = vmatprep.subr.mxu0 0.0
    %964 = vmatpush1.msra.mxu0 %v731
    %965 = vmatprep.subr.mxu0 0.0
    %966 = vmatpush1.msra.mxu0 %v732
    %967 = vmatprep.subr.mxu0 0.0
    %968 = vmatpush1.msra.mxu0 0.0
    %969 = vmatprep.subr.mxu0 0.0
    %970 = vmatpush1.msra.mxu0 0.0
    %971 = vmatprep.subr.mxu0 0.0
    %972 = vmatpush1.msra.mxu0 0.0
    %973 = vmatprep.subr.mxu0 0.0
    %974 = vmatpush1.msra.mxu0 0.0
    %975 = vmatprep.subr.mxu0 0.0
    %976 = vmatpush1.msra.mxu0 0.0
    %977 = vmatprep.subr.mxu0 0.0
    %978 = vmatpush1.msra.mxu0 0.0
    %979 = vmatprep.subr.mxu0 0.0
    %980 = vmatpush1.msra.mxu0 0.0
    %981 = vmatprep.subr.mxu0 0.0
    %982 = vmatpush1.msra.mxu0 0.0
    %983 = vmatprep.subr.mxu0 0.0
    %984 = vmatpush1.msra.mxu0 0.0
    %985 = vmatprep.subr.mxu0 0.0
    %986 = vmatpush1.msra.mxu0 0.0
    %987 = vmatprep.subr.mxu0 0.0
    %988 = vmatpush1.msra.mxu0 0.0
    %989 = vmatprep.subr.mxu0 0.0
    %990 = vmatpush1.msra.mxu0 0.0
    %991 = vmatprep.subr.mxu0 0.0
    %992 = vmatpush1.msra.mxu0 0.0
    %993 = vmatprep.subr.mxu0 0.0
    %994 = vmatpush1.msra.mxu0 0.0
    %995 = vmatprep.subr.mxu0 0.0
    %996 = vmatpush1.msra.mxu0 0.0
    %997 = vmatprep.subr.mxu0 0.0
    %998 = vmatpush1.msra.mxu0 0.0
    %999 = vmatprep.subr.mxu0 0.0
    %1000 = vmatpush1.msra.mxu0 0.0
    %1001 = vmatprep.subr.mxu0 0.0
    %1002 = vmatpush1.msra.mxu0 0.0
    %1003 = vmatprep.subr.mxu0 0.0
    %1004 = vmatpush1.msra.mxu0 0.0
    %1005 = vmatprep.subr.mxu0 0.0
    %1006 = vmatpush1.msra.mxu0 0.0
    %1007 = vmatprep.subr.mxu0 0.0
    %1008 = vmatpush1.msra.mxu0 0.0
    %1009 = vmatprep.subr.mxu0 0.0
    %1010 = vmatpush1.msra.mxu0 0.0
    %1011 = vmatprep.subr.mxu0 0.0
    %1012 = vmatpush1.msra.mxu0 0.0
    %1013 = vmatprep.subr.mxu0 0.0
    %1014 = vmatpush1.msra.mxu0 0.0
    %1015 = vmatprep.subr.mxu0 0.0
    %1016 = vmatpush1.msra.mxu0 0.0
    %1017 = vmatprep.subr.mxu0 0.0
    %1018 = vmatpush1.msra.mxu0 0.0
    %1019 = vmatprep.subr.mxu0 0.0
    %1020 = vmatpush1.msra.mxu0 0.0
    %1021 = vmatprep.subr.mxu0 0.0
    %1022 = vmatpush1.msra.mxu0 0.0
    %1023 = vmatprep.mubr.f32.mxu0 0.0
    %1024 = vmatmul.mubr.f32.gmra.mrb[0].mxu0 %v948
    %v1025 = vpop.f32.mrb[0].mxu0
    %v1026 = vadd.f32 %v800, %v1025
    %v1027 = vpop.f32.mrb[0].mxu0
    %1028 = vmatprep.mubr.f32.mxu0 0.0
    %1029 = vmatmul.mubr.f32.gmra.mrb[0].mxu0 %v951
    %v1030 = vpop.f32.mrb[0].mxu0
    %v1031 = vadd.f32 %v804, %v1030
    %v1032 = vpop.f32.mrb[0].mxu0
    %1033 = vmatprep.mubr.f32.mxu0 0.0
    %1034 = vmatmul.mubr.f32.gmra.mrb[0].mxu0 %v954
    %v1035 = vpop.f32.mrb[0].mxu0
    %v1036 = vadd.f32 %v808, %v1035
    %v1037 = vpop.f32.mrb[0].mxu0
    %1038 = vmatprep.mubr.f32.mxu0 0.0
    %1039 = vmatmul.mubr.f32.gmra.mrb[0].mxu0 %v957
    %v1040 = vpop.f32.mrb[0].mxu0
    %v1041 = vadd.f32 %v812, %v1040
    %v1042 = vpop.f32.mrb[0].mxu0
    %1043 = vdwg.mxu0
    %v1045 = vsel %vm946, %v765, 0
    %v1048 = vsel %vm946, %v766, 0
    %v1051 = vsel %vm946, %v767, 0
    %v1054 = vsel %vm946, %v768, 0
    %1056 = vmatprep.subr.mxu0 0.0
    %1057 = vmatpush1.msra.mxu0 %v733
    %1058 = vmatprep.subr.mxu0 0.0
    %1059 = vmatpush1.msra.mxu0 %v734
    %1060 = vmatprep.subr.mxu0 0.0
    %1061 = vmatpush1.msra.mxu0 %v735
    %1062 = vmatprep.subr.mxu0 0.0
    %1063 = vmatpush1.msra.mxu0 %v736
    %1064 = vmatprep.subr.mxu0 0.0
    %1065 = vmatpush1.msra.mxu0 0.0
    %1066 = vmatprep.subr.mxu0 0.0
    %1067 = vmatpush1.msra.mxu0 0.0
    %1068 = vmatprep.subr.mxu0 0.0
    %1069 = vmatpush1.msra.mxu0 0.0
    %1070 = vmatprep.subr.mxu0 0.0
    %1071 = vmatpush1.msra.mxu0 0.0
    %1072 = vmatprep.subr.mxu0 0.0
    %1073 = vmatpush1.msra.mxu0 0.0
    %1074 = vmatprep.subr.mxu0 0.0
    %1075 = vmatpush1.msra.mxu0 0.0
    %1076 = vmatprep.subr.mxu0 0.0
    %1077 = vmatpush1.msra.mxu0 0.0
    %1078 = vmatprep.subr.mxu0 0.0
    %1079 = vmatpush1.msra.mxu0 0.0
    %1080 = vmatprep.subr.mxu0 0.0
    %1081 = vmatpush1.msra.mxu0 0.0
    %1082 = vmatprep.subr.mxu0 0.0
    %1083 = vmatpush1.msra.mxu0 0.0
    %1084 = vmatprep.subr.mxu0 0.0
    %1085 = vmatpush1.msra.mxu0 0.0
    %1086 = vmatprep.subr.mxu0 0.0
    %1087 = vmatpush1.msra.mxu0 0.0
    %1088 = vmatprep.subr.mxu0 0.0
    %1089 = vmatpush1.msra.mxu0 0.0
    %1090 = vmatprep.subr.mxu0 0.0
    %1091 = vmatpush1.msra.mxu0 0.0
    %1092 = vmatprep.subr.mxu0 0.0
    %1093 = vmatpush1.msra.mxu0 0.0
    %1094 = vmatprep.subr.mxu0 0.0
    %1095 = vmatpush1.msra.mxu0 0.0
    %1096 = vmatprep.subr.mxu0 0.0
    %1097 = vmatpush1.msra.mxu0 0.0
    %1098 = vmatprep.subr.mxu0 0.0
    %1099 = vmatpush1.msra.mxu0 0.0
    %1100 = vmatprep.subr.mxu0 0.0
    %1101 = vmatpush1.msra.mxu0 0.0
    %1102 = vmatprep.subr.mxu0 0.0
    %1103 = vmatpush1.msra.mxu0 0.0
    %1104 = vmatprep.subr.mxu0 0.0
    %1105 = vmatpush1.msra.mxu0 0.0
    %1106 = vmatprep.subr.mxu0 0.0
    %1107 = vmatpush1.msra.mxu0 0.0
    %1108 = vmatprep.subr.mxu0 0.0
    %1109 = vmatpush1.msra.mxu0 0.0
    %1110 = vmatprep.subr.mxu0 0.0
    %1111 = vmatpush1.msra.mxu0 0.0
    %1112 = vmatprep.subr.mxu0 0.0
    %1113 = vmatpush1.msra.mxu0 0.0
    %1114 = vmatprep.subr.mxu0 0.0
    %1115 = vmatpush1.msra.mxu0 0.0
    %1116 = vmatprep.subr.mxu0 0.0
    %1117 = vmatpush1.msra.mxu0 0.0
    %1118 = vmatprep.subr.mxu0 0.0
    %1119 = vmatpush1.msra.mxu0 0.0
    %1120 = vmatprep.mubr.f32.mxu0 0.0
    %1121 = vmatmul.mubr.f32.gmra.mrb[0].mxu0 %v1045
    %v1122 = vpop.f32.mrb[0].mxu0
    %v1123 = vadd.f32 %v819, %v1122
    %v1124 = vpop.f32.mrb[0].mxu0
    %1125 = vmatprep.mubr.f32.mxu0 0.0
    %1126 = vmatmul.mubr.f32.gmra.mrb[0].mxu0 %v1048
    %v1127 = vpop.f32.mrb[0].mxu0
    %v1128 = vadd.f32 %v823, %v1127
    %v1129 = vpop.f32.mrb[0].mxu0
    %1130 = vmatprep.mubr.f32.mxu0 0.0
    %1131 = vmatmul.mubr.f32.gmra.mrb[0].mxu0 %v1051
    %v1132 = vpop.f32.mrb[0].mxu0
    %v1133 = vadd.f32 %v827, %v1132
    %v1134 = vpop.f32.mrb[0].mxu0
    %1135 = vmatprep.mubr.f32.mxu0 0.0
    %1136 = vmatmul.mubr.f32.gmra.mrb[0].mxu0 %v1054
    %v1137 = vpop.f32.mrb[0].mxu0
    %v1138 = vadd.f32 %v831, %v1137
    %v1139 = vpop.f32.mrb[0].mxu0
    %1140 = vdwg.mxu0
    %v1142 = vsel %vm946, %v769, 0
    %v1145 = vsel %vm946, %v770, 0
    %v1148 = vsel %vm946, %v771, 0
    %v1151 = vsel %vm946, %v772, 0
    %1153 = vmatprep.subr.mxu0 0.0
    %1154 = vmatpush1.msra.mxu0 %v737
    %1155 = vmatprep.subr.mxu0 0.0
    %1156 = vmatpush1.msra.mxu0 %v738
    %1157 = vmatprep.subr.mxu0 0.0
    %1158 = vmatpush1.msra.mxu0 %v739
    %1159 = vmatprep.subr.mxu0 0.0
    %1160 = vmatpush1.msra.mxu0 %v740
    %1161 = vmatprep.subr.mxu0 0.0
    %1162 = vmatpush1.msra.mxu0 0.0
    %1163 = vmatprep.subr.mxu0 0.0
    %1164 = vmatpush1.msra.mxu0 0.0
    %1165 = vmatprep.subr.mxu0 0.0
    %1166 = vmatpush1.msra.mxu0 0.0
    %1167 = vmatprep.subr.mxu0 0.0
    %1168 = vmatpush1.msra.mxu0 0.0
    %1169 = vmatprep.subr.mxu0 0.0
    %1170 = vmatpush1.msra.mxu0 0.0
    %1171 = vmatprep.subr.mxu0 0.0
    %1172 = vmatpush1.msra.mxu0 0.0
    %1173 = vmatprep.subr.mxu0 0.0
    %1174 = vmatpush1.msra.mxu0 0.0
    %1175 = vmatprep.subr.mxu0 0.0
    %1176 = vmatpush1.msra.mxu0 0.0
    %1177 = vmatprep.subr.mxu0 0.0
    %1178 = vmatpush1.msra.mxu0 0.0
    %1179 = vmatprep.subr.mxu0 0.0
    %1180 = vmatpush1.msra.mxu0 0.0
    %1181 = vmatprep.subr.mxu0 0.0
    %1182 = vmatpush1.msra.mxu0 0.0
    %1183 = vmatprep.subr.mxu0 0.0
    %1184 = vmatpush1.msra.mxu0 0.0
    %1185 = vmatprep.subr.mxu0 0.0
    %1186 = vmatpush1.msra.mxu0 0.0
    %1187 = vmatprep.subr.mxu0 0.0
    %1188 = vmatpush1.msra.mxu0 0.0
    %1189 = vmatprep.subr.mxu0 0.0
    %1190 = vmatpush1.msra.mxu0 0.0
    %1191 = vmatprep.subr.mxu0 0.0
    %1192 = vmatpush1.msra.mxu0 0.0
    %1193 = vmatprep.subr.mxu0 0.0
    %1194 = vmatpush1.msra.mxu0 0.0
    %1195 = vmatprep.subr.mxu0 0.0
    %1196 = vmatpush1.msra.mxu0 0.0
    %1197 = vmatprep.subr.mxu0 0.0
    %1198 = vmatpush1.msra.mxu0 0.0
    %1199 = vmatprep.subr.mxu0 0.0
    %1200 = vmatpush1.msra.mxu0 0.0
    %1201 = vmatprep.subr.mxu0 0.0
    %1202 = vmatpush1.msra.mxu0 0.0
    %1203 = vmatprep.subr.mxu0 0.0
    %1204 = vmatpush1.msra.mxu0 0.0
    %1205 = vmatprep.subr.mxu0 0.0
    %1206 = vmatpush1.msra.mxu0 0.0
    %1207 = vmatprep.subr.mxu0 0.0
    %1208 = vmatpush1.msra.mxu0 0.0
    %1209 = vmatprep.subr.mxu0 0.0
    %1210 = vmatpush1.msra.mxu0 0.0
    %1211 = vmatprep.subr.mxu0 0.0
    %1212 = vmatpush1.msra.mxu0 0.0
    %1213 = vmatprep.subr.mxu0 0.0
    %1214 = vmatpush1.msra.mxu0 0.0
    %1215 = vmatprep.subr.mxu0 0.0
    %1216 = vmatpush1.msra.mxu0 0.0
    %1217 = vmatprep.mubr.f32.mxu0 0.0
    %1218 = vmatmul.mubr.f32.gmra.mrb[0].mxu0 %v1142
    %v1219 = vpop.f32.mrb[0].mxu0
    %v1220 = vadd.f32 %v838, %v1219
    %v1221 = vpop.f32.mrb[0].mxu0
    %1222 = vmatprep.mubr.f32.mxu0 0.0
    %1223 = vmatmul.mubr.f32.gmra.mrb[0].mxu0 %v1145
    %v1224 = vpop.f32.mrb[0].mxu0
    %v1225 = vadd.f32 %v842, %v1224
    %v1226 = vpop.f32.mrb[0].mxu0
    %1227 = vmatprep.mubr.f32.mxu0 0.0
    %1228 = vmatmul.mubr.f32.gmra.mrb[0].mxu0 %v1148
    %v1229 = vpop.f32.mrb[0].mxu0
    %v1230 = vadd.f32 %v846, %v1229
    %v1231 = vpop.f32.mrb[0].mxu0
    %1232 = vmatprep.mubr.f32.mxu0 0.0
    %1233 = vmatmul.mubr.f32.gmra.mrb[0].mxu0 %v1151
    %v1234 = vpop.f32.mrb[0].mxu0
    %v1235 = vadd.f32 %v850, %v1234
    %v1236 = vpop.f32.mrb[0].mxu0
    %1237 = vdwg.mxu0
    %v1239 = vsel %vm946, %v773, 0
    %v1242 = vsel %vm946, %v774, 0
    %v1245 = vsel %vm946, %v775, 0
    %v1248 = vsel %vm946, %v776, 0
    %1250 = vmatprep.subr.mxu0 0.0
    %1251 = vmatpush1.msra.mxu0 %v741
    %1252 = vmatprep.subr.mxu0 0.0
    %1253 = vmatpush1.msra.mxu0 %v742
    %1254 = vmatprep.subr.mxu0 0.0
    %1255 = vmatpush1.msra.mxu0 %v743
    %1256 = vmatprep.subr.mxu0 0.0
    %1257 = vmatpush1.msra.mxu0 %v744
    %1258 = vmatprep.subr.mxu0 0.0
    %1259 = vmatpush1.msra.mxu0 0.0
    %1260 = vmatprep.subr.mxu0 0.0
    %1261 = vmatpush1.msra.mxu0 0.0
    %1262 = vmatprep.subr.mxu0 0.0
    %1263 = vmatpush1.msra.mxu0 0.0
    %1264 = vmatprep.subr.mxu0 0.0
    %1265 = vmatpush1.msra.mxu0 0.0
    %1266 = vmatprep.subr.mxu0 0.0
    %1267 = vmatpush1.msra.mxu0 0.0
    %1268 = vmatprep.subr.mxu0 0.0
    %1269 = vmatpush1.msra.mxu0 0.0
    %1270 = vmatprep.subr.mxu0 0.0
    %1271 = vmatpush1.msra.mxu0 0.0
    %1272 = vmatprep.subr.mxu0 0.0
    %1273 = vmatpush1.msra.mxu0 0.0
    %1274 = vmatprep.subr.mxu0 0.0
    %1275 = vmatpush1.msra.mxu0 0.0
    %1276 = vmatprep.subr.mxu0 0.0
    %1277 = vmatpush1.msra.mxu0 0.0
    %1278 = vmatprep.subr.mxu0 0.0
    %1279 = vmatpush1.msra.mxu0 0.0
    %1280 = vmatprep.subr.mxu0 0.0
    %1281 = vmatpush1.msra.mxu0 0.0
    %1282 = vmatprep.subr.mxu0 0.0
    %1283 = vmatpush1.msra.mxu0 0.0
    %1284 = vmatprep.subr.mxu0 0.0
    %1285 = vmatpush1.msra.mxu0 0.0
    %1286 = vmatprep.subr.mxu0 0.0
    %1287 = vmatpush1.msra.mxu0 0.0
    %1288 = vmatprep.subr.mxu0 0.0
    %1289 = vmatpush1.msra.mxu0 0.0
    %1290 = vmatprep.subr.mxu0 0.0
    %1291 = vmatpush1.msra.mxu0 0.0
    %1292 = vmatprep.subr.mxu0 0.0
    %1293 = vmatpush1.msra.mxu0 0.0
    %1294 = vmatprep.subr.mxu0 0.0
    %1295 = vmatpush1.msra.mxu0 0.0
    %1296 = vmatprep.subr.mxu0 0.0
    %1297 = vmatpush1.msra.mxu0 0.0
    %1298 = vmatprep.subr.mxu0 0.0
    %1299 = vmatpush1.msra.mxu0 0.0
    %1300 = vmatprep.subr.mxu0 0.0
    %1301 = vmatpush1.msra.mxu0 0.0
    %1302 = vmatprep.subr.mxu0 0.0
    %1303 = vmatpush1.msra.mxu0 0.0
    %1304 = vmatprep.subr.mxu0 0.0
    %1305 = vmatpush1.msra.mxu0 0.0
    %1306 = vmatprep.subr.mxu0 0.0
    %1307 = vmatpush1.msra.mxu0 0.0
    %1308 = vmatprep.subr.mxu0 0.0
    %1309 = vmatpush1.msra.mxu0 0.0
    %1310 = vmatprep.subr.mxu0 0.0
    %1311 = vmatpush1.msra.mxu0 0.0
    %1312 = vmatprep.subr.mxu0 0.0
    %1313 = vmatpush1.msra.mxu0 0.0
    %1314 = vmatprep.mubr.f32.mxu0 0.0
    %1315 = vmatmul.mubr.f32.gmra.mrb[0].mxu0 %v1239
    %v1316 = vpop.f32.mrb[0].mxu0
    %v1317 = vadd.f32 %v857, %v1316
    %v1318 = vpop.f32.mrb[0].mxu0
    %1319 = vmatprep.mubr.f32.mxu0 0.0
    %1320 = vmatmul.mubr.f32.gmra.mrb[0].mxu0 %v1242
    %v1321 = vpop.f32.mrb[0].mxu0
    %v1322 = vadd.f32 %v861, %v1321
    %v1323 = vpop.f32.mrb[0].mxu0
    %1324 = vmatprep.mubr.f32.mxu0 0.0
    %1325 = vmatmul.mubr.f32.gmra.mrb[0].mxu0 %v1245
    %v1326 = vpop.f32.mrb[0].mxu0
    %v1327 = vadd.f32 %v865, %v1326
    %v1328 = vpop.f32.mrb[0].mxu0
    %1329 = vmatprep.mubr.f32.mxu0 0.0
    %1330 = vmatmul.mubr.f32.gmra.mrb[0].mxu0 %v1248
    %v1331 = vpop.f32.mrb[0].mxu0
    %v1332 = vadd.f32 %v869, %v1331
    %v1333 = vpop.f32.mrb[0].mxu0
    %1334 = vdwg.mxu0
    %v1336 = vsel %vm946, %v777, 0
    %v1339 = vsel %vm946, %v778, 0
    %v1342 = vsel %vm946, %v779, 0
    %v1345 = vsel %vm946, %v780, 0
    %1347 = vmatprep.subr.mxu0 0.0
    %1348 = vmatpush1.msra.mxu0 %v745
    %1349 = vmatprep.subr.mxu0 0.0
    %1350 = vmatpush1.msra.mxu0 %v746
    %1351 = vmatprep.subr.mxu0 0.0
    %1352 = vmatpush1.msra.mxu0 %v747
    %1353 = vmatprep.subr.mxu0 0.0
    %1354 = vmatpush1.msra.mxu0 %v748
    %1355 = vmatprep.subr.mxu0 0.0
    %1356 = vmatpush1.msra.mxu0 0.0
    %1357 = vmatprep.subr.mxu0 0.0
    %1358 = vmatpush1.msra.mxu0 0.0
    %1359 = vmatprep.subr.mxu0 0.0
    %1360 = vmatpush1.msra.mxu0 0.0
    %1361 = vmatprep.subr.mxu0 0.0
    %1362 = vmatpush1.msra.mxu0 0.0
    %1363 = vmatprep.subr.mxu0 0.0
    %1364 = vmatpush1.msra.mxu0 0.0
    %1365 = vmatprep.subr.mxu0 0.0
    %1366 = vmatpush1.msra.mxu0 0.0
    %1367 = vmatprep.subr.mxu0 0.0
    %1368 = vmatpush1.msra.mxu0 0.0
    %1369 = vmatprep.subr.mxu0 0.0
    %1370 = vmatpush1.msra.mxu0 0.0
    %1371 = vmatprep.subr.mxu0 0.0
    %1372 = vmatpush1.msra.mxu0 0.0
    %1373 = vmatprep.subr.mxu0 0.0
    %1374 = vmatpush1.msra.mxu0 0.0
    %1375 = vmatprep.subr.mxu0 0.0
    %1376 = vmatpush1.msra.mxu0 0.0
    %1377 = vmatprep.subr.mxu0 0.0
    %1378 = vmatpush1.msra.mxu0 0.0
    %1379 = vmatprep.subr.mxu0 0.0
    %1380 = vmatpush1.msra.mxu0 0.0
    %1381 = vmatprep.subr.mxu0 0.0
    %1382 = vmatpush1.msra.mxu0 0.0
    %1383 = vmatprep.subr.mxu0 0.0
    %1384 = vmatpush1.msra.mxu0 0.0
    %1385 = vmatprep.subr.mxu0 0.0
    %1386 = vmatpush1.msra.mxu0 0.0
    %1387 = vmatprep.subr.mxu0 0.0
    %1388 = vmatpush1.msra.mxu0 0.0
    %1389 = vmatprep.subr.mxu0 0.0
    %1390 = vmatpush1.msra.mxu0 0.0
    %1391 = vmatprep.subr.mxu0 0.0
    %1392 = vmatpush1.msra.mxu0 0.0
    %1393 = vmatprep.subr.mxu0 0.0
    %1394 = vmatpush1.msra.mxu0 0.0
    %1395 = vmatprep.subr.mxu0 0.0
    %1396 = vmatpush1.msra.mxu0 0.0
    %1397 = vmatprep.subr.mxu0 0.0
    %1398 = vmatpush1.msra.mxu0 0.0
    %1399 = vmatprep.subr.mxu0 0.0
    %1400 = vmatpush1.msra.mxu0 0.0
    %1401 = vmatprep.subr.mxu0 0.0
    %1402 = vmatpush1.msra.mxu0 0.0
    %1403 = vmatprep.subr.mxu0 0.0
    %1404 = vmatpush1.msra.mxu0 0.0
    %1405 = vmatprep.subr.mxu0 0.0
    %1406 = vmatpush1.msra.mxu0 0.0
    %1407 = vmatprep.subr.mxu0 0.0
    %1408 = vmatpush1.msra.mxu0 0.0
    %1409 = vmatprep.subr.mxu0 0.0
    %1410 = vmatpush1.msra.mxu0 0.0
    %1411 = vmatprep.mubr.f32.mxu0 0.0
    %1412 = vmatmul.mubr.f32.gmra.mrb[0].mxu0 %v1336
    %v1413 = vpop.f32.mrb[0].mxu0
    %v1414 = vadd.f32 %v876, %v1413
    %v1415 = vpop.f32.mrb[0].mxu0
    %1416 = vmatprep.mubr.f32.mxu0 0.0
    %1417 = vmatmul.mubr.f32.gmra.mrb[0].mxu0 %v1339
    %v1418 = vpop.f32.mrb[0].mxu0
    %v1419 = vadd.f32 %v880, %v1418
    %v1420 = vpop.f32.mrb[0].mxu0
    %1421 = vmatprep.mubr.f32.mxu0 0.0
    %1422 = vmatmul.mubr.f32.gmra.mrb[0].mxu0 %v1342
    %v1423 = vpop.f32.mrb[0].mxu0
    %v1424 = vadd.f32 %v884, %v1423
    %v1425 = vpop.f32.mrb[0].mxu0
    %1426 = vmatprep.mubr.f32.mxu0 0.0
    %1427 = vmatmul.mubr.f32.gmra.mrb[0].mxu0 %v1345
    %v1428 = vpop.f32.mrb[0].mxu0
    %v1429 = vadd.f32 %v888, %v1428
    %v1430 = vpop.f32.mrb[0].mxu0
    %1431 = vdwg.mxu0
    %v1433 = vsel %vm946, %v781, 0
    %v1436 = vsel %vm946, %v782, 0
    %v1439 = vsel %vm946, %v783, 0
    %v1442 = vsel %vm946, %v784, 0
    %1444 = vmatprep.subr.mxu0 0.0
    %1445 = vmatpush1.msra.mxu0 %v749
    %1446 = vmatprep.subr.mxu0 0.0
    %1447 = vmatpush1.msra.mxu0 %v750
    %1448 = vmatprep.subr.mxu0 0.0
    %1449 = vmatpush1.msra.mxu0 %v751
    %1450 = vmatprep.subr.mxu0 0.0
    %1451 = vmatpush1.msra.mxu0 %v752
    %1452 = vmatprep.subr.mxu0 0.0
    %1453 = vmatpush1.msra.mxu0 0.0
    %1454 = vmatprep.subr.mxu0 0.0
    %1455 = vmatpush1.msra.mxu0 0.0
    %1456 = vmatprep.subr.mxu0 0.0
    %1457 = vmatpush1.msra.mxu0 0.0
    %1458 = vmatprep.subr.mxu0 0.0
    %1459 = vmatpush1.msra.mxu0 0.0
    %1460 = vmatprep.subr.mxu0 0.0
    %1461 = vmatpush1.msra.mxu0 0.0
    %1462 = vmatprep.subr.mxu0 0.0
    %1463 = vmatpush1.msra.mxu0 0.0
    %1464 = vmatprep.subr.mxu0 0.0
    %1465 = vmatpush1.msra.mxu0 0.0
    %1466 = vmatprep.subr.mxu0 0.0
    %1467 = vmatpush1.msra.mxu0 0.0
    %1468 = vmatprep.subr.mxu0 0.0
    %1469 = vmatpush1.msra.mxu0 0.0
    %1470 = vmatprep.subr.mxu0 0.0
    %1471 = vmatpush1.msra.mxu0 0.0
    %1472 = vmatprep.subr.mxu0 0.0
    %1473 = vmatpush1.msra.mxu0 0.0
    %1474 = vmatprep.subr.mxu0 0.0
    %1475 = vmatpush1.msra.mxu0 0.0
    %1476 = vmatprep.subr.mxu0 0.0
    %1477 = vmatpush1.msra.mxu0 0.0
    %1478 = vmatprep.subr.mxu0 0.0
    %1479 = vmatpush1.msra.mxu0 0.0
    %1480 = vmatprep.subr.mxu0 0.0
    %1481 = vmatpush1.msra.mxu0 0.0
    %1482 = vmatprep.subr.mxu0 0.0
    %1483 = vmatpush1.msra.mxu0 0.0
    %1484 = vmatprep.subr.mxu0 0.0
    %1485 = vmatpush1.msra.mxu0 0.0
    %1486 = vmatprep.subr.mxu0 0.0
    %1487 = vmatpush1.msra.mxu0 0.0
    %1488 = vmatprep.subr.mxu0 0.0
    %1489 = vmatpush1.msra.mxu0 0.0
    %1490 = vmatprep.subr.mxu0 0.0
    %1491 = vmatpush1.msra.mxu0 0.0
    %1492 = vmatprep.subr.mxu0 0.0
    %1493 = vmatpush1.msra.mxu0 0.0
    %1494 = vmatprep.subr.mxu0 0.0
    %1495 = vmatpush1.msra.mxu0 0.0
    %1496 = vmatprep.subr.mxu0 0.0
    %1497 = vmatpush1.msra.mxu0 0.0
    %1498 = vmatprep.subr.mxu0 0.0
    %1499 = vmatpush1.msra.mxu0 0.0
    %1500 = vmatprep.subr.mxu0 0.0
    %1501 = vmatpush1.msra.mxu0 0.0
    %1502 = vmatprep.subr.mxu0 0.0
    %1503 = vmatpush1.msra.mxu0 0.0
    %1504 = vmatprep.subr.mxu0 0.0
    %1505 = vmatpush1.msra.mxu0 0.0
    %1506 = vmatprep.subr.mxu0 0.0
    %1507 = vmatpush1.msra.mxu0 0.0
    %1508 = vmatprep.mubr.f32.mxu0 0.0
    %1509 = vmatmul.mubr.f32.gmra.mrb[0].mxu0 %v1433
    %v1510 = vpop.f32.mrb[0].mxu0
    %v1511 = vadd.f32 %v895, %v1510
    %v1512 = vpop.f32.mrb[0].mxu0
    %1513 = vmatprep.mubr.f32.mxu0 0.0
    %1514 = vmatmul.mubr.f32.gmra.mrb[0].mxu0 %v1436
    %v1515 = vpop.f32.mrb[0].mxu0
    %v1516 = vadd.f32 %v899, %v1515
    %v1517 = vpop.f32.mrb[0].mxu0
    %1518 = vmatprep.mubr.f32.mxu0 0.0
    %1519 = vmatmul.mubr.f32.gmra.mrb[0].mxu0 %v1439
    %v1520 = vpop.f32.mrb[0].mxu0
    %v1521 = vadd.f32 %v903, %v1520
    %v1522 = vpop.f32.mrb[0].mxu0
    %1523 = vmatprep.mubr.f32.mxu0 0.0
    %1524 = vmatmul.mubr.f32.gmra.mrb[0].mxu0 %v1442
    %v1525 = vpop.f32.mrb[0].mxu0
    %v1526 = vadd.f32 %v907, %v1525
    %v1527 = vpop.f32.mrb[0].mxu0
    %1528 = vdwg.mxu0
    %v1530 = vsel %vm946, %v785, 0
    %v1533 = vsel %vm946, %v786, 0
    %v1536 = vsel %vm946, %v787, 0
    %v1539 = vsel %vm946, %v788, 0
    %1541 = vmatprep.subr.mxu0 0.0
    %1542 = vmatpush1.msra.mxu0 %v753
    %1543 = vmatprep.subr.mxu0 0.0
    %1544 = vmatpush1.msra.mxu0 %v754
    %1545 = vmatprep.subr.mxu0 0.0
    %1546 = vmatpush1.msra.mxu0 %v755
    %1547 = vmatprep.subr.mxu0 0.0
    %1548 = vmatpush1.msra.mxu0 %v756
    %1549 = vmatprep.subr.mxu0 0.0
    %1550 = vmatpush1.msra.mxu0 0.0
    %1551 = vmatprep.subr.mxu0 0.0
    %1552 = vmatpush1.msra.mxu0 0.0
    %1553 = vmatprep.subr.mxu0 0.0
    %1554 = vmatpush1.msra.mxu0 0.0
    %1555 = vmatprep.subr.mxu0 0.0
    %1556 = vmatpush1.msra.mxu0 0.0
    %1557 = vmatprep.subr.mxu0 0.0
    %1558 = vmatpush1.msra.mxu0 0.0
    %1559 = vmatprep.subr.mxu0 0.0
    %1560 = vmatpush1.msra.mxu0 0.0
    %1561 = vmatprep.subr.mxu0 0.0
    %1562 = vmatpush1.msra.mxu0 0.0
    %1563 = vmatprep.subr.mxu0 0.0
    %1564 = vmatpush1.msra.mxu0 0.0
    %1565 = vmatprep.subr.mxu0 0.0
    %1566 = vmatpush1.msra.mxu0 0.0
    %1567 = vmatprep.subr.mxu0 0.0
    %1568 = vmatpush1.msra.mxu0 0.0
    %1569 = vmatprep.subr.mxu0 0.0
    %1570 = vmatpush1.msra.mxu0 0.0
    %1571 = vmatprep.subr.mxu0 0.0
    %1572 = vmatpush1.msra.mxu0 0.0
    %1573 = vmatprep.subr.mxu0 0.0
    %1574 = vmatpush1.msra.mxu0 0.0
    %1575 = vmatprep.subr.mxu0 0.0
    %1576 = vmatpush1.msra.mxu0 0.0
    %1577 = vmatprep.subr.mxu0 0.0
    %1578 = vmatpush1.msra.mxu0 0.0
    %1579 = vmatprep.subr.mxu0 0.0
    %1580 = vmatpush1.msra.mxu0 0.0
    %1581 = vmatprep.subr.mxu0 0.0
    %1582 = vmatpush1.msra.mxu0 0.0
    %1583 = vmatprep.subr.mxu0 0.0
    %1584 = vmatpush1.msra.mxu0 0.0
    %1585 = vmatprep.subr.mxu0 0.0
    %1586 = vmatpush1.msra.mxu0 0.0
    %1587 = vmatprep.subr.mxu0 0.0
    %1588 = vmatpush1.msra.mxu0 0.0
    %1589 = vmatprep.subr.mxu0 0.0
    %1590 = vmatpush1.msra.mxu0 0.0
    %1591 = vmatprep.subr.mxu0 0.0
    %1592 = vmatpush1.msra.mxu0 0.0
    %1593 = vmatprep.subr.mxu0 0.0
    %1594 = vmatpush1.msra.mxu0 0.0
    %1595 = vmatprep.subr.mxu0 0.0
    %1596 = vmatpush1.msra.mxu0 0.0
    %1597 = vmatprep.subr.mxu0 0.0
    %1598 = vmatpush1.msra.mxu0 0.0
    %1599 = vmatprep.subr.mxu0 0.0
    %1600 = vmatpush1.msra.mxu0 0.0
    %1601 = vmatprep.subr.mxu0 0.0
    %1602 = vmatpush1.msra.mxu0 0.0
    %1603 = vmatprep.subr.mxu0 0.0
    %1604 = vmatpush1.msra.mxu0 0.0
    %1605 = vmatprep.mubr.f32.mxu0 0.0
    %1606 = vmatmul.mubr.f32.gmra.mrb[0].mxu0 %v1530
    %v1607 = vpop.f32.mrb[0].mxu0
    %v1608 = vadd.f32 %v914, %v1607
    %v1609 = vpop.f32.mrb[0].mxu0
    %1610 = vmatprep.mubr.f32.mxu0 0.0
    %1611 = vmatmul.mubr.f32.gmra.mrb[0].mxu0 %v1533
    %v1612 = vpop.f32.mrb[0].mxu0
    %v1613 = vadd.f32 %v918, %v1612
    %v1614 = vpop.f32.mrb[0].mxu0
    %1615 = vmatprep.mubr.f32.mxu0 0.0
    %1616 = vmatmul.mubr.f32.gmra.mrb[0].mxu0 %v1536
    %v1617 = vpop.f32.mrb[0].mxu0
    %v1618 = vadd.f32 %v922, %v1617
    %v1619 = vpop.f32.mrb[0].mxu0
    %1620 = vmatprep.mubr.f32.mxu0 0.0
    %1621 = vmatmul.mubr.f32.gmra.mrb[0].mxu0 %v1539
    %v1622 = vpop.f32.mrb[0].mxu0
    %v1623 = vadd.f32 %v926, %v1622
    %v1624 = vpop.f32.mrb[0].mxu0
    %1625 = vdwg.mxu0
    %v1627 = vsel %vm946, %v789, 0
    %v1630 = vsel %vm946, %v790, 0
    %v1633 = vsel %vm946, %v791, 0
    %v1636 = vsel %vm946, %v792, 0
    %1638 = vmatprep.subr.mxu0 0.0
    %1639 = vmatpush1.msra.mxu0 %v757
    %1640 = vmatprep.subr.mxu0 0.0
    %1641 = vmatpush1.msra.mxu0 %v758
    %1642 = vmatprep.subr.mxu0 0.0
    %1643 = vmatpush1.msra.mxu0 %v759
    %1644 = vmatprep.subr.mxu0 0.0
    %1645 = vmatpush1.msra.mxu0 %v760
    %1646 = vmatprep.subr.mxu0 0.0
    %1647 = vmatpush1.msra.mxu0 0.0
    %1648 = vmatprep.subr.mxu0 0.0
    %1649 = vmatpush1.msra.mxu0 0.0
    %1650 = vmatprep.subr.mxu0 0.0
    %1651 = vmatpush1.msra.mxu0 0.0
    %1652 = vmatprep.subr.mxu0 0.0
    %1653 = vmatpush1.msra.mxu0 0.0
    %1654 = vmatprep.subr.mxu0 0.0
    %1655 = vmatpush1.msra.mxu0 0.0
    %1656 = vmatprep.subr.mxu0 0.0
    %1657 = vmatpush1.msra.mxu0 0.0
    %1658 = vmatprep.subr.mxu0 0.0
    %1659 = vmatpush1.msra.mxu0 0.0
    %1660 = vmatprep.subr.mxu0 0.0
    %1661 = vmatpush1.msra.mxu0 0.0
    %1662 = vmatprep.subr.mxu0 0.0
    %1663 = vmatpush1.msra.mxu0 0.0
    %1664 = vmatprep.subr.mxu0 0.0
    %1665 = vmatpush1.msra.mxu0 0.0
    %1666 = vmatprep.subr.mxu0 0.0
    %1667 = vmatpush1.msra.mxu0 0.0
    %1668 = vmatprep.subr.mxu0 0.0
    %1669 = vmatpush1.msra.mxu0 0.0
    %1670 = vmatprep.subr.mxu0 0.0
    %1671 = vmatpush1.msra.mxu0 0.0
    %1672 = vmatprep.subr.mxu0 0.0
    %1673 = vmatpush1.msra.mxu0 0.0
    %1674 = vmatprep.subr.mxu0 0.0
    %1675 = vmatpush1.msra.mxu0 0.0
    %1676 = vmatprep.subr.mxu0 0.0
    %1677 = vmatpush1.msra.mxu0 0.0
    %1678 = vmatprep.subr.mxu0 0.0
    %1679 = vmatpush1.msra.mxu0 0.0
    %1680 = vmatprep.subr.mxu0 0.0
    %1681 = vmatpush1.msra.mxu0 0.0
    %1682 = vmatprep.subr.mxu0 0.0
    %1683 = vmatpush1.msra.mxu0 0.0
    %1684 = vmatprep.subr.mxu0 0.0
    %1685 = vmatpush1.msra.mxu0 0.0
    %1686 = vmatprep.subr.mxu0 0.0
    %1687 = vmatpush1.msra.mxu0 0.0
    %1688 = vmatprep.subr.mxu0 0.0
    %1689 = vmatpush1.msra.mxu0 0.0
    %1690 = vmatprep.subr.mxu0 0.0
    %1691 = vmatpush1.msra.mxu0 0.0
    %1692 = vmatprep.subr.mxu0 0.0
    %1693 = vmatpush1.msra.mxu0 0.0
    %1694 = vmatprep.subr.mxu0 0.0
    %1695 = vmatpush1.msra.mxu0 0.0
    %1696 = vmatprep.subr.mxu0 0.0
    %1697 = vmatpush1.msra.mxu0 0.0
    %1698 = vmatprep.subr.mxu0 0.0
    %1699 = vmatpush1.msra.mxu0 0.0
    %1700 = vmatprep.subr.mxu0 0.0
    %1701 = vmatpush1.msra.mxu0 0.0
    %1702 = vmatprep.mubr.f32.mxu0 0.0
    %1703 = vmatmul.mubr.f32.gmra.mrb[0].mxu0 %v1627
    %v1704 = vpop.f32.mrb[0].mxu0
    %v1705 = vadd.f32 %v933, %v1704
    %v1706 = vpop.f32.mrb[0].mxu0
    %1707 = vmatprep.mubr.f32.mxu0 0.0
    %1708 = vmatmul.mubr.f32.gmra.mrb[0].mxu0 %v1630
    %v1709 = vpop.f32.mrb[0].mxu0
    %v1710 = vadd.f32 %v937, %v1709
    %v1711 = vpop.f32.mrb[0].mxu0
    %1712 = vmatprep.mubr.f32.mxu0 0.0
    %1713 = vmatmul.mubr.f32.gmra.mrb[0].mxu0 %v1633
    %v1714 = vpop.f32.mrb[0].mxu0
    %v1715 = vadd.f32 %v941, %v1714
    %v1716 = vpop.f32.mrb[0].mxu0
    %1717 = vmatprep.mubr.f32.mxu0 0.0
    %1718 = vmatmul.mubr.f32.gmra.mrb[0].mxu0 %v1636
    %v1719 = vpop.f32.mrb[0].mxu0
    %v1720 = vadd.f32 %v945, %v1719
    %v1721 = vpop.f32.mrb[0].mxu0
    %1722 = vdwg.mxu0
    %v1723 = vmin.f32 %v1026, 0.0
    %v1724 = vmin.f32 %v1031, 0.0
    %v1725 = vmin.f32 %v1036, 0.0
    %v1726 = vmin.f32 %v1041, 0.0
    %v1727 = vmin.f32 %v1123, 0.0
    %v1728 = vmin.f32 %v1128, 0.0
    %v1729 = vmin.f32 %v1133, 0.0
    %v1730 = vmin.f32 %v1138, 0.0
    %v1731 = vmin.f32 %v1220, 0.0
    %v1732 = vmin.f32 %v1225, 0.0
    %v1733 = vmin.f32 %v1230, 0.0
    %v1734 = vmin.f32 %v1235, 0.0
    %v1735 = vmin.f32 %v1317, 0.0
    %v1736 = vmin.f32 %v1322, 0.0
    %v1737 = vmin.f32 %v1327, 0.0
    %v1738 = vmin.f32 %v1332, 0.0
    %v1739 = vmin.f32 %v1414, 0.0
    %v1740 = vmin.f32 %v1419, 0.0
    %v1741 = vmin.f32 %v1424, 0.0
    %v1742 = vmin.f32 %v1429, 0.0
    %v1743 = vmin.f32 %v1511, 0.0
    %v1744 = vmin.f32 %v1516, 0.0
    %v1745 = vmin.f32 %v1521, 0.0
    %v1746 = vmin.f32 %v1526, 0.0
    %v1747 = vmin.f32 %v1608, 0.0
    %v1748 = vmin.f32 %v1613, 0.0
    %v1749 = vmin.f32 %v1618, 0.0
    %v1750 = vmin.f32 %v1623, 0.0
    %v1751 = vmin.f32 %v1705, 0.0
    %v1752 = vmin.f32 %v1710, 0.0
    %v1753 = vmin.f32 %v1715, 0.0
    %v1754 = vmin.f32 %v1720, 0.0
    %v1755 = vmul.f32 %v1723, 1.442695
    %v1756 = vpow.pop %v1755
    %v1757 = vmul.f32 %v1724, 1.442695
    %v1758 = vpow.pop %v1757
    %v1759 = vmul.f32 %v1725, 1.442695
    %v1760 = vpow.pop %v1759
    %v1761 = vmul.f32 %v1726, 1.442695
    %v1762 = vpow.pop %v1761
    %v1763 = vmul.f32 %v1727, 1.442695
    %v1764 = vpow.pop %v1763
    %v1765 = vmul.f32 %v1728, 1.442695
    %v1766 = vpow.pop %v1765
    %v1767 = vmul.f32 %v1729, 1.442695
    %v1768 = vpow.pop %v1767
    %v1769 = vmul.f32 %v1730, 1.442695
    %v1770 = vpow.pop %v1769
    %v1771 = vmul.f32 %v1731, 1.442695
    %v1772 = vpow.pop %v1771
    %v1773 = vmul.f32 %v1732, 1.442695
    %v1774 = vpow.pop %v1773
    %v1775 = vmul.f32 %v1733, 1.442695
    %v1776 = vpow.pop %v1775
    %v1777 = vmul.f32 %v1734, 1.442695
    %v1778 = vpow.pop %v1777
    %v1779 = vmul.f32 %v1735, 1.442695
    %v1780 = vpow.pop %v1779
    %v1781 = vmul.f32 %v1736, 1.442695
    %v1782 = vpow.pop %v1781
    %v1783 = vmul.f32 %v1737, 1.442695
    %v1784 = vpow.pop %v1783
    %v1785 = vmul.f32 %v1738, 1.442695
    %v1786 = vpow.pop %v1785
    %v1787 = vmul.f32 %v1739, 1.442695
    %v1788 = vpow.pop %v1787
    %v1789 = vmul.f32 %v1740, 1.442695
    %v1790 = vpow.pop %v1789
    %v1791 = vmul.f32 %v1741, 1.442695
    %v1792 = vpow.pop %v1791
    %v1793 = vmul.f32 %v1742, 1.442695
    %v1794 = vpow.pop %v1793
    %v1795 = vmul.f32 %v1743, 1.442695
    %v1796 = vpow.pop %v1795
    %v1797 = vmul.f32 %v1744, 1.442695
    %v1798 = vpow.pop %v1797
    %v1799 = vmul.f32 %v1745, 1.442695
    %v1800 = vpow.pop %v1799
    %v1801 = vmul.f32 %v1746, 1.442695
    %v1802 = vpow.pop %v1801
    %v1803 = vmul.f32 %v1747, 1.442695
    %v1804 = vpow.pop %v1803
    %v1805 = vmul.f32 %v1748, 1.442695
    %v1806 = vpow.pop %v1805
    %v1807 = vmul.f32 %v1749, 1.442695
    %v1808 = vpow.pop %v1807
    %v1809 = vmul.f32 %v1750, 1.442695
    %v1810 = vpow.pop %v1809
    %v1811 = vmul.f32 %v1751, 1.442695
    %v1812 = vpow.pop %v1811
    %v1813 = vmul.f32 %v1752, 1.442695
    %v1814 = vpow.pop %v1813
    %v1815 = vmul.f32 %v1753, 1.442695
    %v1816 = vpow.pop %v1815
    %v1817 = vmul.f32 %v1754, 1.442695
    %v1818 = vpow.pop %v1817
    %v1819 = vsub.f32 %v1756, 1.0
    %v1820 = vsub.f32 %v1758, 1.0
    %v1821 = vsub.f32 %v1760, 1.0
    %v1822 = vsub.f32 %v1762, 1.0
    %v1823 = vsub.f32 %v1764, 1.0
    %v1824 = vsub.f32 %v1766, 1.0
    %v1825 = vsub.f32 %v1768, 1.0
    %v1826 = vsub.f32 %v1770, 1.0
    %v1827 = vsub.f32 %v1772, 1.0
    %v1828 = vsub.f32 %v1774, 1.0
    %v1829 = vsub.f32 %v1776, 1.0
    %v1830 = vsub.f32 %v1778, 1.0
    %v1831 = vsub.f32 %v1780, 1.0
    %v1832 = vsub.f32 %v1782, 1.0
    %v1833 = vsub.f32 %v1784, 1.0
    %v1834 = vsub.f32 %v1786, 1.0
    %v1835 = vsub.f32 %v1788, 1.0
    %v1836 = vsub.f32 %v1790, 1.0
    %v1837 = vsub.f32 %v1792, 1.0
    %v1838 = vsub.f32 %v1794, 1.0
    %v1839 = vsub.f32 %v1796, 1.0
    %v1840 = vsub.f32 %v1798, 1.0
    %v1841 = vsub.f32 %v1800, 1.0
    %v1842 = vsub.f32 %v1802, 1.0
    %v1843 = vsub.f32 %v1804, 1.0
    %v1844 = vsub.f32 %v1806, 1.0
    %v1845 = vsub.f32 %v1808, 1.0
    %v1846 = vsub.f32 %v1810, 1.0
    %v1847 = vsub.f32 %v1812, 1.0
    %v1848 = vsub.f32 %v1814, 1.0
    %v1849 = vsub.f32 %v1816, 1.0
    %v1850 = vsub.f32 %v1818, 1.0
    %v1851 = vmax.f32 %v1026, 0.0
    %v1852 = vmax.f32 %v1031, 0.0
    %v1853 = vmax.f32 %v1036, 0.0
    %v1854 = vmax.f32 %v1041, 0.0
    %v1855 = vmax.f32 %v1123, 0.0
    %v1856 = vmax.f32 %v1128, 0.0
    %v1857 = vmax.f32 %v1133, 0.0
    %v1858 = vmax.f32 %v1138, 0.0
    %v1859 = vmax.f32 %v1220, 0.0
    %v1860 = vmax.f32 %v1225, 0.0
    %v1861 = vmax.f32 %v1230, 0.0
    %v1862 = vmax.f32 %v1235, 0.0
    %v1863 = vmax.f32 %v1317, 0.0
    %v1864 = vmax.f32 %v1322, 0.0
    %v1865 = vmax.f32 %v1327, 0.0
    %v1866 = vmax.f32 %v1332, 0.0
    %v1867 = vmax.f32 %v1414, 0.0
    %v1868 = vmax.f32 %v1419, 0.0
    %v1869 = vmax.f32 %v1424, 0.0
    %v1870 = vmax.f32 %v1429, 0.0
    %v1871 = vmax.f32 %v1511, 0.0
    %v1872 = vmax.f32 %v1516, 0.0
    %v1873 = vmax.f32 %v1521, 0.0
    %v1874 = vmax.f32 %v1526, 0.0
    %v1875 = vmax.f32 %v1608, 0.0
    %v1876 = vmax.f32 %v1613, 0.0
    %v1877 = vmax.f32 %v1618, 0.0
    %v1878 = vmax.f32 %v1623, 0.0
    %v1879 = vmax.f32 %v1705, 0.0
    %v1880 = vmax.f32 %v1710, 0.0
    %v1881 = vmax.f32 %v1715, 0.0
    %v1882 = vmax.f32 %v1720, 0.0
    %v1883 = vmin.f32 %v1819, 0.0
    %v1884 = vmin.f32 %v1820, 0.0
    %v1885 = vmin.f32 %v1821, 0.0
    %v1886 = vmin.f32 %v1822, 0.0
    %v1887 = vmin.f32 %v1823, 0.0
    %v1888 = vmin.f32 %v1824, 0.0
    %v1889 = vmin.f32 %v1825, 0.0
    %v1890 = vmin.f32 %v1826, 0.0
    %v1891 = vmin.f32 %v1827, 0.0
    %v1892 = vmin.f32 %v1828, 0.0
    %v1893 = vmin.f32 %v1829, 0.0
    %v1894 = vmin.f32 %v1830, 0.0
    %v1895 = vmin.f32 %v1831, 0.0
    %v1896 = vmin.f32 %v1832, 0.0
    %v1897 = vmin.f32 %v1833, 0.0
    %v1898 = vmin.f32 %v1834, 0.0
    %v1899 = vmin.f32 %v1835, 0.0
    %v1900 = vmin.f32 %v1836, 0.0
    %v1901 = vmin.f32 %v1837, 0.0
    %v1902 = vmin.f32 %v1838, 0.0
    %v1903 = vmin.f32 %v1839, 0.0
    %v1904 = vmin.f32 %v1840, 0.0
    %v1905 = vmin.f32 %v1841, 0.0
    %v1906 = vmin.f32 %v1842, 0.0
    %v1907 = vmin.f32 %v1843, 0.0
    %v1908 = vmin.f32 %v1844, 0.0
    %v1909 = vmin.f32 %v1845, 0.0
    %v1910 = vmin.f32 %v1846, 0.0
    %v1911 = vmin.f32 %v1847, 0.0
    %v1912 = vmin.f32 %v1848, 0.0
    %v1913 = vmin.f32 %v1849, 0.0
    %v1914 = vmin.f32 %v1850, 0.0
    %v1915 = vadd.f32 %v1851, %v1883
    %v1916 = vadd.f32 %v1852, %v1884
    %v1917 = vadd.f32 %v1853, %v1885
    %v1918 = vadd.f32 %v1854, %v1886
    %v1919 = vadd.f32 %v1855, %v1887
    %v1920 = vadd.f32 %v1856, %v1888
    %v1921 = vadd.f32 %v1857, %v1889
    %v1922 = vadd.f32 %v1858, %v1890
    %v1923 = vadd.f32 %v1859, %v1891
    %v1924 = vadd.f32 %v1860, %v1892
    %v1925 = vadd.f32 %v1861, %v1893
    %v1926 = vadd.f32 %v1862, %v1894
    %v1927 = vadd.f32 %v1863, %v1895
    %v1928 = vadd.f32 %v1864, %v1896
    %v1929 = vadd.f32 %v1865, %v1897
    %v1930 = vadd.f32 %v1866, %v1898
    %v1931 = vadd.f32 %v1867, %v1899
    %v1932 = vadd.f32 %v1868, %v1900
    %v1933 = vadd.f32 %v1869, %v1901
    %v1934 = vadd.f32 %v1870, %v1902
    %v1935 = vadd.f32 %v1871, %v1903
    %v1936 = vadd.f32 %v1872, %v1904
    %v1937 = vadd.f32 %v1873, %v1905
    %v1938 = vadd.f32 %v1874, %v1906
    %v1939 = vadd.f32 %v1875, %v1907
    %v1940 = vadd.f32 %v1876, %v1908
    %v1941 = vadd.f32 %v1877, %v1909
    %v1942 = vadd.f32 %v1878, %v1910
    %v1943 = vadd.f32 %v1879, %v1911
    %v1944 = vadd.f32 %v1880, %v1912
    %v1945 = vadd.f32 %v1881, %v1913
    %v1946 = vadd.f32 %v1882, %v1914
    %s1947 = scalar_lea.vmem [#allocation7], 256
    %v1948 = vld [vmem:[%s1947] sm:$0xff]
    %v1949 = vld [vmem:[%s1947 + $0x8] sm:$0xff]
    %v1950 = vld [vmem:[%s1947 + $0x10] sm:$0xff]
    %v1951 = vld [vmem:[%s1947 + $0x18] sm:$0xff]
    %v1952 = vld [vmem:[%s1947 + $0x20] sm:$0xff]
    %v1953 = vld [vmem:[%s1947 + $0x28] sm:$0xff]
    %v1954 = vld [vmem:[%s1947 + $0x30] sm:$0xff]
    %v1955 = vld [vmem:[%s1947 + $0x38] sm:$0xff]
    %v1956 = vld [vmem:[%s1947 + $0x40] sm:$0xff]
    %v1957 = vld [vmem:[%s1947 + $0x48] sm:$0xff]
    %v1958 = vld [vmem:[%s1947 + $0x50] sm:$0xff]
    %v1959 = vld [vmem:[%s1947 + $0x58] sm:$0xff]
    %v1960 = vld [vmem:[%s1947 + $0x60] sm:$0xff]
    %v1961 = vld [vmem:[%s1947 + $0x68] sm:$0xff]
    %v1962 = vld [vmem:[%s1947 + $0x70] sm:$0xff]
    %v1963 = vld [vmem:[%s1947 + $0x78] sm:$0xff]
    %v1964 = vld [vmem:[%s1947 + $0x80] sm:$0xff]
    %v1965 = vld [vmem:[%s1947 + $0x88] sm:$0xff]
    %v1966 = vld [vmem:[%s1947 + $0x90] sm:$0xff]
    %v1967 = vld [vmem:[%s1947 + $0x98] sm:$0xff]
    %v1968 = vld [vmem:[%s1947 + $0xa0] sm:$0xff]
    %v1969 = vld [vmem:[%s1947 + $0xa8] sm:$0xff]
    %v1970 = vld [vmem:[%s1947 + $0xb0] sm:$0xff]
    %v1971 = vld [vmem:[%s1947 + $0xb8] sm:$0xff]
    %v1972 = vld [vmem:[%s1947 + $0xc0] sm:$0xff]
    %v1973 = vld [vmem:[%s1947 + $0xc8] sm:$0xff]
    %v1974 = vld [vmem:[%s1947 + $0xd0] sm:$0xff]
    %v1975 = vld [vmem:[%s1947 + $0xd8] sm:$0xff]
    %v1976 = vld [vmem:[%s1947 + $0xe0] sm:$0xff]
    %v1977 = vld [vmem:[%s1947 + $0xe8] sm:$0xff]
    %v1978 = vld [vmem:[%s1947 + $0xf0] sm:$0xff]
    %v1979 = vld [vmem:[%s1947 + $0xf8] sm:$0xff]
    %s1980 = scalar_lea.vmem %s4, 8
    %v1981 = vld [vmem:[%s1980] sm:$0xff]
    %v1982 = vlaneseq
    %v1983 = vshrl.u32 %v1982, 7
    %v1984 = vsub.s32 0, %v1983
    %v1985 = vrot.slane %v1981, %v1984
    %1987 = vbcast.lane.b32.xlu0 %v1985, 256
    %v1988 = vpop.permute.xlu0 %1987
    %s1990 = sor.u32 256, 8
    %1991 = vbcast.lane.b32.xlu0 %v1985, %s1990
    %v1992 = vpop.permute.xlu0 %1991
    %s1994 = sor.u32 256, 16
    %1995 = vbcast.lane.b32.xlu0 %v1985, %s1994
    %v1996 = vpop.permute.xlu0 %1995
    %s1998 = sor.u32 256, 24
    %1999 = vbcast.lane.b32.xlu0 %v1985, %s1998
    %v2000 = vpop.permute.xlu0 %1999
    %v2001 = vlaneseq
    %v2002 = vshrl.u32 %v2001, 7
    %v2003 = vsub.s32 1, %v2002
    %v2004 = vrot.slane %v1981, %v2003
    %2006 = vbcast.lane.b32.xlu0 %v2004, 256
    %v2007 = vpop.permute.xlu0 %2006
    %s2009 = sor.u32 256, 8
    %2010 = vbcast.lane.b32.xlu0 %v2004, %s2009
    %v2011 = vpop.permute.xlu0 %2010
    %s2013 = sor.u32 256, 16
    %2014 = vbcast.lane.b32.xlu0 %v2004, %s2013
    %v2015 = vpop.permute.xlu0 %2014
    %s2017 = sor.u32 256, 24
    %2018 = vbcast.lane.b32.xlu0 %v2004, %s2017
    %v2019 = vpop.permute.xlu0 %2018
    %v2020 = vlaneseq
    %v2021 = vshrl.u32 %v2020, 7
    %v2022 = vsub.s32 2, %v2021
    %v2023 = vrot.slane %v1981, %v2022
    %2025 = vbcast.lane.b32.xlu0 %v2023, 256
    %v2026 = vpop.permute.xlu0 %2025
    %s2028 = sor.u32 256, 8
    %2029 = vbcast.lane.b32.xlu0 %v2023, %s2028
    %v2030 = vpop.permute.xlu0 %2029
    %s2032 = sor.u32 256, 16
    %2033 = vbcast.lane.b32.xlu0 %v2023, %s2032
    %v2034 = vpop.permute.xlu0 %2033
    %s2036 = sor.u32 256, 24
    %2037 = vbcast.lane.b32.xlu0 %v2023, %s2036
    %v2038 = vpop.permute.xlu0 %2037
    %v2039 = vlaneseq
    %v2040 = vshrl.u32 %v2039, 7
    %v2041 = vsub.s32 3, %v2040
    %v2042 = vrot.slane %v1981, %v2041
    %2044 = vbcast.lane.b32.xlu0 %v2042, 256
    %v2045 = vpop.permute.xlu0 %2044
    %s2047 = sor.u32 256, 8
    %2048 = vbcast.lane.b32.xlu0 %v2042, %s2047
    %v2049 = vpop.permute.xlu0 %2048
    %s2051 = sor.u32 256, 16
    %2052 = vbcast.lane.b32.xlu0 %v2042, %s2051
    %v2053 = vpop.permute.xlu0 %2052
    %s2055 = sor.u32 256, 24
    %2056 = vbcast.lane.b32.xlu0 %v2042, %s2055
    %v2057 = vpop.permute.xlu0 %2056
    %v2058 = vlaneseq
    %v2059 = vshrl.u32 %v2058, 7
    %v2060 = vsub.s32 4, %v2059
    %v2061 = vrot.slane %v1981, %v2060
    %2063 = vbcast.lane.b32.xlu0 %v2061, 256
    %v2064 = vpop.permute.xlu0 %2063
    %s2066 = sor.u32 256, 8
    %2067 = vbcast.lane.b32.xlu0 %v2061, %s2066
    %v2068 = vpop.permute.xlu0 %2067
    %s2070 = sor.u32 256, 16
    %2071 = vbcast.lane.b32.xlu0 %v2061, %s2070
    %v2072 = vpop.permute.xlu0 %2071
    %s2074 = sor.u32 256, 24
    %2075 = vbcast.lane.b32.xlu0 %v2061, %s2074
    %v2076 = vpop.permute.xlu0 %2075
    %v2077 = vlaneseq
    %v2078 = vshrl.u32 %v2077, 7
    %v2079 = vsub.s32 5, %v2078
    %v2080 = vrot.slane %v1981, %v2079
    %2082 = vbcast.lane.b32.xlu0 %v2080, 256
    %v2083 = vpop.permute.xlu0 %2082
    %s2085 = sor.u32 256, 8
    %2086 = vbcast.lane.b32.xlu0 %v2080, %s2085
    %v2087 = vpop.permute.xlu0 %2086
    %s2089 = sor.u32 256, 16
    %2090 = vbcast.lane.b32.xlu0 %v2080, %s2089
    %v2091 = vpop.permute.xlu0 %2090
    %s2093 = sor.u32 256, 24
    %2094 = vbcast.lane.b32.xlu0 %v2080, %s2093
    %v2095 = vpop.permute.xlu0 %2094
    %v2096 = vlaneseq
    %v2097 = vshrl.u32 %v2096, 7
    %v2098 = vsub.s32 6, %v2097
    %v2099 = vrot.slane %v1981, %v2098
    %2101 = vbcast.lane.b32.xlu0 %v2099, 256
    %v2102 = vpop.permute.xlu0 %2101
    %s2104 = sor.u32 256, 8
    %2105 = vbcast.lane.b32.xlu0 %v2099, %s2104
    %v2106 = vpop.permute.xlu0 %2105
    %s2108 = sor.u32 256, 16
    %2109 = vbcast.lane.b32.xlu0 %v2099, %s2108
    %v2110 = vpop.permute.xlu0 %2109
    %s2112 = sor.u32 256, 24
    %2113 = vbcast.lane.b32.xlu0 %v2099, %s2112
    %v2114 = vpop.permute.xlu0 %2113
    %v2115 = vlaneseq
    %v2116 = vshrl.u32 %v2115, 7
    %v2117 = vsub.s32 7, %v2116
    %v2118 = vrot.slane %v1981, %v2117
    %2120 = vbcast.lane.b32.xlu0 %v2118, 256
    %v2121 = vpop.permute.xlu0 %2120
    %s2123 = sor.u32 256, 8
    %2124 = vbcast.lane.b32.xlu0 %v2118, %s2123
    %v2125 = vpop.permute.xlu0 %2124
    %s2127 = sor.u32 256, 16
    %2128 = vbcast.lane.b32.xlu0 %v2118, %s2127
    %v2129 = vpop.permute.xlu0 %2128
    %s2131 = sor.u32 256, 24
    %2132 = vbcast.lane.b32.xlu0 %v2118, %s2131
    %v2133 = vpop.permute.xlu0 %2132
    %v2135 = vsel %vm946, %v1948, 0
    %v2138 = vsel %vm946, %v1949, 0
    %v2141 = vsel %vm946, %v1950, 0
    %v2144 = vsel %vm946, %v1951, 0
    %2146 = vmatprep.subr.mxu0 0.0
    %2147 = vmatpush1.msra.mxu0 %v1915
    %2148 = vmatprep.subr.mxu0 0.0
    %2149 = vmatpush1.msra.mxu0 %v1916
    %2150 = vmatprep.subr.mxu0 0.0
    %2151 = vmatpush1.msra.mxu0 %v1917
    %2152 = vmatprep.subr.mxu0 0.0
    %2153 = vmatpush1.msra.mxu0 %v1918
    %2154 = vmatprep.subr.mxu0 0.0
    %2155 = vmatpush1.msra.mxu0 0.0
    %2156 = vmatprep.subr.mxu0 0.0
    %2157 = vmatpush1.msra.mxu0 0.0
    %2158 = vmatprep.subr.mxu0 0.0
    %2159 = vmatpush1.msra.mxu0 0.0
    %2160 = vmatprep.subr.mxu0 0.0
    %2161 = vmatpush1.msra.mxu0 0.0
    %2162 = vmatprep.subr.mxu0 0.0
    %2163 = vmatpush1.msra.mxu0 0.0
    %2164 = vmatprep.subr.mxu0 0.0
    %2165 = vmatpush1.msra.mxu0 0.0
    %2166 = vmatprep.subr.mxu0 0.0
    %2167 = vmatpush1.msra.mxu0 0.0
    %2168 = vmatprep.subr.mxu0 0.0
    %2169 = vmatpush1.msra.mxu0 0.0
    %2170 = vmatprep.subr.mxu0 0.0
    %2171 = vmatpush1.msra.mxu0 0.0
    %2172 = vmatprep.subr.mxu0 0.0
    %2173 = vmatpush1.msra.mxu0 0.0
    %2174 = vmatprep.subr.mxu0 0.0
    %2175 = vmatpush1.msra.mxu0 0.0
    %2176 = vmatprep.subr.mxu0 0.0
    %2177 = vmatpush1.msra.mxu0 0.0
    %2178 = vmatprep.subr.mxu0 0.0
    %2179 = vmatpush1.msra.mxu0 0.0
    %2180 = vmatprep.subr.mxu0 0.0
    %2181 = vmatpush1.msra.mxu0 0.0
    %2182 = vmatprep.subr.mxu0 0.0
    %2183 = vmatpush1.msra.mxu0 0.0
    %2184 = vmatprep.subr.mxu0 0.0
    %2185 = vmatpush1.msra.mxu0 0.0
    %2186 = vmatprep.subr.mxu0 0.0
    %2187 = vmatpush1.msra.mxu0 0.0
    %2188 = vmatprep.subr.mxu0 0.0
    %2189 = vmatpush1.msra.mxu0 0.0
    %2190 = vmatprep.subr.mxu0 0.0
    %2191 = vmatpush1.msra.mxu0 0.0
    %2192 = vmatprep.subr.mxu0 0.0
    %2193 = vmatpush1.msra.mxu0 0.0
    %2194 = vmatprep.subr.mxu0 0.0
    %2195 = vmatpush1.msra.mxu0 0.0
    %2196 = vmatprep.subr.mxu0 0.0
    %2197 = vmatpush1.msra.mxu0 0.0
    %2198 = vmatprep.subr.mxu0 0.0
    %2199 = vmatpush1.msra.mxu0 0.0
    %2200 = vmatprep.subr.mxu0 0.0
    %2201 = vmatpush1.msra.mxu0 0.0
    %2202 = vmatprep.subr.mxu0 0.0
    %2203 = vmatpush1.msra.mxu0 0.0
    %2204 = vmatprep.subr.mxu0 0.0
    %2205 = vmatpush1.msra.mxu0 0.0
    %2206 = vmatprep.subr.mxu0 0.0
    %2207 = vmatpush1.msra.mxu0 0.0
    %2208 = vmatprep.subr.mxu0 0.0
    %2209 = vmatpush1.msra.mxu0 0.0
    %2210 = vmatprep.mubr.f32.mxu0 0.0
    %2211 = vmatmul.mubr.f32.gmra.mrb[0].mxu0 %v2135
    %v2212 = vpop.f32.mrb[0].mxu0
    %v2213 = vadd.f32 %v1988, %v2212
    %v2214 = vpop.f32.mrb[0].mxu0
    %2215 = vmatprep.mubr.f32.mxu0 0.0
    %2216 = vmatmul.mubr.f32.gmra.mrb[0].mxu0 %v2138
    %v2217 = vpop.f32.mrb[0].mxu0
    %v2218 = vadd.f32 %v1992, %v2217
    %v2219 = vpop.f32.mrb[0].mxu0
    %2220 = vmatprep.mubr.f32.mxu0 0.0
    %2221 = vmatmul.mubr.f32.gmra.mrb[0].mxu0 %v2141
    %v2222 = vpop.f32.mrb[0].mxu0
    %v2223 = vadd.f32 %v1996, %v2222
    %v2224 = vpop.f32.mrb[0].mxu0
    %2225 = vmatprep.mubr.f32.mxu0 0.0
    %2226 = vmatmul.mubr.f32.gmra.mrb[0].mxu0 %v2144
    %v2227 = vpop.f32.mrb[0].mxu0
    %v2228 = vadd.f32 %v2000, %v2227
    %v2229 = vpop.f32.mrb[0].mxu0
    %2230 = vdwg.mxu0
    %v2232 = vsel %vm946, %v1952, 0
    %v2235 = vsel %vm946, %v1953, 0
    %v2238 = vsel %vm946, %v1954, 0
    %v2241 = vsel %vm946, %v1955, 0
    %2243 = vmatprep.subr.mxu0 0.0
    %2244 = vmatpush1.msra.mxu0 %v1919
    %2245 = vmatprep.subr.mxu0 0.0
    %2246 = vmatpush1.msra.mxu0 %v1920
    %2247 = vmatprep.subr.mxu0 0.0
    %2248 = vmatpush1.msra.mxu0 %v1921
    %2249 = vmatprep.subr.mxu0 0.0
    %2250 = vmatpush1.msra.mxu0 %v1922
    %2251 = vmatprep.subr.mxu0 0.0
    %2252 = vmatpush1.msra.mxu0 0.0
    %2253 = vmatprep.subr.mxu0 0.0
    %2254 = vmatpush1.msra.mxu0 0.0
    %2255 = vmatprep.subr.mxu0 0.0
    %2256 = vmatpush1.msra.mxu0 0.0
    %2257 = vmatprep.subr.mxu0 0.0
    %2258 = vmatpush1.msra.mxu0 0.0
    %2259 = vmatprep.subr.mxu0 0.0
    %2260 = vmatpush1.msra.mxu0 0.0
    %2261 = vmatprep.subr.mxu0 0.0
    %2262 = vmatpush1.msra.mxu0 0.0
    %2263 = vmatprep.subr.mxu0 0.0
    %2264 = vmatpush1.msra.mxu0 0.0
    %2265 = vmatprep.subr.mxu0 0.0
    %2266 = vmatpush1.msra.mxu0 0.0
    %2267 = vmatprep.subr.mxu0 0.0
    %2268 = vmatpush1.msra.mxu0 0.0
    %2269 = vmatprep.subr.mxu0 0.0
    %2270 = vmatpush1.msra.mxu0 0.0
    %2271 = vmatprep.subr.mxu0 0.0
    %2272 = vmatpush1.msra.mxu0 0.0
    %2273 = vmatprep.subr.mxu0 0.0
    %2274 = vmatpush1.msra.mxu0 0.0
    %2275 = vmatprep.subr.mxu0 0.0
    %2276 = vmatpush1.msra.mxu0 0.0
    %2277 = vmatprep.subr.mxu0 0.0
    %2278 = vmatpush1.msra.mxu0 0.0
    %2279 = vmatprep.subr.mxu0 0.0
    %2280 = vmatpush1.msra.mxu0 0.0
    %2281 = vmatprep.subr.mxu0 0.0
    %2282 = vmatpush1.msra.mxu0 0.0
    %2283 = vmatprep.subr.mxu0 0.0
    %2284 = vmatpush1.msra.mxu0 0.0
    %2285 = vmatprep.subr.mxu0 0.0
    %2286 = vmatpush1.msra.mxu0 0.0
    %2287 = vmatprep.subr.mxu0 0.0
    %2288 = vmatpush1.msra.mxu0 0.0
    %2289 = vmatprep.subr.mxu0 0.0
    %2290 = vmatpush1.msra.mxu0 0.0
    %2291 = vmatprep.subr.mxu0 0.0
    %2292 = vmatpush1.msra.mxu0 0.0
    %2293 = vmatprep.subr.mxu0 0.0
    %2294 = vmatpush1.msra.mxu0 0.0
    %2295 = vmatprep.subr.mxu0 0.0
    %2296 = vmatpush1.msra.mxu0 0.0
    %2297 = vmatprep.subr.mxu0 0.0
    %2298 = vmatpush1.msra.mxu0 0.0
    %2299 = vmatprep.subr.mxu0 0.0
    %2300 = vmatpush1.msra.mxu0 0.0
    %2301 = vmatprep.subr.mxu0 0.0
    %2302 = vmatpush1.msra.mxu0 0.0
    %2303 = vmatprep.subr.mxu0 0.0
    %2304 = vmatpush1.msra.mxu0 0.0
    %2305 = vmatprep.subr.mxu0 0.0
    %2306 = vmatpush1.msra.mxu0 0.0
    %2307 = vmatprep.mubr.f32.mxu0 0.0
    %2308 = vmatmul.mubr.f32.gmra.mrb[0].mxu0 %v2232
    %v2309 = vpop.f32.mrb[0].mxu0
    %v2310 = vadd.f32 %v2007, %v2309
    %v2311 = vpop.f32.mrb[0].mxu0
    %2312 = vmatprep.mubr.f32.mxu0 0.0
    %2313 = vmatmul.mubr.f32.gmra.mrb[0].mxu0 %v2235
    %v2314 = vpop.f32.mrb[0].mxu0
    %v2315 = vadd.f32 %v2011, %v2314
    %v2316 = vpop.f32.mrb[0].mxu0
    %2317 = vmatprep.mubr.f32.mxu0 0.0
    %2318 = vmatmul.mubr.f32.gmra.mrb[0].mxu0 %v2238
    %v2319 = vpop.f32.mrb[0].mxu0
    %v2320 = vadd.f32 %v2015, %v2319
    %v2321 = vpop.f32.mrb[0].mxu0
    %2322 = vmatprep.mubr.f32.mxu0 0.0
    %2323 = vmatmul.mubr.f32.gmra.mrb[0].mxu0 %v2241
    %v2324 = vpop.f32.mrb[0].mxu0
    %v2325 = vadd.f32 %v2019, %v2324
    %v2326 = vpop.f32.mrb[0].mxu0
    %2327 = vdwg.mxu0
    %v2329 = vsel %vm946, %v1956, 0
    %v2332 = vsel %vm946, %v1957, 0
    %v2335 = vsel %vm946, %v1958, 0
    %v2338 = vsel %vm946, %v1959, 0
    %2340 = vmatprep.subr.mxu0 0.0
    %2341 = vmatpush1.msra.mxu0 %v1923
    %2342 = vmatprep.subr.mxu0 0.0
    %2343 = vmatpush1.msra.mxu0 %v1924
    %2344 = vmatprep.subr.mxu0 0.0
    %2345 = vmatpush1.msra.mxu0 %v1925
    %2346 = vmatprep.subr.mxu0 0.0
    %2347 = vmatpush1.msra.mxu0 %v1926
    %2348 = vmatprep.subr.mxu0 0.0
    %2349 = vmatpush1.msra.mxu0 0.0
    %2350 = vmatprep.subr.mxu0 0.0
    %2351 = vmatpush1.msra.mxu0 0.0
    %2352 = vmatprep.subr.mxu0 0.0
    %2353 = vmatpush1.msra.mxu0 0.0
    %2354 = vmatprep.subr.mxu0 0.0
    %2355 = vmatpush1.msra.mxu0 0.0
    %2356 = vmatprep.subr.mxu0 0.0
    %2357 = vmatpush1.msra.mxu0 0.0
    %2358 = vmatprep.subr.mxu0 0.0
    %2359 = vmatpush1.msra.mxu0 0.0
    %2360 = vmatprep.subr.mxu0 0.0
    %2361 = vmatpush1.msra.mxu0 0.0
    %2362 = vmatprep.subr.mxu0 0.0
    %2363 = vmatpush1.msra.mxu0 0.0
    %2364 = vmatprep.subr.mxu0 0.0
    %2365 = vmatpush1.msra.mxu0 0.0
    %2366 = vmatprep.subr.mxu0 0.0
    %2367 = vmatpush1.msra.mxu0 0.0
    %2368 = vmatprep.subr.mxu0 0.0
    %2369 = vmatpush1.msra.mxu0 0.0
    %2370 = vmatprep.subr.mxu0 0.0
    %2371 = vmatpush1.msra.mxu0 0.0
    %2372 = vmatprep.subr.mxu0 0.0
    %2373 = vmatpush1.msra.mxu0 0.0
    %2374 = vmatprep.subr.mxu0 0.0
    %2375 = vmatpush1.msra.mxu0 0.0
    %2376 = vmatprep.subr.mxu0 0.0
    %2377 = vmatpush1.msra.mxu0 0.0
    %2378 = vmatprep.subr.mxu0 0.0
    %2379 = vmatpush1.msra.mxu0 0.0
    %2380 = vmatprep.subr.mxu0 0.0
    %2381 = vmatpush1.msra.mxu0 0.0
    %2382 = vmatprep.subr.mxu0 0.0
    %2383 = vmatpush1.msra.mxu0 0.0
    %2384 = vmatprep.subr.mxu0 0.0
    %2385 = vmatpush1.msra.mxu0 0.0
    %2386 = vmatprep.subr.mxu0 0.0
    %2387 = vmatpush1.msra.mxu0 0.0
    %2388 = vmatprep.subr.mxu0 0.0
    %2389 = vmatpush1.msra.mxu0 0.0
    %2390 = vmatprep.subr.mxu0 0.0
    %2391 = vmatpush1.msra.mxu0 0.0
    %2392 = vmatprep.subr.mxu0 0.0
    %2393 = vmatpush1.msra.mxu0 0.0
    %2394 = vmatprep.subr.mxu0 0.0
    %2395 = vmatpush1.msra.mxu0 0.0
    %2396 = vmatprep.subr.mxu0 0.0
    %2397 = vmatpush1.msra.mxu0 0.0
    %2398 = vmatprep.subr.mxu0 0.0
    %2399 = vmatpush1.msra.mxu0 0.0
    %2400 = vmatprep.subr.mxu0 0.0
    %2401 = vmatpush1.msra.mxu0 0.0
    %2402 = vmatprep.subr.mxu0 0.0
    %2403 = vmatpush1.msra.mxu0 0.0
    %2404 = vmatprep.mubr.f32.mxu0 0.0
    %2405 = vmatmul.mubr.f32.gmra.mrb[0].mxu0 %v2329
    %v2406 = vpop.f32.mrb[0].mxu0
    %v2407 = vadd.f32 %v2026, %v2406
    %v2408 = vpop.f32.mrb[0].mxu0
    %2409 = vmatprep.mubr.f32.mxu0 0.0
    %2410 = vmatmul.mubr.f32.gmra.mrb[0].mxu0 %v2332
    %v2411 = vpop.f32.mrb[0].mxu0
    %v2412 = vadd.f32 %v2030, %v2411
    %v2413 = vpop.f32.mrb[0].mxu0
    %2414 = vmatprep.mubr.f32.mxu0 0.0
    %2415 = vmatmul.mubr.f32.gmra.mrb[0].mxu0 %v2335
    %v2416 = vpop.f32.mrb[0].mxu0
    %v2417 = vadd.f32 %v2034, %v2416
    %v2418 = vpop.f32.mrb[0].mxu0
    %2419 = vmatprep.mubr.f32.mxu0 0.0
    %2420 = vmatmul.mubr.f32.gmra.mrb[0].mxu0 %v2338
    %v2421 = vpop.f32.mrb[0].mxu0
    %v2422 = vadd.f32 %v2038, %v2421
    %v2423 = vpop.f32.mrb[0].mxu0
    %2424 = vdwg.mxu0
    %v2426 = vsel %vm946, %v1960, 0
    %v2429 = vsel %vm946, %v1961, 0
    %v2432 = vsel %vm946, %v1962, 0
    %v2435 = vsel %vm946, %v1963, 0
    %2437 = vmatprep.subr.mxu0 0.0
    %2438 = vmatpush1.msra.mxu0 %v1927
    %2439 = vmatprep.subr.mxu0 0.0
    %2440 = vmatpush1.msra.mxu0 %v1928
    %2441 = vmatprep.subr.mxu0 0.0
    %2442 = vmatpush1.msra.mxu0 %v1929
    %2443 = vmatprep.subr.mxu0 0.0
    %2444 = vmatpush1.msra.mxu0 %v1930
    %2445 = vmatprep.subr.mxu0 0.0
    %2446 = vmatpush1.msra.mxu0 0.0
    %2447 = vmatprep.subr.mxu0 0.0
    %2448 = vmatpush1.msra.mxu0 0.0
    %2449 = vmatprep.subr.mxu0 0.0
    %2450 = vmatpush1.msra.mxu0 0.0
    %2451 = vmatprep.subr.mxu0 0.0
    %2452 = vmatpush1.msra.mxu0 0.0
    %2453 = vmatprep.subr.mxu0 0.0
    %2454 = vmatpush1.msra.mxu0 0.0
    %2455 = vmatprep.subr.mxu0 0.0
    %2456 = vmatpush1.msra.mxu0 0.0
    %2457 = vmatprep.subr.mxu0 0.0
    %2458 = vmatpush1.msra.mxu0 0.0
    %2459 = vmatprep.subr.mxu0 0.0
    %2460 = vmatpush1.msra.mxu0 0.0
    %2461 = vmatprep.subr.mxu0 0.0
    %2462 = vmatpush1.msra.mxu0 0.0
    %2463 = vmatprep.subr.mxu0 0.0
    %2464 = vmatpush1.msra.mxu0 0.0
    %2465 = vmatprep.subr.mxu0 0.0
    %2466 = vmatpush1.msra.mxu0 0.0
    %2467 = vmatprep.subr.mxu0 0.0
    %2468 = vmatpush1.msra.mxu0 0.0
    %2469 = vmatprep.subr.mxu0 0.0
    %2470 = vmatpush1.msra.mxu0 0.0
    %2471 = vmatprep.subr.mxu0 0.0
    %2472 = vmatpush1.msra.mxu0 0.0
    %2473 = vmatprep.subr.mxu0 0.0
    %2474 = vmatpush1.msra.mxu0 0.0
    %2475 = vmatprep.subr.mxu0 0.0
    %2476 = vmatpush1.msra.mxu0 0.0
    %2477 = vmatprep.subr.mxu0 0.0
    %2478 = vmatpush1.msra.mxu0 0.0
    %2479 = vmatprep.subr.mxu0 0.0
    %2480 = vmatpush1.msra.mxu0 0.0
    %2481 = vmatprep.subr.mxu0 0.0
    %2482 = vmatpush1.msra.mxu0 0.0
    %2483 = vmatprep.subr.mxu0 0.0
    %2484 = vmatpush1.msra.mxu0 0.0
    %2485 = vmatprep.subr.mxu0 0.0
    %2486 = vmatpush1.msra.mxu0 0.0
    %2487 = vmatprep.subr.mxu0 0.0
    %2488 = vmatpush1.msra.mxu0 0.0
    %2489 = vmatprep.subr.mxu0 0.0
    %2490 = vmatpush1.msra.mxu0 0.0
    %2491 = vmatprep.subr.mxu0 0.0
    %2492 = vmatpush1.msra.mxu0 0.0
    %2493 = vmatprep.subr.mxu0 0.0
    %2494 = vmatpush1.msra.mxu0 0.0
    %2495 = vmatprep.subr.mxu0 0.0
    %2496 = vmatpush1.msra.mxu0 0.0
    %2497 = vmatprep.subr.mxu0 0.0
    %2498 = vmatpush1.msra.mxu0 0.0
    %2499 = vmatprep.subr.mxu0 0.0
    %2500 = vmatpush1.msra.mxu0 0.0
    %2501 = vmatprep.mubr.f32.mxu0 0.0
    %2502 = vmatmul.mubr.f32.gmra.mrb[0].mxu0 %v2426
    %v2503 = vpop.f32.mrb[0].mxu0
    %v2504 = vadd.f32 %v2045, %v2503
    %v2505 = vpop.f32.mrb[0].mxu0
    %2506 = vmatprep.mubr.f32.mxu0 0.0
    %2507 = vmatmul.mubr.f32.gmra.mrb[0].mxu0 %v2429
    %v2508 = vpop.f32.mrb[0].mxu0
    %v2509 = vadd.f32 %v2049, %v2508
    %v2510 = vpop.f32.mrb[0].mxu0
    %2511 = vmatprep.mubr.f32.mxu0 0.0
    %2512 = vmatmul.mubr.f32.gmra.mrb[0].mxu0 %v2432
    %v2513 = vpop.f32.mrb[0].mxu0
    %v2514 = vadd.f32 %v2053, %v2513
    %v2515 = vpop.f32.mrb[0].mxu0
    %2516 = vmatprep.mubr.f32.mxu0 0.0
    %2517 = vmatmul.mubr.f32.gmra.mrb[0].mxu0 %v2435
    %v2518 = vpop.f32.mrb[0].mxu0
    %v2519 = vadd.f32 %v2057, %v2518
    %v2520 = vpop.f32.mrb[0].mxu0
    %2521 = vdwg.mxu0
    %v2523 = vsel %vm946, %v1964, 0
    %v2526 = vsel %vm946, %v1965, 0
    %v2529 = vsel %vm946, %v1966, 0
    %v2532 = vsel %vm946, %v1967, 0
    %2534 = vmatprep.subr.mxu0 0.0
    %2535 = vmatpush1.msra.mxu0 %v1931
    %2536 = vmatprep.subr.mxu0 0.0
    %2537 = vmatpush1.msra.mxu0 %v1932
    %2538 = vmatprep.subr.mxu0 0.0
    %2539 = vmatpush1.msra.mxu0 %v1933
    %2540 = vmatprep.subr.mxu0 0.0
    %2541 = vmatpush1.msra.mxu0 %v1934
    %2542 = vmatprep.subr.mxu0 0.0
    %2543 = vmatpush1.msra.mxu0 0.0
    %2544 = vmatprep.subr.mxu0 0.0
    %2545 = vmatpush1.msra.mxu0 0.0
    %2546 = vmatprep.subr.mxu0 0.0
    %2547 = vmatpush1.msra.mxu0 0.0
    %2548 = vmatprep.subr.mxu0 0.0
    %2549 = vmatpush1.msra.mxu0 0.0
    %2550 = vmatprep.subr.mxu0 0.0
    %2551 = vmatpush1.msra.mxu0 0.0
    %2552 = vmatprep.subr.mxu0 0.0
    %2553 = vmatpush1.msra.mxu0 0.0
    %2554 = vmatprep.subr.mxu0 0.0
    %2555 = vmatpush1.msra.mxu0 0.0
    %2556 = vmatprep.subr.mxu0 0.0
    %2557 = vmatpush1.msra.mxu0 0.0
    %2558 = vmatprep.subr.mxu0 0.0
    %2559 = vmatpush1.msra.mxu0 0.0
    %2560 = vmatprep.subr.mxu0 0.0
    %2561 = vmatpush1.msra.mxu0 0.0
    %2562 = vmatprep.subr.mxu0 0.0
    %2563 = vmatpush1.msra.mxu0 0.0
    %2564 = vmatprep.subr.mxu0 0.0
    %2565 = vmatpush1.msra.mxu0 0.0
    %2566 = vmatprep.subr.mxu0 0.0
    %2567 = vmatpush1.msra.mxu0 0.0
    %2568 = vmatprep.subr.mxu0 0.0
    %2569 = vmatpush1.msra.mxu0 0.0
    %2570 = vmatprep.subr.mxu0 0.0
    %2571 = vmatpush1.msra.mxu0 0.0
    %2572 = vmatprep.subr.mxu0 0.0
    %2573 = vmatpush1.msra.mxu0 0.0
    %2574 = vmatprep.subr.mxu0 0.0
    %2575 = vmatpush1.msra.mxu0 0.0
    %2576 = vmatprep.subr.mxu0 0.0
    %2577 = vmatpush1.msra.mxu0 0.0
    %2578 = vmatprep.subr.mxu0 0.0
    %2579 = vmatpush1.msra.mxu0 0.0
    %2580 = vmatprep.subr.mxu0 0.0
    %2581 = vmatpush1.msra.mxu0 0.0
    %2582 = vmatprep.subr.mxu0 0.0
    %2583 = vmatpush1.msra.mxu0 0.0
    %2584 = vmatprep.subr.mxu0 0.0
    %2585 = vmatpush1.msra.mxu0 0.0
    %2586 = vmatprep.subr.mxu0 0.0
    %2587 = vmatpush1.msra.mxu0 0.0
    %2588 = vmatprep.subr.mxu0 0.0
    %2589 = vmatpush1.msra.mxu0 0.0
    %2590 = vmatprep.subr.mxu0 0.0
    %2591 = vmatpush1.msra.mxu0 0.0
    %2592 = vmatprep.subr.mxu0 0.0
    %2593 = vmatpush1.msra.mxu0 0.0
    %2594 = vmatprep.subr.mxu0 0.0
    %2595 = vmatpush1.msra.mxu0 0.0
    %2596 = vmatprep.subr.mxu0 0.0
    %2597 = vmatpush1.msra.mxu0 0.0
    %2598 = vmatprep.mubr.f32.mxu0 0.0
    %2599 = vmatmul.mubr.f32.gmra.mrb[0].mxu0 %v2523
    %v2600 = vpop.f32.mrb[0].mxu0
    %v2601 = vadd.f32 %v2064, %v2600
    %v2602 = vpop.f32.mrb[0].mxu0
    %2603 = vmatprep.mubr.f32.mxu0 0.0
    %2604 = vmatmul.mubr.f32.gmra.mrb[0].mxu0 %v2526
    %v2605 = vpop.f32.mrb[0].mxu0
    %v2606 = vadd.f32 %v2068, %v2605
    %v2607 = vpop.f32.mrb[0].mxu0
    %2608 = vmatprep.mubr.f32.mxu0 0.0
    %2609 = vmatmul.mubr.f32.gmra.mrb[0].mxu0 %v2529
    %v2610 = vpop.f32.mrb[0].mxu0
    %v2611 = vadd.f32 %v2072, %v2610
    %v2612 = vpop.f32.mrb[0].mxu0
    %2613 = vmatprep.mubr.f32.mxu0 0.0
    %2614 = vmatmul.mubr.f32.gmra.mrb[0].mxu0 %v2532
    %v2615 = vpop.f32.mrb[0].mxu0
    %v2616 = vadd.f32 %v2076, %v2615
    %v2617 = vpop.f32.mrb[0].mxu0
    %2618 = vdwg.mxu0
    %v2620 = vsel %vm946, %v1968, 0
    %v2623 = vsel %vm946, %v1969, 0
    %v2626 = vsel %vm946, %v1970, 0
    %v2629 = vsel %vm946, %v1971, 0
    %2631 = vmatprep.subr.mxu0 0.0
    %2632 = vmatpush1.msra.mxu0 %v1935
    %2633 = vmatprep.subr.mxu0 0.0
    %2634 = vmatpush1.msra.mxu0 %v1936
    %2635 = vmatprep.subr.mxu0 0.0
    %2636 = vmatpush1.msra.mxu0 %v1937
    %2637 = vmatprep.subr.mxu0 0.0
    %2638 = vmatpush1.msra.mxu0 %v1938
    %2639 = vmatprep.subr.mxu0 0.0
    %2640 = vmatpush1.msra.mxu0 0.0
    %2641 = vmatprep.subr.mxu0 0.0
    %2642 = vmatpush1.msra.mxu0 0.0
    %2643 = vmatprep.subr.mxu0 0.0
    %2644 = vmatpush1.msra.mxu0 0.0
    %2645 = vmatprep.subr.mxu0 0.0
    %2646 = vmatpush1.msra.mxu0 0.0
    %2647 = vmatprep.subr.mxu0 0.0
    %2648 = vmatpush1.msra.mxu0 0.0
    %2649 = vmatprep.subr.mxu0 0.0
    %2650 = vmatpush1.msra.mxu0 0.0
    %2651 = vmatprep.subr.mxu0 0.0
    %2652 = vmatpush1.msra.mxu0 0.0
    %2653 = vmatprep.subr.mxu0 0.0
    %2654 = vmatpush1.msra.mxu0 0.0
    %2655 = vmatprep.subr.mxu0 0.0
    %2656 = vmatpush1.msra.mxu0 0.0
    %2657 = vmatprep.subr.mxu0 0.0
    %2658 = vmatpush1.msra.mxu0 0.0
    %2659 = vmatprep.subr.mxu0 0.0
    %2660 = vmatpush1.msra.mxu0 0.0
    %2661 = vmatprep.subr.mxu0 0.0
    %2662 = vmatpush1.msra.mxu0 0.0
    %2663 = vmatprep.subr.mxu0 0.0
    %2664 = vmatpush1.msra.mxu0 0.0
    %2665 = vmatprep.subr.mxu0 0.0
    %2666 = vmatpush1.msra.mxu0 0.0
    %2667 = vmatprep.subr.mxu0 0.0
    %2668 = vmatpush1.msra.mxu0 0.0
    %2669 = vmatprep.subr.mxu0 0.0
    %2670 = vmatpush1.msra.mxu0 0.0
    %2671 = vmatprep.subr.mxu0 0.0
    %2672 = vmatpush1.msra.mxu0 0.0
    %2673 = vmatprep.subr.mxu0 0.0
    %2674 = vmatpush1.msra.mxu0 0.0
    %2675 = vmatprep.subr.mxu0 0.0
    %2676 = vmatpush1.msra.mxu0 0.0
    %2677 = vmatprep.subr.mxu0 0.0
    %2678 = vmatpush1.msra.mxu0 0.0
    %2679 = vmatprep.subr.mxu0 0.0
    %2680 = vmatpush1.msra.mxu0 0.0
    %2681 = vmatprep.subr.mxu0 0.0
    %2682 = vmatpush1.msra.mxu0 0.0
    %2683 = vmatprep.subr.mxu0 0.0
    %2684 = vmatpush1.msra.mxu0 0.0
    %2685 = vmatprep.subr.mxu0 0.0
    %2686 = vmatpush1.msra.mxu0 0.0
    %2687 = vmatprep.subr.mxu0 0.0
    %2688 = vmatpush1.msra.mxu0 0.0
    %2689 = vmatprep.subr.mxu0 0.0
    %2690 = vmatpush1.msra.mxu0 0.0
    %2691 = vmatprep.subr.mxu0 0.0
    %2692 = vmatpush1.msra.mxu0 0.0
    %2693 = vmatprep.subr.mxu0 0.0
    %2694 = vmatpush1.msra.mxu0 0.0
    %2695 = vmatprep.mubr.f32.mxu0 0.0
    %2696 = vmatmul.mubr.f32.gmra.mrb[0].mxu0 %v2620
    %v2697 = vpop.f32.mrb[0].mxu0
    %v2698 = vadd.f32 %v2083, %v2697
    %v2699 = vpop.f32.mrb[0].mxu0
    %2700 = vmatprep.mubr.f32.mxu0 0.0
    %2701 = vmatmul.mubr.f32.gmra.mrb[0].mxu0 %v2623
    %v2702 = vpop.f32.mrb[0].mxu0
    %v2703 = vadd.f32 %v2087, %v2702
    %v2704 = vpop.f32.mrb[0].mxu0
    %2705 = vmatprep.mubr.f32.mxu0 0.0
    %2706 = vmatmul.mubr.f32.gmra.mrb[0].mxu0 %v2626
    %v2707 = vpop.f32.mrb[0].mxu0
    %v2708 = vadd.f32 %v2091, %v2707
    %v2709 = vpop.f32.mrb[0].mxu0
    %2710 = vmatprep.mubr.f32.mxu0 0.0
    %2711 = vmatmul.mubr.f32.gmra.mrb[0].mxu0 %v2629
    %v2712 = vpop.f32.mrb[0].mxu0
    %v2713 = vadd.f32 %v2095, %v2712
    %v2714 = vpop.f32.mrb[0].mxu0
    %2715 = vdwg.mxu0
    %v2717 = vsel %vm946, %v1972, 0
    %v2720 = vsel %vm946, %v1973, 0
    %v2723 = vsel %vm946, %v1974, 0
    %v2726 = vsel %vm946, %v1975, 0
    %2728 = vmatprep.subr.mxu0 0.0
    %2729 = vmatpush1.msra.mxu0 %v1939
    %2730 = vmatprep.subr.mxu0 0.0
    %2731 = vmatpush1.msra.mxu0 %v1940
    %2732 = vmatprep.subr.mxu0 0.0
    %2733 = vmatpush1.msra.mxu0 %v1941
    %2734 = vmatprep.subr.mxu0 0.0
    %2735 = vmatpush1.msra.mxu0 %v1942
    %2736 = vmatprep.subr.mxu0 0.0
    %2737 = vmatpush1.msra.mxu0 0.0
    %2738 = vmatprep.subr.mxu0 0.0
    %2739 = vmatpush1.msra.mxu0 0.0
    %2740 = vmatprep.subr.mxu0 0.0
    %2741 = vmatpush1.msra.mxu0 0.0
    %2742 = vmatprep.subr.mxu0 0.0
    %2743 = vmatpush1.msra.mxu0 0.0
    %2744 = vmatprep.subr.mxu0 0.0
    %2745 = vmatpush1.msra.mxu0 0.0
    %2746 = vmatprep.subr.mxu0 0.0
    %2747 = vmatpush1.msra.mxu0 0.0
    %2748 = vmatprep.subr.mxu0 0.0
    %2749 = vmatpush1.msra.mxu0 0.0
    %2750 = vmatprep.subr.mxu0 0.0
    %2751 = vmatpush1.msra.mxu0 0.0
    %2752 = vmatprep.subr.mxu0 0.0
    %2753 = vmatpush1.msra.mxu0 0.0
    %2754 = vmatprep.subr.mxu0 0.0
    %2755 = vmatpush1.msra.mxu0 0.0
    %2756 = vmatprep.subr.mxu0 0.0
    %2757 = vmatpush1.msra.mxu0 0.0
    %2758 = vmatprep.subr.mxu0 0.0
    %2759 = vmatpush1.msra.mxu0 0.0
    %2760 = vmatprep.subr.mxu0 0.0
    %2761 = vmatpush1.msra.mxu0 0.0
    %2762 = vmatprep.subr.mxu0 0.0
    %2763 = vmatpush1.msra.mxu0 0.0
    %2764 = vmatprep.subr.mxu0 0.0
    %2765 = vmatpush1.msra.mxu0 0.0
    %2766 = vmatprep.subr.mxu0 0.0
    %2767 = vmatpush1.msra.mxu0 0.0
    %2768 = vmatprep.subr.mxu0 0.0
    %2769 = vmatpush1.msra.mxu0 0.0
    %2770 = vmatprep.subr.mxu0 0.0
    %2771 = vmatpush1.msra.mxu0 0.0
    %2772 = vmatprep.subr.mxu0 0.0
    %2773 = vmatpush1.msra.mxu0 0.0
    %2774 = vmatprep.subr.mxu0 0.0
    %2775 = vmatpush1.msra.mxu0 0.0
    %2776 = vmatprep.subr.mxu0 0.0
    %2777 = vmatpush1.msra.mxu0 0.0
    %2778 = vmatprep.subr.mxu0 0.0
    %2779 = vmatpush1.msra.mxu0 0.0
    %2780 = vmatprep.subr.mxu0 0.0
    %2781 = vmatpush1.msra.mxu0 0.0
    %2782 = vmatprep.subr.mxu0 0.0
    %2783 = vmatpush1.msra.mxu0 0.0
    %2784 = vmatprep.subr.mxu0 0.0
    %2785 = vmatpush1.msra.mxu0 0.0
    %2786 = vmatprep.subr.mxu0 0.0
    %2787 = vmatpush1.msra.mxu0 0.0
    %2788 = vmatprep.subr.mxu0 0.0
    %2789 = vmatpush1.msra.mxu0 0.0
    %2790 = vmatprep.subr.mxu0 0.0
    %2791 = vmatpush1.msra.mxu0 0.0
    %2792 = vmatprep.mubr.f32.mxu0 0.0
    %2793 = vmatmul.mubr.f32.gmra.mrb[0].mxu0 %v2717
    %v2794 = vpop.f32.mrb[0].mxu0
    %v2795 = vadd.f32 %v2102, %v2794
    %v2796 = vpop.f32.mrb[0].mxu0
    %2797 = vmatprep.mubr.f32.mxu0 0.0
    %2798 = vmatmul.mubr.f32.gmra.mrb[0].mxu0 %v2720
    %v2799 = vpop.f32.mrb[0].mxu0
    %v2800 = vadd.f32 %v2106, %v2799
    %v2801 = vpop.f32.mrb[0].mxu0
    %2802 = vmatprep.mubr.f32.mxu0 0.0
    %2803 = vmatmul.mubr.f32.gmra.mrb[0].mxu0 %v2723
    %v2804 = vpop.f32.mrb[0].mxu0
    %v2805 = vadd.f32 %v2110, %v2804
    %v2806 = vpop.f32.mrb[0].mxu0
    %2807 = vmatprep.mubr.f32.mxu0 0.0
    %2808 = vmatmul.mubr.f32.gmra.mrb[0].mxu0 %v2726
    %v2809 = vpop.f32.mrb[0].mxu0
    %v2810 = vadd.f32 %v2114, %v2809
    %v2811 = vpop.f32.mrb[0].mxu0
    %2812 = vdwg.mxu0
    %v2814 = vsel %vm946, %v1976, 0
    %v2817 = vsel %vm946, %v1977, 0
    %v2820 = vsel %vm946, %v1978, 0
    %v2823 = vsel %vm946, %v1979, 0
    %2825 = vmatprep.subr.mxu0 0.0
    %2826 = vmatpush1.msra.mxu0 %v1943
    %2827 = vmatprep.subr.mxu0 0.0
    %2828 = vmatpush1.msra.mxu0 %v1944
    %2829 = vmatprep.subr.mxu0 0.0
    %2830 = vmatpush1.msra.mxu0 %v1945
    %2831 = vmatprep.subr.mxu0 0.0
    %2832 = vmatpush1.msra.mxu0 %v1946
    %2833 = vmatprep.subr.mxu0 0.0
    %2834 = vmatpush1.msra.mxu0 0.0
    %2835 = vmatprep.subr.mxu0 0.0
    %2836 = vmatpush1.msra.mxu0 0.0
    %2837 = vmatprep.subr.mxu0 0.0
    %2838 = vmatpush1.msra.mxu0 0.0
    %2839 = vmatprep.subr.mxu0 0.0
    %2840 = vmatpush1.msra.mxu0 0.0
    %2841 = vmatprep.subr.mxu0 0.0
    %2842 = vmatpush1.msra.mxu0 0.0
    %2843 = vmatprep.subr.mxu0 0.0
    %2844 = vmatpush1.msra.mxu0 0.0
    %2845 = vmatprep.subr.mxu0 0.0
    %2846 = vmatpush1.msra.mxu0 0.0
    %2847 = vmatprep.subr.mxu0 0.0
    %2848 = vmatpush1.msra.mxu0 0.0
    %2849 = vmatprep.subr.mxu0 0.0
    %2850 = vmatpush1.msra.mxu0 0.0
    %2851 = vmatprep.subr.mxu0 0.0
    %2852 = vmatpush1.msra.mxu0 0.0
    %2853 = vmatprep.subr.mxu0 0.0
    %2854 = vmatpush1.msra.mxu0 0.0
    %2855 = vmatprep.subr.mxu0 0.0
    %2856 = vmatpush1.msra.mxu0 0.0
    %2857 = vmatprep.subr.mxu0 0.0
    %2858 = vmatpush1.msra.mxu0 0.0
    %2859 = vmatprep.subr.mxu0 0.0
    %2860 = vmatpush1.msra.mxu0 0.0
    %2861 = vmatprep.subr.mxu0 0.0
    %2862 = vmatpush1.msra.mxu0 0.0
    %2863 = vmatprep.subr.mxu0 0.0
    %2864 = vmatpush1.msra.mxu0 0.0
    %2865 = vmatprep.subr.mxu0 0.0
    %2866 = vmatpush1.msra.mxu0 0.0
    %2867 = vmatprep.subr.mxu0 0.0
    %2868 = vmatpush1.msra.mxu0 0.0
    %2869 = vmatprep.subr.mxu0 0.0
    %2870 = vmatpush1.msra.mxu0 0.0
    %2871 = vmatprep.subr.mxu0 0.0
    %2872 = vmatpush1.msra.mxu0 0.0
    %2873 = vmatprep.subr.mxu0 0.0
    %2874 = vmatpush1.msra.mxu0 0.0
    %2875 = vmatprep.subr.mxu0 0.0
    %2876 = vmatpush1.msra.mxu0 0.0
    %2877 = vmatprep.subr.mxu0 0.0
    %2878 = vmatpush1.msra.mxu0 0.0
    %2879 = vmatprep.subr.mxu0 0.0
    %2880 = vmatpush1.msra.mxu0 0.0
    %2881 = vmatprep.subr.mxu0 0.0
    %2882 = vmatpush1.msra.mxu0 0.0
    %2883 = vmatprep.subr.mxu0 0.0
    %2884 = vmatpush1.msra.mxu0 0.0
    %2885 = vmatprep.subr.mxu0 0.0
    %2886 = vmatpush1.msra.mxu0 0.0
    %2887 = vmatprep.subr.mxu0 0.0
    %2888 = vmatpush1.msra.mxu0 0.0
    %2889 = vmatprep.mubr.f32.mxu0 0.0
    %2890 = vmatmul.mubr.f32.gmra.mrb[0].mxu0 %v2814
    %v2891 = vpop.f32.mrb[0].mxu0
    %v2892 = vadd.f32 %v2121, %v2891
    %v2893 = vpop.f32.mrb[0].mxu0
    %2894 = vmatprep.mubr.f32.mxu0 0.0
    %2895 = vmatmul.mubr.f32.gmra.mrb[0].mxu0 %v2817
    %v2896 = vpop.f32.mrb[0].mxu0
    %v2897 = vadd.f32 %v2125, %v2896
    %v2898 = vpop.f32.mrb[0].mxu0
    %2899 = vmatprep.mubr.f32.mxu0 0.0
    %2900 = vmatmul.mubr.f32.gmra.mrb[0].mxu0 %v2820
    %v2901 = vpop.f32.mrb[0].mxu0
    %v2902 = vadd.f32 %v2129, %v2901
    %v2903 = vpop.f32.mrb[0].mxu0
    %2904 = vmatprep.mubr.f32.mxu0 0.0
    %2905 = vmatmul.mubr.f32.gmra.mrb[0].mxu0 %v2823
    %v2906 = vpop.f32.mrb[0].mxu0
    %v2907 = vadd.f32 %v2133, %v2906
    %v2908 = vpop.f32.mrb[0].mxu0
    %2909 = vdwg.mxu0
    %v2910 = vmin.f32 %v2213, 0.0
    %v2911 = vmin.f32 %v2218, 0.0
    %v2912 = vmin.f32 %v2223, 0.0
    %v2913 = vmin.f32 %v2228, 0.0
    %v2914 = vmin.f32 %v2310, 0.0
    %v2915 = vmin.f32 %v2315, 0.0
    %v2916 = vmin.f32 %v2320, 0.0
    %v2917 = vmin.f32 %v2325, 0.0
    %v2918 = vmin.f32 %v2407, 0.0
    %v2919 = vmin.f32 %v2412, 0.0
    %v2920 = vmin.f32 %v2417, 0.0
    %v2921 = vmin.f32 %v2422, 0.0
    %v2922 = vmin.f32 %v2504, 0.0
    %v2923 = vmin.f32 %v2509, 0.0
    %v2924 = vmin.f32 %v2514, 0.0
    %v2925 = vmin.f32 %v2519, 0.0
    %v2926 = vmin.f32 %v2601, 0.0
    %v2927 = vmin.f32 %v2606, 0.0
    %v2928 = vmin.f32 %v2611, 0.0
    %v2929 = vmin.f32 %v2616, 0.0
    %v2930 = vmin.f32 %v2698, 0.0
    %v2931 = vmin.f32 %v2703, 0.0
    %v2932 = vmin.f32 %v2708, 0.0
    %v2933 = vmin.f32 %v2713, 0.0
    %v2934 = vmin.f32 %v2795, 0.0
    %v2935 = vmin.f32 %v2800, 0.0
    %v2936 = vmin.f32 %v2805, 0.0
    %v2937 = vmin.f32 %v2810, 0.0
    %v2938 = vmin.f32 %v2892, 0.0
    %v2939 = vmin.f32 %v2897, 0.0
    %v2940 = vmin.f32 %v2902, 0.0
    %v2941 = vmin.f32 %v2907, 0.0
    %v2942 = vmul.f32 %v2910, 1.442695
    %v2943 = vpow.pop %v2942
    %v2944 = vmul.f32 %v2911, 1.442695
    %v2945 = vpow.pop %v2944
    %v2946 = vmul.f32 %v2912, 1.442695
    %v2947 = vpow.pop %v2946
    %v2948 = vmul.f32 %v2913, 1.442695
    %v2949 = vpow.pop %v2948
    %v2950 = vmul.f32 %v2914, 1.442695
    %v2951 = vpow.pop %v2950
    %v2952 = vmul.f32 %v2915, 1.442695
    %v2953 = vpow.pop %v2952
    %v2954 = vmul.f32 %v2916, 1.442695
    %v2955 = vpow.pop %v2954
    %v2956 = vmul.f32 %v2917, 1.442695
    %v2957 = vpow.pop %v2956
    %v2958 = vmul.f32 %v2918, 1.442695
    %v2959 = vpow.pop %v2958
    %v2960 = vmul.f32 %v2919, 1.442695
    %v2961 = vpow.pop %v2960
    %v2962 = vmul.f32 %v2920, 1.442695
    %v2963 = vpow.pop %v2962
    %v2964 = vmul.f32 %v2921, 1.442695
    %v2965 = vpow.pop %v2964
    %v2966 = vmul.f32 %v2922, 1.442695
    %v2967 = vpow.pop %v2966
    %v2968 = vmul.f32 %v2923, 1.442695
    %v2969 = vpow.pop %v2968
    %v2970 = vmul.f32 %v2924, 1.442695
    %v2971 = vpow.pop %v2970
    %v2972 = vmul.f32 %v2925, 1.442695
    %v2973 = vpow.pop %v2972
    %v2974 = vmul.f32 %v2926, 1.442695
    %v2975 = vpow.pop %v2974
    %v2976 = vmul.f32 %v2927, 1.442695
    %v2977 = vpow.pop %v2976
    %v2978 = vmul.f32 %v2928, 1.442695
    %v2979 = vpow.pop %v2978
    %v2980 = vmul.f32 %v2929, 1.442695
    %v2981 = vpow.pop %v2980
    %v2982 = vmul.f32 %v2930, 1.442695
    %v2983 = vpow.pop %v2982
    %v2984 = vmul.f32 %v2931, 1.442695
    %v2985 = vpow.pop %v2984
    %v2986 = vmul.f32 %v2932, 1.442695
    %v2987 = vpow.pop %v2986
    %v2988 = vmul.f32 %v2933, 1.442695
    %v2989 = vpow.pop %v2988
    %v2990 = vmul.f32 %v2934, 1.442695
    %v2991 = vpow.pop %v2990
    %v2992 = vmul.f32 %v2935, 1.442695
    %v2993 = vpow.pop %v2992
    %v2994 = vmul.f32 %v2936, 1.442695
    %v2995 = vpow.pop %v2994
    %v2996 = vmul.f32 %v2937, 1.442695
    %v2997 = vpow.pop %v2996
    %v2998 = vmul.f32 %v2938, 1.442695
    %v2999 = vpow.pop %v2998
    %v3000 = vmul.f32 %v2939, 1.442695
    %v3001 = vpow.pop %v3000
    %v3002 = vmul.f32 %v2940, 1.442695
    %v3003 = vpow.pop %v3002
    %v3004 = vmul.f32 %v2941, 1.442695
    %v3005 = vpow.pop %v3004
    %v3006 = vsub.f32 %v2943, 1.0
    %v3007 = vsub.f32 %v2945, 1.0
    %v3008 = vsub.f32 %v2947, 1.0
    %v3009 = vsub.f32 %v2949, 1.0
    %v3010 = vsub.f32 %v2951, 1.0
    %v3011 = vsub.f32 %v2953, 1.0
    %v3012 = vsub.f32 %v2955, 1.0
    %v3013 = vsub.f32 %v2957, 1.0
    %v3014 = vsub.f32 %v2959, 1.0
    %v3015 = vsub.f32 %v2961, 1.0
    %v3016 = vsub.f32 %v2963, 1.0
    %v3017 = vsub.f32 %v2965, 1.0
    %v3018 = vsub.f32 %v2967, 1.0
    %v3019 = vsub.f32 %v2969, 1.0
    %v3020 = vsub.f32 %v2971, 1.0
    %v3021 = vsub.f32 %v2973, 1.0
    %v3022 = vsub.f32 %v2975, 1.0
    %v3023 = vsub.f32 %v2977, 1.0
    %v3024 = vsub.f32 %v2979, 1.0
    %v3025 = vsub.f32 %v2981, 1.0
    %v3026 = vsub.f32 %v2983, 1.0
    %v3027 = vsub.f32 %v2985, 1.0
    %v3028 = vsub.f32 %v2987, 1.0
    %v3029 = vsub.f32 %v2989, 1.0
    %v3030 = vsub.f32 %v2991, 1.0
    %v3031 = vsub.f32 %v2993, 1.0
    %v3032 = vsub.f32 %v2995, 1.0
    %v3033 = vsub.f32 %v2997, 1.0
    %v3034 = vsub.f32 %v2999, 1.0
    %v3035 = vsub.f32 %v3001, 1.0
    %v3036 = vsub.f32 %v3003, 1.0
    %v3037 = vsub.f32 %v3005, 1.0
    %v3038 = vmax.f32 %v2213, 0.0
    %v3039 = vmax.f32 %v2218, 0.0
    %v3040 = vmax.f32 %v2223, 0.0
    %v3041 = vmax.f32 %v2228, 0.0
    %v3042 = vmax.f32 %v2310, 0.0
    %v3043 = vmax.f32 %v2315, 0.0
    %v3044 = vmax.f32 %v2320, 0.0
    %v3045 = vmax.f32 %v2325, 0.0
    %v3046 = vmax.f32 %v2407, 0.0
    %v3047 = vmax.f32 %v2412, 0.0
    %v3048 = vmax.f32 %v2417, 0.0
    %v3049 = vmax.f32 %v2422, 0.0
    %v3050 = vmax.f32 %v2504, 0.0
    %v3051 = vmax.f32 %v2509, 0.0
    %v3052 = vmax.f32 %v2514, 0.0
    %v3053 = vmax.f32 %v2519, 0.0
    %v3054 = vmax.f32 %v2601, 0.0
    %v3055 = vmax.f32 %v2606, 0.0
    %v3056 = vmax.f32 %v2611, 0.0
    %v3057 = vmax.f32 %v2616, 0.0
    %v3058 = vmax.f32 %v2698, 0.0
    %v3059 = vmax.f32 %v2703, 0.0
    %v3060 = vmax.f32 %v2708, 0.0
    %v3061 = vmax.f32 %v2713, 0.0
    %v3062 = vmax.f32 %v2795, 0.0
    %v3063 = vmax.f32 %v2800, 0.0
    %v3064 = vmax.f32 %v2805, 0.0
    %v3065 = vmax.f32 %v2810, 0.0
    %v3066 = vmax.f32 %v2892, 0.0
    %v3067 = vmax.f32 %v2897, 0.0
    %v3068 = vmax.f32 %v2902, 0.0
    %v3069 = vmax.f32 %v2907, 0.0
    %v3070 = vmin.f32 %v3006, 0.0
    %v3071 = vmin.f32 %v3007, 0.0
    %v3072 = vmin.f32 %v3008, 0.0
    %v3073 = vmin.f32 %v3009, 0.0
    %v3074 = vmin.f32 %v3010, 0.0
    %v3075 = vmin.f32 %v3011, 0.0
    %v3076 = vmin.f32 %v3012, 0.0
    %v3077 = vmin.f32 %v3013, 0.0
    %v3078 = vmin.f32 %v3014, 0.0
    %v3079 = vmin.f32 %v3015, 0.0
    %v3080 = vmin.f32 %v3016, 0.0
    %v3081 = vmin.f32 %v3017, 0.0
    %v3082 = vmin.f32 %v3018, 0.0
    %v3083 = vmin.f32 %v3019, 0.0
    %v3084 = vmin.f32 %v3020, 0.0
    %v3085 = vmin.f32 %v3021, 0.0
    %v3086 = vmin.f32 %v3022, 0.0
    %v3087 = vmin.f32 %v3023, 0.0
    %v3088 = vmin.f32 %v3024, 0.0
    %v3089 = vmin.f32 %v3025, 0.0
    %v3090 = vmin.f32 %v3026, 0.0
    %v3091 = vmin.f32 %v3027, 0.0
    %v3092 = vmin.f32 %v3028, 0.0
    %v3093 = vmin.f32 %v3029, 0.0
    %v3094 = vmin.f32 %v3030, 0.0
    %v3095 = vmin.f32 %v3031, 0.0
    %v3096 = vmin.f32 %v3032, 0.0
    %v3097 = vmin.f32 %v3033, 0.0
    %v3098 = vmin.f32 %v3034, 0.0
    %v3099 = vmin.f32 %v3035, 0.0
    %v3100 = vmin.f32 %v3036, 0.0
    %v3101 = vmin.f32 %v3037, 0.0
    %v3102 = vadd.f32 %v3038, %v3070
    %v3103 = vadd.f32 %v3039, %v3071
    %v3104 = vadd.f32 %v3040, %v3072
    %v3105 = vadd.f32 %v3041, %v3073
    %v3106 = vadd.f32 %v3042, %v3074
    %v3107 = vadd.f32 %v3043, %v3075
    %v3108 = vadd.f32 %v3044, %v3076
    %v3109 = vadd.f32 %v3045, %v3077
    %v3110 = vadd.f32 %v3046, %v3078
    %v3111 = vadd.f32 %v3047, %v3079
    %v3112 = vadd.f32 %v3048, %v3080
    %v3113 = vadd.f32 %v3049, %v3081
    %v3114 = vadd.f32 %v3050, %v3082
    %v3115 = vadd.f32 %v3051, %v3083
    %v3116 = vadd.f32 %v3052, %v3084
    %v3117 = vadd.f32 %v3053, %v3085
    %v3118 = vadd.f32 %v3054, %v3086
    %v3119 = vadd.f32 %v3055, %v3087
    %v3120 = vadd.f32 %v3056, %v3088
    %v3121 = vadd.f32 %v3057, %v3089
    %v3122 = vadd.f32 %v3058, %v3090
    %v3123 = vadd.f32 %v3059, %v3091
    %v3124 = vadd.f32 %v3060, %v3092
    %v3125 = vadd.f32 %v3061, %v3093
    %v3126 = vadd.f32 %v3062, %v3094
    %v3127 = vadd.f32 %v3063, %v3095
    %v3128 = vadd.f32 %v3064, %v3096
    %v3129 = vadd.f32 %v3065, %v3097
    %v3130 = vadd.f32 %v3066, %v3098
    %v3131 = vadd.f32 %v3067, %v3099
    %v3132 = vadd.f32 %v3068, %v3100
    %v3133 = vadd.f32 %v3069, %v3101
    %v3134 = vld [vmem:[#allocation8] sm:$0xff]
    %v3135 = vld [vmem:[%s6] sm:$0xff]
    %v3137 = vcombine.high %v3134, %v3134
    %v3139 = vunpack.c.l.s4 1966171168
    %v3140 = vunpack.c.0.s8 %v3139
    %v3141 = vlaneseq
    %v3142 = vshrl.u32 %v3141, 7
    %v3143 = vsub.s32 %v3140, %v3142
    %v3144 = vrot.slane %v3134, %v3143
    %v3146 = vunpack.c.l.s4 1966171168
    %v3147 = vunpack.c.0.s8 %v3146
    %v3148 = vlaneseq
    %v3149 = vshrl.u32 %v3148, 7
    %v3150 = vsub.s32 %v3147, %v3149
    %v3151 = vrot.slane %v3137, %v3150
    %v3152 = vcombine.high %v3144, %v3144
    %v3153 = vcombine.high %v3151, %v3151
    %v3155 = vunpack.c.l.s4 1966171168
    %v3156 = vunpack.c.0.s8 %v3155
    %v3157 = vlaneseq
    %v3158 = vshrl.u32 %v3157, 7
    %v3159 = vsub.s32 %v3156, %v3158
    %v3160 = vrot.slane %v3144, %v3159
    %v3162 = vunpack.c.l.s4 1966171168
    %v3163 = vunpack.c.0.s8 %v3162
    %v3164 = vlaneseq
    %v3165 = vshrl.u32 %v3164, 7
    %v3166 = vsub.s32 %v3163, %v3165
    %v3167 = vrot.slane %v3151, %v3166
    %v3169 = vunpack.c.l.s4 1966171168
    %v3170 = vunpack.c.0.s8 %v3169
    %v3171 = vlaneseq
    %v3172 = vshrl.u32 %v3171, 7
    %v3173 = vsub.s32 %v3170, %v3172
    %v3174 = vrot.slane %v3152, %v3173
    %v3176 = vunpack.c.l.s4 1966171168
    %v3177 = vunpack.c.0.s8 %v3176
    %v3178 = vlaneseq
    %v3179 = vshrl.u32 %v3178, 7
    %v3180 = vsub.s32 %v3177, %v3179
    %v3181 = vrot.slane %v3153, %v3180
    %v3182 = vcombine.high %v3160, %v3160
    %v3183 = vcombine.high %v3167, %v3167
    %v3184 = vcombine.high %v3174, %v3174
    %v3185 = vcombine.high %v3181, %v3181
    %v3186 = vsel %vm946, %v3160, 0
    %3188 = vmatprep.subr.mxu0 0.0
    %3189 = vmatpush1.msra.mxu0 %v3102
    %3190 = vmatprep.subr.mxu0 0.0
    %3191 = vmatpush1.msra.mxu0 %v3103
    %3192 = vmatprep.subr.mxu0 0.0
    %3193 = vmatpush1.msra.mxu0 %v3104
    %3194 = vmatprep.subr.mxu0 0.0
    %3195 = vmatpush1.msra.mxu0 %v3105
    %3196 = vmatprep.subr.mxu0 0.0
    %3197 = vmatpush1.msra.mxu0 0.0
    %3198 = vmatprep.subr.mxu0 0.0
    %3199 = vmatpush1.msra.mxu0 0.0
    %3200 = vmatprep.subr.mxu0 0.0
    %3201 = vmatpush1.msra.mxu0 0.0
    %3202 = vmatprep.subr.mxu0 0.0
    %3203 = vmatpush1.msra.mxu0 0.0
    %3204 = vmatprep.subr.mxu0 0.0
    %3205 = vmatpush1.msra.mxu0 0.0
    %3206 = vmatprep.subr.mxu0 0.0
    %3207 = vmatpush1.msra.mxu0 0.0
    %3208 = vmatprep.subr.mxu0 0.0
    %3209 = vmatpush1.msra.mxu0 0.0
    %3210 = vmatprep.subr.mxu0 0.0
    %3211 = vmatpush1.msra.mxu0 0.0
    %3212 = vmatprep.subr.mxu0 0.0
    %3213 = vmatpush1.msra.mxu0 0.0
    %3214 = vmatprep.subr.mxu0 0.0
    %3215 = vmatpush1.msra.mxu0 0.0
    %3216 = vmatprep.subr.mxu0 0.0
    %3217 = vmatpush1.msra.mxu0 0.0
    %3218 = vmatprep.subr.mxu0 0.0
    %3219 = vmatpush1.msra.mxu0 0.0
    %3220 = vmatprep.subr.mxu0 0.0
    %3221 = vmatpush1.msra.mxu0 0.0
    %3222 = vmatprep.subr.mxu0 0.0
    %3223 = vmatpush1.msra.mxu0 0.0
    %3224 = vmatprep.subr.mxu0 0.0
    %3225 = vmatpush1.msra.mxu0 0.0
    %3226 = vmatprep.subr.mxu0 0.0
    %3227 = vmatpush1.msra.mxu0 0.0
    %3228 = vmatprep.subr.mxu0 0.0
    %3229 = vmatpush1.msra.mxu0 0.0
    %3230 = vmatprep.subr.mxu0 0.0
    %3231 = vmatpush1.msra.mxu0 0.0
    %3232 = vmatprep.subr.mxu0 0.0
    %3233 = vmatpush1.msra.mxu0 0.0
    %3234 = vmatprep.subr.mxu0 0.0
    %3235 = vmatpush1.msra.mxu0 0.0
    %3236 = vmatprep.subr.mxu0 0.0
    %3237 = vmatpush1.msra.mxu0 0.0
    %3238 = vmatprep.subr.mxu0 0.0
    %3239 = vmatpush1.msra.mxu0 0.0
    %3240 = vmatprep.subr.mxu0 0.0
    %3241 = vmatpush1.msra.mxu0 0.0
    %3242 = vmatprep.subr.mxu0 0.0
    %3243 = vmatpush1.msra.mxu0 0.0
    %3244 = vmatprep.subr.mxu0 0.0
    %3245 = vmatpush1.msra.mxu0 0.0
    %3246 = vmatprep.subr.mxu0 0.0
    %3247 = vmatpush1.msra.mxu0 0.0
    %3248 = vmatprep.subr.mxu0 0.0
    %3249 = vmatpush1.msra.mxu0 0.0
    %3250 = vmatprep.subr.mxu0 0.0
    %3251 = vmatpush1.msra.mxu0 0.0
    %3252 = vmatprep.mubr.f32.mxu0 0.0
    %3253 = vmatmul.mubr.f32.gmra.mrb[0].mxu0 %v3186
    %v3254 = vpop.f32.mrb[0].mxu0
    %v3255 = vadd.f32 0.0, %v3254
    %v3256 = vpop.f32.mrb[0].mxu0
    %3257 = vdwg.mxu0
    %v3258 = vsel %vm946, %v3174, 0
    %3260 = vmatprep.subr.mxu0 0.0
    %3261 = vmatpush1.msra.mxu0 %v3106
    %3262 = vmatprep.subr.mxu0 0.0
    %3263 = vmatpush1.msra.mxu0 %v3107
    %3264 = vmatprep.subr.mxu0 0.0
    %3265 = vmatpush1.msra.mxu0 %v3108
    %3266 = vmatprep.subr.mxu0 0.0
    %3267 = vmatpush1.msra.mxu0 %v3109
    %3268 = vmatprep.subr.mxu0 0.0
    %3269 = vmatpush1.msra.mxu0 0.0
    %3270 = vmatprep.subr.mxu0 0.0
    %3271 = vmatpush1.msra.mxu0 0.0
    %3272 = vmatprep.subr.mxu0 0.0
    %3273 = vmatpush1.msra.mxu0 0.0
    %3274 = vmatprep.subr.mxu0 0.0
    %3275 = vmatpush1.msra.mxu0 0.0
    %3276 = vmatprep.subr.mxu0 0.0
    %3277 = vmatpush1.msra.mxu0 0.0
    %3278 = vmatprep.subr.mxu0 0.0
    %3279 = vmatpush1.msra.mxu0 0.0
    %3280 = vmatprep.subr.mxu0 0.0
    %3281 = vmatpush1.msra.mxu0 0.0
    %3282 = vmatprep.subr.mxu0 0.0
    %3283 = vmatpush1.msra.mxu0 0.0
    %3284 = vmatprep.subr.mxu0 0.0
    %3285 = vmatpush1.msra.mxu0 0.0
    %3286 = vmatprep.subr.mxu0 0.0
    %3287 = vmatpush1.msra.mxu0 0.0
    %3288 = vmatprep.subr.mxu0 0.0
    %3289 = vmatpush1.msra.mxu0 0.0
    %3290 = vmatprep.subr.mxu0 0.0
    %3291 = vmatpush1.msra.mxu0 0.0
    %3292 = vmatprep.subr.mxu0 0.0
    %3293 = vmatpush1.msra.mxu0 0.0
    %3294 = vmatprep.subr.mxu0 0.0
    %3295 = vmatpush1.msra.mxu0 0.0
    %3296 = vmatprep.subr.mxu0 0.0
    %3297 = vmatpush1.msra.mxu0 0.0
    %3298 = vmatprep.subr.mxu0 0.0
    %3299 = vmatpush1.msra.mxu0 0.0
    %3300 = vmatprep.subr.mxu0 0.0
    %3301 = vmatpush1.msra.mxu0 0.0
    %3302 = vmatprep.subr.mxu0 0.0
    %3303 = vmatpush1.msra.mxu0 0.0
    %3304 = vmatprep.subr.mxu0 0.0
    %3305 = vmatpush1.msra.mxu0 0.0
    %3306 = vmatprep.subr.mxu0 0.0
    %3307 = vmatpush1.msra.mxu0 0.0
    %3308 = vmatprep.subr.mxu0 0.0
    %3309 = vmatpush1.msra.mxu0 0.0
    %3310 = vmatprep.subr.mxu0 0.0
    %3311 = vmatpush1.msra.mxu0 0.0
    %3312 = vmatprep.subr.mxu0 0.0
    %3313 = vmatpush1.msra.mxu0 0.0
    %3314 = vmatprep.subr.mxu0 0.0
    %3315 = vmatpush1.msra.mxu0 0.0
    %3316 = vmatprep.subr.mxu0 0.0
    %3317 = vmatpush1.msra.mxu0 0.0
    %3318 = vmatprep.subr.mxu0 0.0
    %3319 = vmatpush1.msra.mxu0 0.0
    %3320 = vmatprep.subr.mxu0 0.0
    %3321 = vmatpush1.msra.mxu0 0.0
    %3322 = vmatprep.subr.mxu0 0.0
    %3323 = vmatpush1.msra.mxu0 0.0
    %3324 = vmatprep.mubr.f32.mxu0 0.0
    %3325 = vmatmul.mubr.f32.gmra.mrb[0].mxu0 %v3258
    %v3326 = vpop.f32.mrb[0].mxu0
    %v3327 = vadd.f32 0.0, %v3326
    %v3328 = vpop.f32.mrb[0].mxu0
    %3329 = vdwg.mxu0
    %v3330 = vsel %vm946, %v3182, 0
    %3332 = vmatprep.subr.mxu0 0.0
    %3333 = vmatpush1.msra.mxu0 %v3110
    %3334 = vmatprep.subr.mxu0 0.0
    %3335 = vmatpush1.msra.mxu0 %v3111
    %3336 = vmatprep.subr.mxu0 0.0
    %3337 = vmatpush1.msra.mxu0 %v3112
    %3338 = vmatprep.subr.mxu0 0.0
    %3339 = vmatpush1.msra.mxu0 %v3113
    %3340 = vmatprep.subr.mxu0 0.0
    %3341 = vmatpush1.msra.mxu0 0.0
    %3342 = vmatprep.subr.mxu0 0.0
    %3343 = vmatpush1.msra.mxu0 0.0
    %3344 = vmatprep.subr.mxu0 0.0
    %3345 = vmatpush1.msra.mxu0 0.0
    %3346 = vmatprep.subr.mxu0 0.0
    %3347 = vmatpush1.msra.mxu0 0.0
    %3348 = vmatprep.subr.mxu0 0.0
    %3349 = vmatpush1.msra.mxu0 0.0
    %3350 = vmatprep.subr.mxu0 0.0
    %3351 = vmatpush1.msra.mxu0 0.0
    %3352 = vmatprep.subr.mxu0 0.0
    %3353 = vmatpush1.msra.mxu0 0.0
    %3354 = vmatprep.subr.mxu0 0.0
    %3355 = vmatpush1.msra.mxu0 0.0
    %3356 = vmatprep.subr.mxu0 0.0
    %3357 = vmatpush1.msra.mxu0 0.0
    %3358 = vmatprep.subr.mxu0 0.0
    %3359 = vmatpush1.msra.mxu0 0.0
    %3360 = vmatprep.subr.mxu0 0.0
    %3361 = vmatpush1.msra.mxu0 0.0
    %3362 = vmatprep.subr.mxu0 0.0
    %3363 = vmatpush1.msra.mxu0 0.0
    %3364 = vmatprep.subr.mxu0 0.0
    %3365 = vmatpush1.msra.mxu0 0.0
    %3366 = vmatprep.subr.mxu0 0.0
    %3367 = vmatpush1.msra.mxu0 0.0
    %3368 = vmatprep.subr.mxu0 0.0
    %3369 = vmatpush1.msra.mxu0 0.0
    %3370 = vmatprep.subr.mxu0 0.0
    %3371 = vmatpush1.msra.mxu0 0.0
    %3372 = vmatprep.subr.mxu0 0.0
    %3373 = vmatpush1.msra.mxu0 0.0
    %3374 = vmatprep.subr.mxu0 0.0
    %3375 = vmatpush1.msra.mxu0 0.0
    %3376 = vmatprep.subr.mxu0 0.0
    %3377 = vmatpush1.msra.mxu0 0.0
    %3378 = vmatprep.subr.mxu0 0.0
    %3379 = vmatpush1.msra.mxu0 0.0
    %3380 = vmatprep.subr.mxu0 0.0
    %3381 = vmatpush1.msra.mxu0 0.0
    %3382 = vmatprep.subr.mxu0 0.0
    %3383 = vmatpush1.msra.mxu0 0.0
    %3384 = vmatprep.subr.mxu0 0.0
    %3385 = vmatpush1.msra.mxu0 0.0
    %3386 = vmatprep.subr.mxu0 0.0
    %3387 = vmatpush1.msra.mxu0 0.0
    %3388 = vmatprep.subr.mxu0 0.0
    %3389 = vmatpush1.msra.mxu0 0.0
    %3390 = vmatprep.subr.mxu0 0.0
    %3391 = vmatpush1.msra.mxu0 0.0
    %3392 = vmatprep.subr.mxu0 0.0
    %3393 = vmatpush1.msra.mxu0 0.0
    %3394 = vmatprep.subr.mxu0 0.0
    %3395 = vmatpush1.msra.mxu0 0.0
    %3396 = vmatprep.mubr.f32.mxu0 0.0
    %3397 = vmatmul.mubr.f32.gmra.mrb[0].mxu0 %v3330
    %v3398 = vpop.f32.mrb[0].mxu0
    %v3399 = vadd.f32 0.0, %v3398
    %v3400 = vpop.f32.mrb[0].mxu0
    %3401 = vdwg.mxu0
    %v3402 = vsel %vm946, %v3184, 0
    %3404 = vmatprep.subr.mxu0 0.0
    %3405 = vmatpush1.msra.mxu0 %v3114
    %3406 = vmatprep.subr.mxu0 0.0
    %3407 = vmatpush1.msra.mxu0 %v3115
    %3408 = vmatprep.subr.mxu0 0.0
    %3409 = vmatpush1.msra.mxu0 %v3116
    %3410 = vmatprep.subr.mxu0 0.0
    %3411 = vmatpush1.msra.mxu0 %v3117
    %3412 = vmatprep.subr.mxu0 0.0
    %3413 = vmatpush1.msra.mxu0 0.0
    %3414 = vmatprep.subr.mxu0 0.0
    %3415 = vmatpush1.msra.mxu0 0.0
    %3416 = vmatprep.subr.mxu0 0.0
    %3417 = vmatpush1.msra.mxu0 0.0
    %3418 = vmatprep.subr.mxu0 0.0
    %3419 = vmatpush1.msra.mxu0 0.0
    %3420 = vmatprep.subr.mxu0 0.0
    %3421 = vmatpush1.msra.mxu0 0.0
    %3422 = vmatprep.subr.mxu0 0.0
    %3423 = vmatpush1.msra.mxu0 0.0
    %3424 = vmatprep.subr.mxu0 0.0
    %3425 = vmatpush1.msra.mxu0 0.0
    %3426 = vmatprep.subr.mxu0 0.0
    %3427 = vmatpush1.msra.mxu0 0.0
    %3428 = vmatprep.subr.mxu0 0.0
    %3429 = vmatpush1.msra.mxu0 0.0
    %3430 = vmatprep.subr.mxu0 0.0
    %3431 = vmatpush1.msra.mxu0 0.0
    %3432 = vmatprep.subr.mxu0 0.0
    %3433 = vmatpush1.msra.mxu0 0.0
    %3434 = vmatprep.subr.mxu0 0.0
    %3435 = vmatpush1.msra.mxu0 0.0
    %3436 = vmatprep.subr.mxu0 0.0
    %3437 = vmatpush1.msra.mxu0 0.0
    %3438 = vmatprep.subr.mxu0 0.0
    %3439 = vmatpush1.msra.mxu0 0.0
    %3440 = vmatprep.subr.mxu0 0.0
    %3441 = vmatpush1.msra.mxu0 0.0
    %3442 = vmatprep.subr.mxu0 0.0
    %3443 = vmatpush1.msra.mxu0 0.0
    %3444 = vmatprep.subr.mxu0 0.0
    %3445 = vmatpush1.msra.mxu0 0.0
    %3446 = vmatprep.subr.mxu0 0.0
    %3447 = vmatpush1.msra.mxu0 0.0
    %3448 = vmatprep.subr.mxu0 0.0
    %3449 = vmatpush1.msra.mxu0 0.0
    %3450 = vmatprep.subr.mxu0 0.0
    %3451 = vmatpush1.msra.mxu0 0.0
    %3452 = vmatprep.subr.mxu0 0.0
    %3453 = vmatpush1.msra.mxu0 0.0
    %3454 = vmatprep.subr.mxu0 0.0
    %3455 = vmatpush1.msra.mxu0 0.0
    %3456 = vmatprep.subr.mxu0 0.0
    %3457 = vmatpush1.msra.mxu0 0.0
    %3458 = vmatprep.subr.mxu0 0.0
    %3459 = vmatpush1.msra.mxu0 0.0
    %3460 = vmatprep.subr.mxu0 0.0
    %3461 = vmatpush1.msra.mxu0 0.0
    %3462 = vmatprep.subr.mxu0 0.0
    %3463 = vmatpush1.msra.mxu0 0.0
    %3464 = vmatprep.subr.mxu0 0.0
    %3465 = vmatpush1.msra.mxu0 0.0
    %3466 = vmatprep.subr.mxu0 0.0
    %3467 = vmatpush1.msra.mxu0 0.0
    %3468 = vmatprep.mubr.f32.mxu0 0.0
    %3469 = vmatmul.mubr.f32.gmra.mrb[0].mxu0 %v3402
    %v3470 = vpop.f32.mrb[0].mxu0
    %v3471 = vadd.f32 0.0, %v3470
    %v3472 = vpop.f32.mrb[0].mxu0
    %3473 = vdwg.mxu0
    %v3474 = vsel %vm946, %v3167, 0
    %3476 = vmatprep.subr.mxu0 0.0
    %3477 = vmatpush1.msra.mxu0 %v3118
    %3478 = vmatprep.subr.mxu0 0.0
    %3479 = vmatpush1.msra.mxu0 %v3119
    %3480 = vmatprep.subr.mxu0 0.0
    %3481 = vmatpush1.msra.mxu0 %v3120
    %3482 = vmatprep.subr.mxu0 0.0
    %3483 = vmatpush1.msra.mxu0 %v3121
    %3484 = vmatprep.subr.mxu0 0.0
    %3485 = vmatpush1.msra.mxu0 0.0
    %3486 = vmatprep.subr.mxu0 0.0
    %3487 = vmatpush1.msra.mxu0 0.0
    %3488 = vmatprep.subr.mxu0 0.0
    %3489 = vmatpush1.msra.mxu0 0.0
    %3490 = vmatprep.subr.mxu0 0.0
    %3491 = vmatpush1.msra.mxu0 0.0
    %3492 = vmatprep.subr.mxu0 0.0
    %3493 = vmatpush1.msra.mxu0 0.0
    %3494 = vmatprep.subr.mxu0 0.0
    %3495 = vmatpush1.msra.mxu0 0.0
    %3496 = vmatprep.subr.mxu0 0.0
    %3497 = vmatpush1.msra.mxu0 0.0
    %3498 = vmatprep.subr.mxu0 0.0
    %3499 = vmatpush1.msra.mxu0 0.0
    %3500 = vmatprep.subr.mxu0 0.0
    %3501 = vmatpush1.msra.mxu0 0.0
    %3502 = vmatprep.subr.mxu0 0.0
    %3503 = vmatpush1.msra.mxu0 0.0
    %3504 = vmatprep.subr.mxu0 0.0
    %3505 = vmatpush1.msra.mxu0 0.0
    %3506 = vmatprep.subr.mxu0 0.0
    %3507 = vmatpush1.msra.mxu0 0.0
    %3508 = vmatprep.subr.mxu0 0.0
    %3509 = vmatpush1.msra.mxu0 0.0
    %3510 = vmatprep.subr.mxu0 0.0
    %3511 = vmatpush1.msra.mxu0 0.0
    %3512 = vmatprep.subr.mxu0 0.0
    %3513 = vmatpush1.msra.mxu0 0.0
    %3514 = vmatprep.subr.mxu0 0.0
    %3515 = vmatpush1.msra.mxu0 0.0
    %3516 = vmatprep.subr.mxu0 0.0
    %3517 = vmatpush1.msra.mxu0 0.0
    %3518 = vmatprep.subr.mxu0 0.0
    %3519 = vmatpush1.msra.mxu0 0.0
    %3520 = vmatprep.subr.mxu0 0.0
    %3521 = vmatpush1.msra.mxu0 0.0
    %3522 = vmatprep.subr.mxu0 0.0
    %3523 = vmatpush1.msra.mxu0 0.0
    %3524 = vmatprep.subr.mxu0 0.0
    %3525 = vmatpush1.msra.mxu0 0.0
    %3526 = vmatprep.subr.mxu0 0.0
    %3527 = vmatpush1.msra.mxu0 0.0
    %3528 = vmatprep.subr.mxu0 0.0
    %3529 = vmatpush1.msra.mxu0 0.0
    %3530 = vmatprep.subr.mxu0 0.0
    %3531 = vmatpush1.msra.mxu0 0.0
    %3532 = vmatprep.subr.mxu0 0.0
    %3533 = vmatpush1.msra.mxu0 0.0
    %3534 = vmatprep.subr.mxu0 0.0
    %3535 = vmatpush1.msra.mxu0 0.0
    %3536 = vmatprep.subr.mxu0 0.0
    %3537 = vmatpush1.msra.mxu0 0.0
    %3538 = vmatprep.subr.mxu0 0.0
    %3539 = vmatpush1.msra.mxu0 0.0
    %3540 = vmatprep.mubr.f32.mxu0 0.0
    %3541 = vmatmul.mubr.f32.gmra.mrb[0].mxu0 %v3474
    %v3542 = vpop.f32.mrb[0].mxu0
    %v3543 = vadd.f32 0.0, %v3542
    %v3544 = vpop.f32.mrb[0].mxu0
    %3545 = vdwg.mxu0
    %v3546 = vsel %vm946, %v3181, 0
    %3548 = vmatprep.subr.mxu0 0.0
    %3549 = vmatpush1.msra.mxu0 %v3122
    %3550 = vmatprep.subr.mxu0 0.0
    %3551 = vmatpush1.msra.mxu0 %v3123
    %3552 = vmatprep.subr.mxu0 0.0
    %3553 = vmatpush1.msra.mxu0 %v3124
    %3554 = vmatprep.subr.mxu0 0.0
    %3555 = vmatpush1.msra.mxu0 %v3125
    %3556 = vmatprep.subr.mxu0 0.0
    %3557 = vmatpush1.msra.mxu0 0.0
    %3558 = vmatprep.subr.mxu0 0.0
    %3559 = vmatpush1.msra.mxu0 0.0
    %3560 = vmatprep.subr.mxu0 0.0
    %3561 = vmatpush1.msra.mxu0 0.0
    %3562 = vmatprep.subr.mxu0 0.0
    %3563 = vmatpush1.msra.mxu0 0.0
    %3564 = vmatprep.subr.mxu0 0.0
    %3565 = vmatpush1.msra.mxu0 0.0
    %3566 = vmatprep.subr.mxu0 0.0
    %3567 = vmatpush1.msra.mxu0 0.0
    %3568 = vmatprep.subr.mxu0 0.0
    %3569 = vmatpush1.msra.mxu0 0.0
    %3570 = vmatprep.subr.mxu0 0.0
    %3571 = vmatpush1.msra.mxu0 0.0
    %3572 = vmatprep.subr.mxu0 0.0
    %3573 = vmatpush1.msra.mxu0 0.0
    %3574 = vmatprep.subr.mxu0 0.0
    %3575 = vmatpush1.msra.mxu0 0.0
    %3576 = vmatprep.subr.mxu0 0.0
    %3577 = vmatpush1.msra.mxu0 0.0
    %3578 = vmatprep.subr.mxu0 0.0
    %3579 = vmatpush1.msra.mxu0 0.0
    %3580 = vmatprep.subr.mxu0 0.0
    %3581 = vmatpush1.msra.mxu0 0.0
    %3582 = vmatprep.subr.mxu0 0.0
    %3583 = vmatpush1.msra.mxu0 0.0
    %3584 = vmatprep.subr.mxu0 0.0
    %3585 = vmatpush1.msra.mxu0 0.0
    %3586 = vmatprep.subr.mxu0 0.0
    %3587 = vmatpush1.msra.mxu0 0.0
    %3588 = vmatprep.subr.mxu0 0.0
    %3589 = vmatpush1.msra.mxu0 0.0
    %3590 = vmatprep.subr.mxu0 0.0
    %3591 = vmatpush1.msra.mxu0 0.0
    %3592 = vmatprep.subr.mxu0 0.0
    %3593 = vmatpush1.msra.mxu0 0.0
    %3594 = vmatprep.subr.mxu0 0.0
    %3595 = vmatpush1.msra.mxu0 0.0
    %3596 = vmatprep.subr.mxu0 0.0
    %3597 = vmatpush1.msra.mxu0 0.0
    %3598 = vmatprep.subr.mxu0 0.0
    %3599 = vmatpush1.msra.mxu0 0.0
    %3600 = vmatprep.subr.mxu0 0.0
    %3601 = vmatpush1.msra.mxu0 0.0
    %3602 = vmatprep.subr.mxu0 0.0
    %3603 = vmatpush1.msra.mxu0 0.0
    %3604 = vmatprep.subr.mxu0 0.0
    %3605 = vmatpush1.msra.mxu0 0.0
    %3606 = vmatprep.subr.mxu0 0.0
    %3607 = vmatpush1.msra.mxu0 0.0
    %3608 = vmatprep.subr.mxu0 0.0
    %3609 = vmatpush1.msra.mxu0 0.0
    %3610 = vmatprep.subr.mxu0 0.0
    %3611 = vmatpush1.msra.mxu0 0.0
    %3612 = vmatprep.mubr.f32.mxu0 0.0
    %3613 = vmatmul.mubr.f32.gmra.mrb[0].mxu0 %v3546
    %v3614 = vpop.f32.mrb[0].mxu0
    %v3615 = vadd.f32 0.0, %v3614
    %v3616 = vpop.f32.mrb[0].mxu0
    %3617 = vdwg.mxu0
    %v3618 = vsel %vm946, %v3183, 0
    %3620 = vmatprep.subr.mxu0 0.0
    %3621 = vmatpush1.msra.mxu0 %v3126
    %3622 = vmatprep.subr.mxu0 0.0
    %3623 = vmatpush1.msra.mxu0 %v3127
    %3624 = vmatprep.subr.mxu0 0.0
    %3625 = vmatpush1.msra.mxu0 %v3128
    %3626 = vmatprep.subr.mxu0 0.0
    %3627 = vmatpush1.msra.mxu0 %v3129
    %3628 = vmatprep.subr.mxu0 0.0
    %3629 = vmatpush1.msra.mxu0 0.0
    %3630 = vmatprep.subr.mxu0 0.0
    %3631 = vmatpush1.msra.mxu0 0.0
    %3632 = vmatprep.subr.mxu0 0.0
    %3633 = vmatpush1.msra.mxu0 0.0
    %3634 = vmatprep.subr.mxu0 0.0
    %3635 = vmatpush1.msra.mxu0 0.0
    %3636 = vmatprep.subr.mxu0 0.0
    %3637 = vmatpush1.msra.mxu0 0.0
    %3638 = vmatprep.subr.mxu0 0.0
    %3639 = vmatpush1.msra.mxu0 0.0
    %3640 = vmatprep.subr.mxu0 0.0
    %3641 = vmatpush1.msra.mxu0 0.0
    %3642 = vmatprep.subr.mxu0 0.0
    %3643 = vmatpush1.msra.mxu0 0.0
    %3644 = vmatprep.subr.mxu0 0.0
    %3645 = vmatpush1.msra.mxu0 0.0
    %3646 = vmatprep.subr.mxu0 0.0
    %3647 = vmatpush1.msra.mxu0 0.0
    %3648 = vmatprep.subr.mxu0 0.0
    %3649 = vmatpush1.msra.mxu0 0.0
    %3650 = vmatprep.subr.mxu0 0.0
    %3651 = vmatpush1.msra.mxu0 0.0
    %3652 = vmatprep.subr.mxu0 0.0
    %3653 = vmatpush1.msra.mxu0 0.0
    %3654 = vmatprep.subr.mxu0 0.0
    %3655 = vmatpush1.msra.mxu0 0.0
    %3656 = vmatprep.subr.mxu0 0.0
    %3657 = vmatpush1.msra.mxu0 0.0
    %3658 = vmatprep.subr.mxu0 0.0
    %3659 = vmatpush1.msra.mxu0 0.0
    %3660 = vmatprep.subr.mxu0 0.0
    %3661 = vmatpush1.msra.mxu0 0.0
    %3662 = vmatprep.subr.mxu0 0.0
    %3663 = vmatpush1.msra.mxu0 0.0
    %3664 = vmatprep.subr.mxu0 0.0
    %3665 = vmatpush1.msra.mxu0 0.0
    %3666 = vmatprep.subr.mxu0 0.0
    %3667 = vmatpush1.msra.mxu0 0.0
    %3668 = vmatprep.subr.mxu0 0.0
    %3669 = vmatpush1.msra.mxu0 0.0
    %3670 = vmatprep.subr.mxu0 0.0
    %3671 = vmatpush1.msra.mxu0 0.0
    %3672 = vmatprep.subr.mxu0 0.0
    %3673 = vmatpush1.msra.mxu0 0.0
    %3674 = vmatprep.subr.mxu0 0.0
    %3675 = vmatpush1.msra.mxu0 0.0
    %3676 = vmatprep.subr.mxu0 0.0
    %3677 = vmatpush1.msra.mxu0 0.0
    %3678 = vmatprep.subr.mxu0 0.0
    %3679 = vmatpush1.msra.mxu0 0.0
    %3680 = vmatprep.subr.mxu0 0.0
    %3681 = vmatpush1.msra.mxu0 0.0
    %3682 = vmatprep.subr.mxu0 0.0
    %3683 = vmatpush1.msra.mxu0 0.0
    %3684 = vmatprep.mubr.f32.mxu0 0.0
    %3685 = vmatmul.mubr.f32.gmra.mrb[0].mxu0 %v3618
    %v3686 = vpop.f32.mrb[0].mxu0
    %v3687 = vadd.f32 0.0, %v3686
    %v3688 = vpop.f32.mrb[0].mxu0
    %3689 = vdwg.mxu0
    %v3690 = vsel %vm946, %v3185, 0
    %3692 = vmatprep.subr.mxu0 0.0
    %3693 = vmatpush1.msra.mxu0 %v3130
    %3694 = vmatprep.subr.mxu0 0.0
    %3695 = vmatpush1.msra.mxu0 %v3131
    %3696 = vmatprep.subr.mxu0 0.0
    %3697 = vmatpush1.msra.mxu0 %v3132
    %3698 = vmatprep.subr.mxu0 0.0
    %3699 = vmatpush1.msra.mxu0 %v3133
    %3700 = vmatprep.subr.mxu0 0.0
    %3701 = vmatpush1.msra.mxu0 0.0
    %3702 = vmatprep.subr.mxu0 0.0
    %3703 = vmatpush1.msra.mxu0 0.0
    %3704 = vmatprep.subr.mxu0 0.0
    %3705 = vmatpush1.msra.mxu0 0.0
    %3706 = vmatprep.subr.mxu0 0.0
    %3707 = vmatpush1.msra.mxu0 0.0
    %3708 = vmatprep.subr.mxu0 0.0
    %3709 = vmatpush1.msra.mxu0 0.0
    %3710 = vmatprep.subr.mxu0 0.0
    %3711 = vmatpush1.msra.mxu0 0.0
    %3712 = vmatprep.subr.mxu0 0.0
    %3713 = vmatpush1.msra.mxu0 0.0
    %3714 = vmatprep.subr.mxu0 0.0
    %3715 = vmatpush1.msra.mxu0 0.0
    %3716 = vmatprep.subr.mxu0 0.0
    %3717 = vmatpush1.msra.mxu0 0.0
    %3718 = vmatprep.subr.mxu0 0.0
    %3719 = vmatpush1.msra.mxu0 0.0
    %3720 = vmatprep.subr.mxu0 0.0
    %3721 = vmatpush1.msra.mxu0 0.0
    %3722 = vmatprep.subr.mxu0 0.0
    %3723 = vmatpush1.msra.mxu0 0.0
    %3724 = vmatprep.subr.mxu0 0.0
    %3725 = vmatpush1.msra.mxu0 0.0
    %3726 = vmatprep.subr.mxu0 0.0
    %3727 = vmatpush1.msra.mxu0 0.0
    %3728 = vmatprep.subr.mxu0 0.0
    %3729 = vmatpush1.msra.mxu0 0.0
    %3730 = vmatprep.subr.mxu0 0.0
    %3731 = vmatpush1.msra.mxu0 0.0
    %3732 = vmatprep.subr.mxu0 0.0
    %3733 = vmatpush1.msra.mxu0 0.0
    %3734 = vmatprep.subr.mxu0 0.0
    %3735 = vmatpush1.msra.mxu0 0.0
    %3736 = vmatprep.subr.mxu0 0.0
    %3737 = vmatpush1.msra.mxu0 0.0
    %3738 = vmatprep.subr.mxu0 0.0
    %3739 = vmatpush1.msra.mxu0 0.0
    %3740 = vmatprep.subr.mxu0 0.0
    %3741 = vmatpush1.msra.mxu0 0.0
    %3742 = vmatprep.subr.mxu0 0.0
    %3743 = vmatpush1.msra.mxu0 0.0
    %3744 = vmatprep.subr.mxu0 0.0
    %3745 = vmatpush1.msra.mxu0 0.0
    %3746 = vmatprep.subr.mxu0 0.0
    %3747 = vmatpush1.msra.mxu0 0.0
    %3748 = vmatprep.subr.mxu0 0.0
    %3749 = vmatpush1.msra.mxu0 0.0
    %3750 = vmatprep.subr.mxu0 0.0
    %3751 = vmatpush1.msra.mxu0 0.0
    %3752 = vmatprep.subr.mxu0 0.0
    %3753 = vmatpush1.msra.mxu0 0.0
    %3754 = vmatprep.subr.mxu0 0.0
    %3755 = vmatpush1.msra.mxu0 0.0
    %3756 = vmatprep.mubr.f32.mxu0 0.0
    %3757 = vmatmul.mubr.f32.gmra.mrb[0].mxu0 %v3690
    %v3758 = vpop.f32.mrb[0].mxu0
    %v3759 = vadd.f32 0.0, %v3758
    %v3760 = vpop.f32.mrb[0].mxu0
    %3761 = vdwg.mxu0
    %3763 = vset.pattern.permute.xlu0 0
    %3764 = vperm.xlu0 %3763, %v3135
    %v3765 = vpop.permute.xlu0 %3764
    %v3766 = vrot.slane %v3765, 1
    %v3767 = vrot.slane %v3765, 2
    %v3768 = vrot.slane %v3765, 3
    %v3769 = vrot.slane %v3765, 4
    %v3770 = vrot.slane %v3765, 5
    %v3771 = vrot.slane %v3765, 6
    %v3772 = vrot.slane %v3765, 7
    %v3781 = vadd.f32 %v3255, %v3765
    %v3782 = vadd.f32 %v3327, %v3766
    %v3783 = vadd.f32 %v3399, %v3767
    %v3784 = vadd.f32 %v3471, %v3768
    %v3785 = vadd.f32 %v3543, %v3769
    %v3786 = vadd.f32 %v3615, %v3770
    %v3787 = vadd.f32 %v3687, %v3771
    %v3788 = vadd.f32 %v3759, %v3772
    %v3797 = vrot.slane %v3782, 7
    %vm3798 = vcmask 1041409
    %v3799 = vsel %vm3798, %v3797, %v3781
    %v3800 = vrot.slane %v3783, 6
    %vm3801 = vcmask 1042434
    %v3802 = vsel %vm3801, %v3800, %v3799
    %v3803 = vrot.slane %v3784, 5
    %vm3804 = vcmask 1043459
    %v3805 = vsel %vm3804, %v3803, %v3802
    %v3806 = vrot.slane %v3785, 4
    %vm3807 = vcmask 1044484
    %v3808 = vsel %vm3807, %v3806, %v3805
    %v3809 = vrot.slane %v3786, 3
    %vm3810 = vcmask 1045509
    %v3811 = vsel %vm3810, %v3809, %v3808
    %v3812 = vrot.slane %v3787, 2
    %vm3813 = vcmask 1046534
    %v3814 = vsel %vm3813, %v3812, %v3811
    %v3815 = vrot.slane %v3788, 1
    %vm3816 = vcmask 1047559
    %v3817 = vsel %vm3816, %v3815, %v3814
    %3819 = vst [vmem:[#allocation10] sm:$0xff] %v3817
    // Predicated region
    $region46: #{tpu_custom_call.1} parent=1 // pred_check
      _
    $region47: #{tpu_custom_call.1} parent=1 // pred_check_branch
      %3821 = sbr.rel (0) target = $region49
    $region48: #{tpu_custom_call.1} parent=1 // pred_region
      %s3823 = ssub.s32 128, 128
      %3824 = vsyncadd [#allocation4], %s3823
      %s3826 = sshll.u32 [#allocation10], 4
      %s3827 = int_to_ptr.vmem [resolvable:$true] %s3826
      %3829 = dma.vmem_to_hbm [thread:$0]  %s3827, 128, %s7, [#allocation4]
    $region49: #{tpu_custom_call.1} parent=1 // pred_fallthru
      _
    // Predicated region
    $region50: #{tpu_custom_call.1} parent=1 // pred_check
      _
    $region51: #{tpu_custom_call.1} parent=1 // pred_check_branch
      %3831 = sbr.rel (0) target = $region53
    $region52: #{tpu_custom_call.1} parent=1 // pred_region
      %3832 = dma.done [#allocation4], 128
    $region53: #{tpu_custom_call.1} parent=1 // pred_fallthru
      _
    %3833 = vsyncpa [#allocation3], 1
    %3834 = vsyncpa [#allocation6], 1
    %3835 = vsyncpa [#allocation9], 1
    %3836 = vsyncpa [#allocation4], 1

</llo_original>
